<compile_context>
chip_gen: v7x
topology: tpu7x:2x2x1
jax: 0.10.0
libtpu: 0.0.40
codegen_flags: <defaults>
</compile_context>

<pallas_src>
import math
import functools

import jax
import jax.numpy as jnp
from jax.experimental import pallas as pl
from jax.experimental.pallas import tpu as pltpu


# ----------------------------- kernel ------------------------------------- #

def _layer_norm(x, w, b, eps=1e-5):
    mean = jnp.mean(x, axis=-1, keepdims=True)
    var = jnp.mean(jnp.square(x - mean), axis=-1, keepdims=True)
    return (x - mean) * jax.lax.rsqrt(var + eps) * w + b


def fused_forward_kernel(x_ref, pos_ref, mask_ref, we_ref, be_ref,
                         wqkv_ref, bqkv_ref, wo_ref, bo_ref, ln1w_ref, ln1b_ref,
                         w1_ref, b1_ref, w2_ref, b2_ref, ln2w_ref, ln2b_ref,
                         o_ref, h_ref, *, nheads):
    """Whole transformer forward for one batch element; grid axis 1 iterates layers."""
    l = pl.program_id(1)
    S, D = h_ref.shape
    hd = D // nheads

    # ---- l == 0: fused 1x1-conv embed + sine positional encoding ----
    @pl.when(l == 0)
    def _():
        xb = x_ref[0].astype(jnp.bfloat16)                                   # (S, C)
        h_ref[...] = (jnp.dot(xb, we_ref[...], preferred_element_type=jnp.float32)
                      + be_ref[...] + pos_ref[...])

    x = h_ref[...]                                                           # (S, D) f32
    mask_bias = jnp.broadcast_to(mask_ref[0], (S, S))                        # hoisted, reused per head

    # ---- self-attention: fused QKV projection (q-scale folded into Wq/bq) ----
    qkv = (jnp.dot(x.astype(jnp.bfloat16), wqkv_ref[0],
                   preferred_element_type=jnp.float32) + bqkv_ref[0])        # (S, 3D)
    q, k, v = qkv[:, :D], qkv[:, D:2 * D], qkv[:, 2 * D:]

    head_outs = []
    for h in range(nheads):
        sl = slice(h * hd, (h + 1) * hd)
        qh, kh, vh = q[:, sl], k[:, sl], v[:, sl]
        s = jax.lax.dot_general(qh, kh, (((1,), (1,)), ((), ())),
                                preferred_element_type=jnp.float32)          # (S, S)
        s = s + mask_bias                                                    # float mask is ADDED
        s = s - jnp.max(s, axis=-1, keepdims=True)
        p = jnp.exp(s)
        p = p * pl.reciprocal(jnp.sum(p, axis=-1, keepdims=True), approx=True)
        head_outs.append(jnp.dot(p, vh, preferred_element_type=jnp.float32))
    attn = jnp.concatenate(head_outs, axis=-1)                               # (S, D)
    attn = (jnp.dot(attn.astype(jnp.bfloat16), wo_ref[0],
                    preferred_element_type=jnp.float32) + bo_ref[0])

    # ---- residual + LayerNorm1 (post-norm) ----
    h1 = _layer_norm(x + attn, ln1w_ref[0], ln1b_ref[0])

    # ---- feed-forward (relu, dim_feedforward = 2048) ----
    f = (jnp.dot(h1.astype(jnp.bfloat16), w1_ref[0],
                 preferred_element_type=jnp.float32) + b1_ref[0])
    f = jnp.maximum(f, 0.0)
    f = (jnp.dot(f.astype(jnp.bfloat16), w2_ref[0],
                 preferred_element_type=jnp.float32) + b2_ref[0])

    # ---- residual + LayerNorm2 ----
    h2 = _layer_norm(h1 + f, ln2w_ref[0], ln2b_ref[0])
    h_ref[...] = h2

    # Only token 0 of the last layer is consumed (out[:, 0]).
    @pl.when(l == pl.num_programs(1) - 1)
    def _():
        o_ref[...] = h2[0:1, :].reshape(1, 1, D)


# --------------------------- pallas_call wrapper --------------------------- #

def transformer_fused_call(x_bsc, pos, key_mask, params, nheads):
    B, S, C = x_bsc.shape
    D = pos.shape[-1]
    L, _, F = params['w1'].shape

    lmap3 = lambda b, l: (l, 0, 0)      # per-layer stacked weights
    cmap2 = lambda b, l: (0, 0)         # constants (DMA'd once)
    bmap3 = lambda b, l: (b, 0, 0)      # per-batch tensors

    in_specs = [
        pl.BlockSpec((1, S, C), bmap3),            # x tokens
        pl.BlockSpec((S, D), cmap2),               # positional encoding
        pl.BlockSpec((1, 1, S), bmap3),            # additive key-padding mask
        pl.BlockSpec((C, D), cmap2),               # embed W^T (bf16)
        pl.BlockSpec((1, D), cmap2),               # embed bias
        pl.BlockSpec((1, D, 3 * D), lmap3),        # Wqkv (bf16)
        pl.BlockSpec((1, 1, 3 * D), lmap3),        # bqkv
        pl.BlockSpec((1, D, D), lmap3),            # Wo (bf16)
        pl.BlockSpec((1, 1, D), lmap3),            # bo
        pl.BlockSpec((1, 1, D), lmap3),            # ln1 w
        pl.BlockSpec((1, 1, D), lmap3),            # ln1 b
        pl.BlockSpec((1, D, F), lmap3),            # W1 (bf16)
        pl.BlockSpec((1, 1, F), lmap3),            # b1
        pl.BlockSpec((1, F, D), lmap3),            # W2 (bf16)
        pl.BlockSpec((1, 1, D), lmap3),            # b2
        pl.BlockSpec((1, 1, D), lmap3),            # ln2 w
        pl.BlockSpec((1, 1, D), lmap3),            # ln2 b
    ]
    out_specs = pl.BlockSpec((1, 1, D), bmap3)

    # Advisory cost estimate (helps XLA schedule around the fused custom call).
    flops = int(B * (2 * S * C * D
                     + L * (2 * S * D * 3 * D + 4 * S * S * D + 2 * S * D * D
                            + 4 * S * D * F)))
    transcendentals = int(B * L * nheads * S * S)
    wbytes_per_layer = (D * 3 * D + D * D + 2 * D * F) * 2 + (3 * D + 5 * D + F) * 4
    bytes_accessed = int(B * S * C * 4 + S * D * 4 + B * S * 4 + B * D * 4
                         + C * D * 2 + D * 4 + B * L * wbytes_per_layer)

    out = pl.pallas_call(
        functools.partial(fused_forward_kernel, nheads=nheads),
        out_shape=jax.ShapeDtypeStruct((B, 1, D), jnp.float32),
        grid_spec=pltpu.PrefetchScalarGridSpec(
            num_scalar_prefetch=0,
            grid=(B, L),
            in_specs=in_specs,
            out_specs=out_specs,
            scratch_shapes=[pltpu.VMEM((S, D), jnp.float32)]),
        compiler_params=pltpu.CompilerParams(
            dimension_semantics=("parallel", "arbitrary")),
        cost_estimate=pl.CostEstimate(flops=flops,
                                      transcendentals=transcendentals,
                                      bytes_accessed=bytes_accessed),
    )(x_bsc, pos, key_mask,
      params['embed_w'], params['embed_b'],
      params['wqkv'], params['bqkv'], params['wo'], params['bo'],
      params['ln1_w'], params['ln1_b'],
      params['w1'], params['b1'], params['w2'], params['b2'],
      params['ln2_w'], params['ln2_b'])
    return out[:, 0, :]


# ------------------------------ glue (plain JAX) ---------------------------- #

def position_embedding_sine(B, H, W, num_pos_feats, temperature=10000.0,
                            scale=2.0 * math.pi, eps=1e-6):
    """PositionEmbeddingSine(normalize=True) producing token-major (B, H*W, 2*npf)."""
    ones = jnp.ones((B, H, W), jnp.float32)
    y_embed = jnp.cumsum(ones, axis=1)
    x_embed = jnp.cumsum(ones, axis=2)
    y_embed = y_embed / (y_embed[:, -1:, :] + eps) * scale
    x_embed = x_embed / (x_embed[:, :, -1:] + eps) * scale
    dim_t = jnp.arange(num_pos_feats, dtype=jnp.float32)
    dim_t = temperature ** (2.0 * jnp.floor(dim_t / 2.0) / num_pos_feats)
    pos_x = x_embed[:, :, :, None] / dim_t
    pos_y = y_embed[:, :, :, None] / dim_t
    pos_x = jnp.stack((jnp.sin(pos_x[:, :, :, 0::2]),
                       jnp.cos(pos_x[:, :, :, 1::2])), axis=4).reshape(B, H, W, num_pos_feats)
    pos_y = jnp.stack((jnp.sin(pos_y[:, :, :, 0::2]),
                       jnp.cos(pos_y[:, :, :, 1::2])), axis=4).reshape(B, H, W, num_pos_feats)
    pos = jnp.concatenate((pos_y, pos_x), axis=3)            # (B, H, W, 2*npf)
    return pos.reshape(B, H * W, 2 * num_pos_feats)


def init_params(key, in_channels, hidden_dim, num_layers, d_ff, nheads):
    D, F, L = hidden_dim, d_ff, num_layers
    keys = iter(jax.random.split(key, 12 * L + 2))

    def rnd(shape, s=0.1):
        return s * jax.random.normal(next(keys), shape, jnp.float32)

    scale = 1.0 / math.sqrt(D // nheads)
    wqkv, bqkv, wo, bo, ln1w, ln1b = [], [], [], [], [], []
    w1, b1, w2, b2, ln2w, ln2b = [], [], [], [], [], []
    for _ in range(L):
        wq, wk, wv = rnd((D, D)), rnd((D, D)), rnd((D, D))
        bq, bk, bv = rnd((1, D)), rnd((1, D)), rnd((1, D))
        # fuse QKV; fold the 1/sqrt(head_dim) scale into Wq / bq
        wqkv.append(jnp.concatenate([wq * scale, wk, wv], axis=1))   # (D, 3D)
        bqkv.append(jnp.concatenate([bq * scale, bk, bv], axis=1))   # (1, 3D)
        wo.append(rnd((D, D))); bo.append(rnd((1, D)))
        ln1w.append(jnp.ones((1, D), jnp.float32)); ln1b.append(jnp.zeros((1, D), jnp.float32))
        w1.append(rnd((D, F), 0.05)); b1.append(rnd((1, F)))
        w2.append(rnd((F, D), 0.05)); b2.append(rnd((1, D)))
        ln2w.append(jnp.ones((1, D), jnp.float32)); ln2b.append(jnp.zeros((1, D), jnp.float32))

    stack = lambda xs: jnp.stack(xs, axis=0)
    return dict(
        embed_w=rnd((in_channels, D)).astype(jnp.bfloat16),   # Conv2d(C,D,1).weight^T
        embed_b=rnd((1, D)),
        wqkv=stack(wqkv).astype(jnp.bfloat16), bqkv=stack(bqkv),
        wo=stack(wo).astype(jnp.bfloat16), bo=stack(bo),
        ln1_w=stack(ln1w), ln1_b=stack(ln1b),
        w1=stack(w1).astype(jnp.bfloat16), b1=stack(b1),
        w2=stack(w2).astype(jnp.bfloat16), b2=stack(b2),
        ln2_w=stack(ln2w), ln2_b=stack(ln2b),
    )


@functools.partial(jax.jit, static_argnums=(3,))
def transformer_forward(x_nchw, mask_bhw, params, nheads):
    B, C, H, W = x_nchw.shape
    S = H * W
    D = params['embed_b'].shape[-1]

    # NCHW -> (B, S, C) token-major layout (matches x.flatten(-2,-1).transpose(-1,-2))
    x_bsc = jnp.transpose(x_nchw.reshape(B, C, S), (0, 2, 1)).astype(jnp.float32)

    # mask = (1 - mask).flatten(-2, -1); mask[:, 0] = 0   (float additive key-padding mask)
    key_mask = (1.0 - mask_bhw.astype(jnp.float32)).reshape(B, S)
    key_mask = key_mask.at[:, 0].set(0.0)[:, None, :]            # (B, 1, S)

    # positional encoding is batch-invariant -> compute once as (S, D)
    pos = position_embedding_sine(1, H, W, D // 2)[0]

    return transformer_fused_call(x_bsc, pos, key_mask, params, nheads)


# ----------------------------------- main ----------------------------------- #

if __name__ == "__main__":
    # Small shapes consistent with the module: Transformer(in_channels=4, hidden_dim=32,
    # nheads=4, num_layers=2); dim_feedforward stays at the nn.TransformerEncoderLayer
    # default of 2048.
    B, C, H, W = 2, 4, 8, 8
    HIDDEN_DIM, NHEADS, NUM_LAYERS, D_FF = 32, 4, 2, 2048

    key = jax.random.PRNGKey(0)
    kx, km, kp = jax.random.split(key, 3)
    x = jax.random.normal(kx, (B, C, H, W), jnp.float32)
    # float 0/1 validity mask (1 = valid), as the PyTorch forward expects a float mask
    mask = (jax.random.uniform(km, (B, H, W)) > 0.2).astype(jnp.float32)

    params = init_params(kp, C, HIDDEN_DIM, NUM_LAYERS, D_FF, NHEADS)

    out = transformer_forward(x, mask, params, NHEADS)
    out = jax.block_until_ready(out)
    assert out.shape == (B, HIDDEN_DIM), out.shape
    assert bool(jnp.all(jnp.isfinite(out)))
    print("KERNEL_OK")
</pallas_src>

<mosaic_0001>
module attributes {stable_mosaic.version = 11 : i64} {
  func.func @fused_forward_kernel(%arg0: i32, %arg1: i32, %arg2: memref<1x64x4xf32, #tpu.memory_space<vmem>>, %arg3: memref<64x32xf32, #tpu.memory_space<vmem>>, %arg4: memref<1x1x64xf32, #tpu.memory_space<vmem>>, %arg5: memref<4x32xbf16, #tpu.memory_space<vmem>>, %arg6: memref<1x32xf32, #tpu.memory_space<vmem>>, %arg7: memref<1x32x96xbf16, #tpu.memory_space<vmem>>, %arg8: memref<1x1x96xf32, #tpu.memory_space<vmem>>, %arg9: memref<1x32x32xbf16, #tpu.memory_space<vmem>>, %arg10: memref<1x1x32xf32, #tpu.memory_space<vmem>>, %arg11: memref<1x1x32xf32, #tpu.memory_space<vmem>>, %arg12: memref<1x1x32xf32, #tpu.memory_space<vmem>>, %arg13: memref<1x32x2048xbf16, #tpu.memory_space<vmem>>, %arg14: memref<1x1x2048xf32, #tpu.memory_space<vmem>>, %arg15: memref<1x2048x32xbf16, #tpu.memory_space<vmem>>, %arg16: memref<1x1x32xf32, #tpu.memory_space<vmem>>, %arg17: memref<1x1x32xf32, #tpu.memory_space<vmem>>, %arg18: memref<1x1x32xf32, #tpu.memory_space<vmem>>, %arg19: memref<1x1x32xf32, #tpu.memory_space<vmem>>, %arg20: memref<64x32xf32, #tpu.memory_space<vmem>>) attributes {dimension_semantics = [#tpu.dimension_semantics<parallel>, #tpu.dimension_semantics<arbitrary>], iteration_bounds = array<i64: 2, 2>, scalar_prefetch = 0 : i64, scratch_operands = 1 : i64, tpu.core_type = #tpu.core_type<tc>, window_params = [{transform_indices = @transform_0, window_bounds = array<i64: 1, 64, 4>}, {pipeline_mode = #tpu.pipeline_mode<synchronous>, transform_indices = @transform_1, window_bounds = array<i64: 64, 32>}, {transform_indices = @transform_2, window_bounds = array<i64: 1, 1, 64>}, {pipeline_mode = #tpu.pipeline_mode<synchronous>, transform_indices = @transform_3, window_bounds = array<i64: 4, 32>}, {pipeline_mode = #tpu.pipeline_mode<synchronous>, transform_indices = @transform_4, window_bounds = array<i64: 1, 32>}, {transform_indices = @transform_5, window_bounds = array<i64: 1, 32, 96>}, {transform_indices = @transform_6, window_bounds = array<i64: 1, 1, 96>}, {transform_indices = @transform_7, window_bounds = array<i64: 1, 32, 32>}, {transform_indices = @transform_8, window_bounds = array<i64: 1, 1, 32>}, {transform_indices = @transform_9, window_bounds = array<i64: 1, 1, 32>}, {transform_indices = @transform_10, window_bounds = array<i64: 1, 1, 32>}, {transform_indices = @transform_11, window_bounds = array<i64: 1, 32, 2048>}, {transform_indices = @transform_12, window_bounds = array<i64: 1, 1, 2048>}, {transform_indices = @transform_13, window_bounds = array<i64: 1, 2048, 32>}, {transform_indices = @transform_14, window_bounds = array<i64: 1, 1, 32>}, {transform_indices = @transform_15, window_bounds = array<i64: 1, 1, 32>}, {transform_indices = @transform_16, window_bounds = array<i64: 1, 1, 32>}, {transform_indices = @transform_17, window_bounds = array<i64: 1, 1, 32>}]} {
    %c0_i32 = arith.constant 0 : i32
    %0 = arith.cmpi eq, %arg1, %c0_i32 : i32
    %1 = arith.extui %0 : i1 to i32
    %c0_i32_0 = arith.constant 0 : i32
    %2 = arith.cmpi ne, %1, %c0_i32_0 : i32
    scf.if %2 {
      %c0_74 = arith.constant 0 : index
      %c0_75 = arith.constant 0 : index
      %c0_76 = arith.constant 0 : index
      %168 = vector.load %arg2[%c0_74, %c0_75, %c0_76] : memref<1x64x4xf32, #tpu.memory_space<vmem>>, vector<1x64x4xf32>
      %169 = vector.shape_cast %168 : vector<1x64x4xf32> to vector<64x4xf32>
      %170 = arith.truncf %169 : vector<64x4xf32> to vector<64x4xbf16>
      %c0_77 = arith.constant 0 : index
      %c0_78 = arith.constant 0 : index
      %171 = vector.load %arg5[%c0_77, %c0_78] : memref<4x32xbf16, #tpu.memory_space<vmem>>, vector<4x32xbf16>
      %cst_79 = arith.constant dense<0.000000e+00> : vector<64x32xf32>
      %172 = tpu.matmul %170, %171, %cst_79 {dimension_numbers = #tpu.dot_dimension_numbers<[1], [0], [0], [1], [0, 0, 1, 1], [], []>} : vector<64x4xbf16>, vector<4x32xbf16>, vector<64x32xf32> -> vector<64x32xf32>
      %c0_80 = arith.constant 0 : index
      %c0_81 = arith.constant 0 : index
      %173 = vector.load %arg6[%c0_80, %c0_81] : memref<1x32xf32, #tpu.memory_space<vmem>>, vector<1x32xf32>
      %174 = vector.broadcast %173 : vector<1x32xf32> to vector<64x32xf32>
      %175 = arith.addf %172, %174 : vector<64x32xf32>
      %c0_82 = arith.constant 0 : index
      %c0_83 = arith.constant 0 : index
      %176 = vector.load %arg3[%c0_82, %c0_83] : memref<64x32xf32, #tpu.memory_space<vmem>>, vector<64x32xf32>
      %177 = arith.addf %175, %176 : vector<64x32xf32>
      %c0_84 = arith.constant 0 : index
      %c0_85 = arith.constant 0 : index
      %178 = vector.load %arg20[%c0_84, %c0_85] : memref<64x32xf32, #tpu.memory_space<vmem>>, vector<64x32xf32>
      tpu.vector_store %arg20[%c0_84, %c0_85], %177 {strides = array<i32>} : memref<64x32xf32, #tpu.memory_space<vmem>>, vector<64x32xf32>,
    } else {
    }
    %c0 = arith.constant 0 : index
    %c0_1 = arith.constant 0 : index
    %3 = vector.load %arg20[%c0, %c0_1] : memref<64x32xf32, #tpu.memory_space<vmem>>, vector<64x32xf32>
    %c0_2 = arith.constant 0 : index
    %c0_3 = arith.constant 0 : index
    %c0_4 = arith.constant 0 : index
    %4 = vector.load %arg4[%c0_2, %c0_3, %c0_4] : memref<1x1x64xf32, #tpu.memory_space<vmem>>, vector<1x1x64xf32>
    %5 = vector.shape_cast %4 : vector<1x1x64xf32> to vector<1x64xf32>
    %6 = vector.shape_cast %5 : vector<1x64xf32> to vector<1x64xf32>
    %7 = vector.broadcast %6 : vector<1x64xf32> to vector<64x64xf32>
    %8 = arith.truncf %3 : vector<64x32xf32> to vector<64x32xbf16>
    %c0_5 = arith.constant 0 : index
    %c0_6 = arith.constant 0 : index
    %c0_7 = arith.constant 0 : index
    %9 = vector.load %arg7[%c0_5, %c0_6, %c0_7] : memref<1x32x96xbf16, #tpu.memory_space<vmem>>, vector<1x32x96xbf16>
    %10 = vector.shape_cast %9 : vector<1x32x96xbf16> to vector<32x96xbf16>
    %cst = arith.constant dense<0.000000e+00> : vector<64x96xf32>
    %11 = tpu.matmul %8, %10, %cst {dimension_numbers = #tpu.dot_dimension_numbers<[1], [0], [0], [1], [0, 0, 1, 1], [], []>} : vector<64x32xbf16>, vector<32x96xbf16>, vector<64x96xf32> -> vector<64x96xf32>
    %c0_8 = arith.constant 0 : index
    %c0_9 = arith.constant 0 : index
    %c0_10 = arith.constant 0 : index
    %12 = vector.load %arg8[%c0_8, %c0_9, %c0_10] : memref<1x1x96xf32, #tpu.memory_space<vmem>>, vector<1x1x96xf32>
    %13 = vector.shape_cast %12 : vector<1x1x96xf32> to vector<1x96xf32>
    %14 = vector.broadcast %13 : vector<1x96xf32> to vector<64x96xf32>
    %15 = arith.addf %11, %14 : vector<64x96xf32>
    %16 = vector.extract_strided_slice %15 {offsets = [0, 0], sizes = [64, 32], strides = [1, 1]} : vector<64x96xf32> to vector<64x32xf32>
    %17 = vector.extract_strided_slice %15 {offsets = [0, 32], sizes = [64, 32], strides = [1, 1]} : vector<64x96xf32> to vector<64x32xf32>
    %18 = vector.extract_strided_slice %15 {offsets = [0, 64], sizes = [64, 32], strides = [1, 1]} : vector<64x96xf32> to vector<64x32xf32>
    %19 = vector.extract_strided_slice %16 {offsets = [0, 0], sizes = [64, 8], strides = [1, 1]} : vector<64x32xf32> to vector<64x8xf32>
    %20 = vector.extract_strided_slice %17 {offsets = [0, 0], sizes = [64, 8], strides = [1, 1]} : vector<64x32xf32> to vector<64x8xf32>
    %21 = vector.extract_strided_slice %18 {offsets = [0, 0], sizes = [64, 8], strides = [1, 1]} : vector<64x32xf32> to vector<64x8xf32>
    %cst_11 = arith.constant dense<0.000000e+00> : vector<64x64xf32>
    %22 = tpu.matmul %19, %20, %cst_11 {dimension_numbers = #tpu.dot_dimension_numbers<[1], [1], [0], [0], [0, 0, 1, 0], [], []>} : vector<64x8xf32>, vector<64x8xf32>, vector<64x64xf32> -> vector<64x64xf32>
    %23 = arith.addf %22, %7 : vector<64x64xf32>
    %cst_12 = arith.constant dense<0xFF800000> : vector<64xf32>
    %24 = vector.multi_reduction <maximumf>, %23, %cst_12 [1] : vector<64x64xf32> to vector<64xf32>
    %25 = vector.shape_cast %24 : vector<64xf32> to vector<64x1xf32>
    %26 = vector.broadcast %25 : vector<64x1xf32> to vector<64x64xf32>
    %27 = arith.subf %23, %26 : vector<64x64xf32>
    %28 = math.exp %27 : vector<64x64xf32>
    %cst_13 = arith.constant dense<0.000000e+00> : vector<64xf32>
    %29 = vector.multi_reduction <add>, %28, %cst_13 [1] : vector<64x64xf32> to vector<64xf32>
    %30 = vector.shape_cast %29 : vector<64xf32> to vector<64x1xf32>
    %31 = tpu.reciprocal %30 {approx = true} : vector<64x1xf32> -> vector<64x1xf32>
    %32 = vector.broadcast %31 : vector<64x1xf32> to vector<64x64xf32>
    %33 = arith.mulf %28, %32 : vector<64x64xf32>
    %cst_14 = arith.constant dense<0.000000e+00> : vector<64x8xf32>
    %34 = tpu.matmul %33, %21, %cst_14 {dimension_numbers = #tpu.dot_dimension_numbers<[1], [0], [0], [1], [0, 0, 1, 1], [], []>} : vector<64x64xf32>, vector<64x8xf32>, vector<64x8xf32> -> vector<64x8xf32>
    %35 = vector.extract_strided_slice %16 {offsets = [0, 8], sizes = [64, 8], strides = [1, 1]} : vector<64x32xf32> to vector<64x8xf32>
    %36 = vector.extract_strided_slice %17 {offsets = [0, 8], sizes = [64, 8], strides = [1, 1]} : vector<64x32xf32> to vector<64x8xf32>
    %37 = vector.extract_strided_slice %18 {offsets = [0, 8], sizes = [64, 8], strides = [1, 1]} : vector<64x32xf32> to vector<64x8xf32>
    %cst_15 = arith.constant dense<0.000000e+00> : vector<64x64xf32>
    %38 = tpu.matmul %35, %36, %cst_15 {dimension_numbers = #tpu.dot_dimension_numbers<[1], [1], [0], [0], [0, 0, 1, 0], [], []>} : vector<64x8xf32>, vector<64x8xf32>, vector<64x64xf32> -> vector<64x64xf32>
    %39 = arith.addf %38, %7 : vector<64x64xf32>
    %cst_16 = arith.constant dense<0xFF800000> : vector<64xf32>
    %40 = vector.multi_reduction <maximumf>, %39, %cst_16 [1] : vector<64x64xf32> to vector<64xf32>
    %41 = vector.shape_cast %40 : vector<64xf32> to vector<64x1xf32>
    %42 = vector.broadcast %41 : vector<64x1xf32> to vector<64x64xf32>
    %43 = arith.subf %39, %42 : vector<64x64xf32>
    %44 = math.exp %43 : vector<64x64xf32>
    %cst_17 = arith.constant dense<0.000000e+00> : vector<64xf32>
    %45 = vector.multi_reduction <add>, %44, %cst_17 [1] : vector<64x64xf32> to vector<64xf32>
    %46 = vector.shape_cast %45 : vector<64xf32> to vector<64x1xf32>
    %47 = tpu.reciprocal %46 {approx = true} : vector<64x1xf32> -> vector<64x1xf32>
    %48 = vector.broadcast %47 : vector<64x1xf32> to vector<64x64xf32>
    %49 = arith.mulf %44, %48 : vector<64x64xf32>
    %cst_18 = arith.constant dense<0.000000e+00> : vector<64x8xf32>
    %50 = tpu.matmul %49, %37, %cst_18 {dimension_numbers = #tpu.dot_dimension_numbers<[1], [0], [0], [1], [0, 0, 1, 1], [], []>} : vector<64x64xf32>, vector<64x8xf32>, vector<64x8xf32> -> vector<64x8xf32>
    %51 = vector.extract_strided_slice %16 {offsets = [0, 16], sizes = [64, 8], strides = [1, 1]} : vector<64x32xf32> to vector<64x8xf32>
    %52 = vector.extract_strided_slice %17 {offsets = [0, 16], sizes = [64, 8], strides = [1, 1]} : vector<64x32xf32> to vector<64x8xf32>
    %53 = vector.extract_strided_slice %18 {offsets = [0, 16], sizes = [64, 8], strides = [1, 1]} : vector<64x32xf32> to vector<64x8xf32>
    %cst_19 = arith.constant dense<0.000000e+00> : vector<64x64xf32>
    %54 = tpu.matmul %51, %52, %cst_19 {dimension_numbers = #tpu.dot_dimension_numbers<[1], [1], [0], [0], [0, 0, 1, 0], [], []>} : vector<64x8xf32>, vector<64x8xf32>, vector<64x64xf32> -> vector<64x64xf32>
    %55 = arith.addf %54, %7 : vector<64x64xf32>
    %cst_20 = arith.constant dense<0xFF800000> : vector<64xf32>
    %56 = vector.multi_reduction <maximumf>, %55, %cst_20 [1] : vector<64x64xf32> to vector<64xf32>
    %57 = vector.shape_cast %56 : vector<64xf32> to vector<64x1xf32>
    %58 = vector.broadcast %57 : vector<64x1xf32> to vector<64x64xf32>
    %59 = arith.subf %55, %58 : vector<64x64xf32>
    %60 = math.exp %59 : vector<64x64xf32>
    %cst_21 = arith.constant dense<0.000000e+00> : vector<64xf32>
    %61 = vector.multi_reduction <add>, %60, %cst_21 [1] : vector<64x64xf32> to vector<64xf32>
    %62 = vector.shape_cast %61 : vector<64xf32> to vector<64x1xf32>
    %63 = tpu.reciprocal %62 {approx = true} : vector<64x1xf32> -> vector<64x1xf32>
    %64 = vector.broadcast %63 : vector<64x1xf32> to vector<64x64xf32>
    %65 = arith.mulf %60, %64 : vector<64x64xf32>
    %cst_22 = arith.constant dense<0.000000e+00> : vector<64x8xf32>
    %66 = tpu.matmul %65, %53, %cst_22 {dimension_numbers = #tpu.dot_dimension_numbers<[1], [0], [0], [1], [0, 0, 1, 1], [], []>} : vector<64x64xf32>, vector<64x8xf32>, vector<64x8xf32> -> vector<64x8xf32>
    %67 = vector.extract_strided_slice %16 {offsets = [0, 24], sizes = [64, 8], strides = [1, 1]} : vector<64x32xf32> to vector<64x8xf32>
    %68 = vector.extract_strided_slice %17 {offsets = [0, 24], sizes = [64, 8], strides = [1, 1]} : vector<64x32xf32> to vector<64x8xf32>
    %69 = vector.extract_strided_slice %18 {offsets = [0, 24], sizes = [64, 8], strides = [1, 1]} : vector<64x32xf32> to vector<64x8xf32>
    %cst_23 = arith.constant dense<0.000000e+00> : vector<64x64xf32>
    %70 = tpu.matmul %67, %68, %cst_23 {dimension_numbers = #tpu.dot_dimension_numbers<[1], [1], [0], [0], [0, 0, 1, 0], [], []>} : vector<64x8xf32>, vector<64x8xf32>, vector<64x64xf32> -> vector<64x64xf32>
    %71 = arith.addf %70, %7 : vector<64x64xf32>
    %cst_24 = arith.constant dense<0xFF800000> : vector<64xf32>
    %72 = vector.multi_reduction <maximumf>, %71, %cst_24 [1] : vector<64x64xf32> to vector<64xf32>
    %73 = vector.shape_cast %72 : vector<64xf32> to vector<64x1xf32>
    %74 = vector.broadcast %73 : vector<64x1xf32> to vector<64x64xf32>
    %75 = arith.subf %71, %74 : vector<64x64xf32>
    %76 = math.exp %75 : vector<64x64xf32>
    %cst_25 = arith.constant dense<0.000000e+00> : vector<64xf32>
    %77 = vector.multi_reduction <add>, %76, %cst_25 [1] : vector<64x64xf32> to vector<64xf32>
    %78 = vector.shape_cast %77 : vector<64xf32> to vector<64x1xf32>
    %79 = tpu.reciprocal %78 {approx = true} : vector<64x1xf32> -> vector<64x1xf32>
    %80 = vector.broadcast %79 : vector<64x1xf32> to vector<64x64xf32>
    %81 = arith.mulf %76, %80 : vector<64x64xf32>
    %cst_26 = arith.constant dense<0.000000e+00> : vector<64x8xf32>
    %82 = tpu.matmul %81, %69, %cst_26 {dimension_numbers = #tpu.dot_dimension_numbers<[1], [0], [0], [1], [0, 0, 1, 1], [], []>} : vector<64x64xf32>, vector<64x8xf32>, vector<64x8xf32> -> vector<64x8xf32>
    %83 = tpu.concatenate %34, %50, %66, %82 in 1 : vector<64x8xf32>, vector<64x8xf32>, vector<64x8xf32>, vector<64x8xf32> -> vector<64x32xf32>
    %84 = arith.truncf %83 : vector<64x32xf32> to vector<64x32xbf16>
    %c0_27 = arith.constant 0 : index
    %c0_28 = arith.constant 0 : index
    %c0_29 = arith.constant 0 : index
    %85 = vector.load %arg9[%c0_27, %c0_28, %c0_29] : memref<1x32x32xbf16, #tpu.memory_space<vmem>>, vector<1x32x32xbf16>
    %86 = vector.shape_cast %85 : vector<1x32x32xbf16> to vector<32x32xbf16>
    %cst_30 = arith.constant dense<0.000000e+00> : vector<64x32xf32>
    %87 = tpu.matmul %84, %86, %cst_30 {dimension_numbers = #tpu.dot_dimension_numbers<[1], [0], [0], [1], [0, 0, 1, 1], [], []>} : vector<64x32xbf16>, vector<32x32xbf16>, vector<64x32xf32> -> vector<64x32xf32>
    %c0_31 = arith.constant 0 : index
    %c0_32 = arith.constant 0 : index
    %c0_33 = arith.constant 0 : index
    %88 = vector.load %arg10[%c0_31, %c0_32, %c0_33] : memref<1x1x32xf32, #tpu.memory_space<vmem>>, vector<1x1x32xf32>
    %89 = vector.shape_cast %88 : vector<1x1x32xf32> to vector<1x32xf32>
    %90 = vector.broadcast %89 : vector<1x32xf32> to vector<64x32xf32>
    %91 = arith.addf %87, %90 : vector<64x32xf32>
    %92 = arith.addf %3, %91 : vector<64x32xf32>
    %c0_34 = arith.constant 0 : index
    %c0_35 = arith.constant 0 : index
    %c0_36 = arith.constant 0 : index
    %93 = vector.load %arg11[%c0_34, %c0_35, %c0_36] : memref<1x1x32xf32, #tpu.memory_space<vmem>>, vector<1x1x32xf32>
    %94 = vector.shape_cast %93 : vector<1x1x32xf32> to vector<1x32xf32>
    %c0_37 = arith.constant 0 : index
    %c0_38 = arith.constant 0 : index
    %c0_39 = arith.constant 0 : index
    %95 = vector.load %arg12[%c0_37, %c0_38, %c0_39] : memref<1x1x32xf32, #tpu.memory_space<vmem>>, vector<1x1x32xf32>
    %96 = vector.shape_cast %95 : vector<1x1x32xf32> to vector<1x32xf32>
    %cst_40 = arith.constant dense<0.000000e+00> : vector<64xf32>
    %97 = vector.multi_reduction <add>, %92, %cst_40 [1] : vector<64x32xf32> to vector<64xf32>
    %98 = vector.shape_cast %97 : vector<64xf32> to vector<64x1xf32>
    %cst_41 = arith.constant 3.200000e+01 : f32
    %99 = vector.broadcast %cst_41 : f32 to vector<64x1xf32>
    %100 = arith.divf %98, %99 : vector<64x1xf32>
    %101 = vector.broadcast %100 : vector<64x1xf32> to vector<64x32xf32>
    %102 = arith.subf %92, %101 : vector<64x32xf32>
    %103 = arith.mulf %102, %102 : vector<64x32xf32>
    %cst_42 = arith.constant dense<0.000000e+00> : vector<64xf32>
    %104 = vector.multi_reduction <add>, %103, %cst_42 [1] : vector<64x32xf32> to vector<64xf32>
    %105 = vector.shape_cast %104 : vector<64xf32> to vector<64x1xf32>
    %cst_43 = arith.constant 3.200000e+01 : f32
    %106 = vector.broadcast %cst_43 : f32 to vector<64x1xf32>
    %107 = arith.divf %105, %106 : vector<64x1xf32>
    %108 = vector.broadcast %100 : vector<64x1xf32> to vector<64x32xf32>
    %109 = arith.subf %92, %108 : vector<64x32xf32>
    %cst_44 = arith.constant 9.99999974E-6 : f32
    %110 = vector.broadcast %cst_44 : f32 to vector<64x1xf32>
    %111 = arith.addf %107, %110 : vector<64x1xf32>
    %112 = math.rsqrt %111 : vector<64x1xf32>
    %113 = vector.broadcast %112 : vector<64x1xf32> to vector<64x32xf32>
    %114 = arith.mulf %109, %113 : vector<64x32xf32>
    %115 = vector.broadcast %94 : vector<1x32xf32> to vector<64x32xf32>
    %116 = arith.mulf %114, %115 : vector<64x32xf32>
    %117 = vector.broadcast %96 : vector<1x32xf32> to vector<64x32xf32>
    %118 = arith.addf %116, %117 : vector<64x32xf32>
    %119 = arith.truncf %118 : vector<64x32xf32> to vector<64x32xbf16>
    %c0_45 = arith.constant 0 : index
    %c0_46 = arith.constant 0 : index
    %c0_47 = arith.constant 0 : index
    %120 = vector.load %arg13[%c0_45, %c0_46, %c0_47] : memref<1x32x2048xbf16, #tpu.memory_space<vmem>>, vector<1x32x2048xbf16>
    %121 = vector.shape_cast %120 : vector<1x32x2048xbf16> to vector<32x2048xbf16>
    %cst_48 = arith.constant dense<0.000000e+00> : vector<64x2048xf32>
    %122 = tpu.matmul %119, %121, %cst_48 {dimension_numbers = #tpu.dot_dimension_numbers<[1], [0], [0], [1], [0, 0, 1, 1], [], []>} : vector<64x32xbf16>, vector<32x2048xbf16>, vector<64x2048xf32> -> vector<64x2048xf32>
    %c0_49 = arith.constant 0 : index
    %c0_50 = arith.constant 0 : index
    %c0_51 = arith.constant 0 : index
    %123 = vector.load %arg14[%c0_49, %c0_50, %c0_51] : memref<1x1x2048xf32, #tpu.memory_space<vmem>>, vector<1x1x2048xf32>
    %124 = vector.shape_cast %123 : vector<1x1x2048xf32> to vector<1x2048xf32>
    %125 = vector.broadcast %124 : vector<1x2048xf32> to vector<64x2048xf32>
    %126 = arith.addf %122, %125 : vector<64x2048xf32>
    %cst_52 = arith.constant 0.000000e+00 : f32
    %127 = vector.broadcast %cst_52 : f32 to vector<64x2048xf32>
    %128 = arith.maximumf %126, %127 : vector<64x2048xf32>
    %129 = arith.truncf %128 : vector<64x2048xf32> to vector<64x2048xbf16>
    %c0_53 = arith.constant 0 : index
    %c0_54 = arith.constant 0 : index
    %c0_55 = arith.constant 0 : index
    %130 = vector.load %arg15[%c0_53, %c0_54, %c0_55] : memref<1x2048x32xbf16, #tpu.memory_space<vmem>>, vector<1x2048x32xbf16>
    %131 = vector.shape_cast %130 : vector<1x2048x32xbf16> to vector<2048x32xbf16>
    %cst_56 = arith.constant dense<0.000000e+00> : vector<64x32xf32>
    %132 = tpu.matmul %129, %131, %cst_56 {dimension_numbers = #tpu.dot_dimension_numbers<[1], [0], [0], [1], [0, 0, 1, 1], [], []>} : vector<64x2048xbf16>, vector<2048x32xbf16>, vector<64x32xf32> -> vector<64x32xf32>
    %c0_57 = arith.constant 0 : index
    %c0_58 = arith.constant 0 : index
    %c0_59 = arith.constant 0 : index
    %133 = vector.load %arg16[%c0_57, %c0_58, %c0_59] : memref<1x1x32xf32, #tpu.memory_space<vmem>>, vector<1x1x32xf32>
    %134 = vector.shape_cast %133 : vector<1x1x32xf32> to vector<1x32xf32>
    %135 = vector.broadcast %134 : vector<1x32xf32> to vector<64x32xf32>
    %136 = arith.addf %132, %135 : vector<64x32xf32>
    %137 = arith.addf %118, %136 : vector<64x32xf32>
    %c0_60 = arith.constant 0 : index
    %c0_61 = arith.constant 0 : index
    %c0_62 = arith.constant 0 : index
    %138 = vector.load %arg17[%c0_60, %c0_61, %c0_62] : memref<1x1x32xf32, #tpu.memory_space<vmem>>, vector<1x1x32xf32>
    %139 = vector.shape_cast %138 : vector<1x1x32xf32> to vector<1x32xf32>
    %c0_63 = arith.constant 0 : index
    %c0_64 = arith.constant 0 : index
    %c0_65 = arith.constant 0 : index
    %140 = vector.load %arg18[%c0_63, %c0_64, %c0_65] : memref<1x1x32xf32, #tpu.memory_space<vmem>>, vector<1x1x32xf32>
    %141 = vector.shape_cast %140 : vector<1x1x32xf32> to vector<1x32xf32>
    %cst_66 = arith.constant dense<0.000000e+00> : vector<64xf32>
    %142 = vector.multi_reduction <add>, %137, %cst_66 [1] : vector<64x32xf32> to vector<64xf32>
    %143 = vector.shape_cast %142 : vector<64xf32> to vector<64x1xf32>
    %cst_67 = arith.constant 3.200000e+01 : f32
    %144 = vector.broadcast %cst_67 : f32 to vector<64x1xf32>
    %145 = arith.divf %143, %144 : vector<64x1xf32>
    %146 = vector.broadcast %145 : vector<64x1xf32> to vector<64x32xf32>
    %147 = arith.subf %137, %146 : vector<64x32xf32>
    %148 = arith.mulf %147, %147 : vector<64x32xf32>
    %cst_68 = arith.constant dense<0.000000e+00> : vector<64xf32>
    %149 = vector.multi_reduction <add>, %148, %cst_68 [1] : vector<64x32xf32> to vector<64xf32>
    %150 = vector.shape_cast %149 : vector<64xf32> to vector<64x1xf32>
    %cst_69 = arith.constant 3.200000e+01 : f32
    %151 = vector.broadcast %cst_69 : f32 to vector<64x1xf32>
    %152 = arith.divf %150, %151 : vector<64x1xf32>
    %153 = vector.broadcast %145 : vector<64x1xf32> to vector<64x32xf32>
    %154 = arith.subf %137, %153 : vector<64x32xf32>
    %cst_70 = arith.constant 9.99999974E-6 : f32
    %155 = vector.broadcast %cst_70 : f32 to vector<64x1xf32>
    %156 = arith.addf %152, %155 : vector<64x1xf32>
    %157 = math.rsqrt %156 : vector<64x1xf32>
    %158 = vector.broadcast %157 : vector<64x1xf32> to vector<64x32xf32>
    %159 = arith.mulf %154, %158 : vector<64x32xf32>
    %160 = vector.broadcast %139 : vector<1x32xf32> to vector<64x32xf32>
    %161 = arith.mulf %159, %160 : vector<64x32xf32>
    %162 = vector.broadcast %141 : vector<1x32xf32> to vector<64x32xf32>
    %163 = arith.addf %161, %162 : vector<64x32xf32>
    %c0_71 = arith.constant 0 : index
    %c0_72 = arith.constant 0 : index
    %164 = vector.load %arg20[%c0_71, %c0_72] : memref<64x32xf32, #tpu.memory_space<vmem>>, vector<64x32xf32>
    tpu.vector_store %arg20[%c0_71, %c0_72], %163 {strides = array<i32>} : memref<64x32xf32, #tpu.memory_space<vmem>>, vector<64x32xf32>,
    %c1_i32 = arith.constant 1 : i32
    %165 = arith.cmpi eq, %arg1, %c1_i32 : i32
    %166 = arith.extui %165 : i1 to i32
    %c0_i32_73 = arith.constant 0 : i32
    %167 = arith.cmpi ne, %166, %c0_i32_73 : i32
    scf.if %167 {
      %168 = vector.extract_strided_slice %163 {offsets = [0, 0], sizes = [1, 32], strides = [1, 1]} : vector<64x32xf32> to vector<1x32xf32>
      %169 = vector.shape_cast %168 : vector<1x32xf32> to vector<1x1x32xf32>
      %c0_74 = arith.constant 0 : index
      %c0_75 = arith.constant 0 : index
      %c0_76 = arith.constant 0 : index
      %170 = vector.load %arg19[%c0_74, %c0_75, %c0_76] : memref<1x1x32xf32, #tpu.memory_space<vmem>>, vector<1x1x32xf32>
      tpu.vector_store %arg19[%c0_74, %c0_75, %c0_76], %169 {strides = array<i32>} : memref<1x1x32xf32, #tpu.memory_space<vmem>>, vector<1x1x32xf32>,
    } else {
    }
    return
  }
  func.func @transform_0(%arg0: i32, %arg1: i32) -> (i32, i32, i32) {
    %c0_i32 = arith.constant 0 : i32
    %c0_i32_0 = arith.constant 0 : i32
    %c0_i32_1 = arith.constant 0 : i32
    return %arg0, %c0_i32, %c0_i32_0 : i32, i32, i32
  }
  func.func @transform_1(%arg0: i32, %arg1: i32) -> (i32, i32) {
    %c0_i32 = arith.constant 0 : i32
    %c0_i32_0 = arith.constant 0 : i32
    %c0_i32_1 = arith.constant 0 : i32
    return %c0_i32, %c0_i32_0 : i32, i32
  }
  func.func @transform_2(%arg0: i32, %arg1: i32) -> (i32, i32, i32) {
    %c0_i32 = arith.constant 0 : i32
    %c0_i32_0 = arith.constant 0 : i32
    %c0_i32_1 = arith.constant 0 : i32
    return %arg0, %c0_i32, %c0_i32_0 : i32, i32, i32
  }
  func.func @transform_3(%arg0: i32, %arg1: i32) -> (i32, i32) {
    %c0_i32 = arith.constant 0 : i32
    %c0_i32_0 = arith.constant 0 : i32
    %c0_i32_1 = arith.constant 0 : i32
    return %c0_i32, %c0_i32_0 : i32, i32
  }
  func.func @transform_4(%arg0: i32, %arg1: i32) -> (i32, i32) {
    %c0_i32 = arith.constant 0 : i32
    %c0_i32_0 = arith.constant 0 : i32
    %c0_i32_1 = arith.constant 0 : i32
    return %c0_i32, %c0_i32_0 : i32, i32
  }
  func.func @transform_5(%arg0: i32, %arg1: i32) -> (i32, i32, i32) {
    %c0_i32 = arith.constant 0 : i32
    %c0_i32_0 = arith.constant 0 : i32
    %c0_i32_1 = arith.constant 0 : i32
    return %arg1, %c0_i32, %c0_i32_0 : i32, i32, i32
  }
  func.func @transform_6(%arg0: i32, %arg1: i32) -> (i32, i32, i32) {
    %c0_i32 = arith.constant 0 : i32
    %c0_i32_0 = arith.constant 0 : i32
    %c0_i32_1 = arith.constant 0 : i32
    return %arg1, %c0_i32, %c0_i32_0 : i32, i32, i32
  }
  func.func @transform_7(%arg0: i32, %arg1: i32) -> (i32, i32, i32) {
    %c0_i32 = arith.constant 0 : i32
    %c0_i32_0 = arith.constant 0 : i32
    %c0_i32_1 = arith.constant 0 : i32
    return %arg1, %c0_i32, %c0_i32_0 : i32, i32, i32
  }
  func.func @transform_8(%arg0: i32, %arg1: i32) -> (i32, i32, i32) {
    %c0_i32 = arith.constant 0 : i32
    %c0_i32_0 = arith.constant 0 : i32
    %c0_i32_1 = arith.constant 0 : i32
    return %arg1, %c0_i32, %c0_i32_0 : i32, i32, i32
  }
  func.func @transform_9(%arg0: i32, %arg1: i32) -> (i32, i32, i32) {
    %c0_i32 = arith.constant 0 : i32
    %c0_i32_0 = arith.constant 0 : i32
    %c0_i32_1 = arith.constant 0 : i32
    return %arg1, %c0_i32, %c0_i32_0 : i32, i32, i32
  }
  func.func @transform_10(%arg0: i32, %arg1: i32) -> (i32, i32, i32) {
    %c0_i32 = arith.constant 0 : i32
    %c0_i32_0 = arith.constant 0 : i32
    %c0_i32_1 = arith.constant 0 : i32
    return %arg1, %c0_i32, %c0_i32_0 : i32, i32, i32
  }
  func.func @transform_11(%arg0: i32, %arg1: i32) -> (i32, i32, i32) {
    %c0_i32 = arith.constant 0 : i32
    %c0_i32_0 = arith.constant 0 : i32
    %c0_i32_1 = arith.constant 0 : i32
    return %arg1, %c0_i32, %c0_i32_0 : i32, i32, i32
  }
  func.func @transform_12(%arg0: i32, %arg1: i32) -> (i32, i32, i32) {
    %c0_i32 = arith.constant 0 : i32
    %c0_i32_0 = arith.constant 0 : i32
    %c0_i32_1 = arith.constant 0 : i32
    return %arg1, %c0_i32, %c0_i32_0 : i32, i32, i32
  }
  func.func @transform_13(%arg0: i32, %arg1: i32) -> (i32, i32, i32) {
    %c0_i32 = arith.constant 0 : i32
    %c0_i32_0 = arith.constant 0 : i32
    %c0_i32_1 = arith.constant 0 : i32
    return %arg1, %c0_i32, %c0_i32_0 : i32, i32, i32
  }
  func.func @transform_14(%arg0: i32, %arg1: i32) -> (i32, i32, i32) {
    %c0_i32 = arith.constant 0 : i32
    %c0_i32_0 = arith.constant 0 : i32
    %c0_i32_1 = arith.constant 0 : i32
    return %arg1, %c0_i32, %c0_i32_0 : i32, i32, i32
  }
  func.func @transform_15(%arg0: i32, %arg1: i32) -> (i32, i32, i32) {
    %c0_i32 = arith.constant 0 : i32
    %c0_i32_0 = arith.constant 0 : i32
    %c0_i32_1 = arith.constant 0 : i32
    return %arg1, %c0_i32, %c0_i32_0 : i32, i32, i32
  }
  func.func @transform_16(%arg0: i32, %arg1: i32) -> (i32, i32, i32) {
    %c0_i32 = arith.constant 0 : i32
    %c0_i32_0 = arith.constant 0 : i32
    %c0_i32_1 = arith.constant 0 : i32
    return %arg1, %c0_i32, %c0_i32_0 : i32, i32, i32
  }
  func.func @transform_17(%arg0: i32, %arg1: i32) -> (i32, i32, i32) {
    %c0_i32 = arith.constant 0 : i32
    %c0_i32_0 = arith.constant 0 : i32
    %c0_i32_1 = arith.constant 0 : i32
    return %arg0, %c0_i32, %c0_i32_0 : i32, i32, i32
  }
}

</mosaic_0001>

<llo_original>
// kernel: transformer_forward.1
$region0: #{transformer_forward.1}
  #allocation0 [shape = 'u32[]', space=smem, size = 0x4, offset = 0x4, fixed_abs, tag = 'smem constant byte address 0x4 - core index']
  #allocation1 [shape = 'u32[144,128]{1,0:T(1,128)}', space=vmem, size = 0x12000, scoped, tag = 'internal scratch']
  #allocation2 [shape = 'f32[64,32]{1,0:T(8,128)}', space=vmem, size = 0x8000, scoped, tag = 'scratch operand']
  %s0 = inlined_call_operand.vmem [shape: f32[2,64,4], index: 0, kind: input, shape index: {}]
  %s1 = inlined_call_operand.vmem [shape: f32[64,32], index: 1, kind: input, shape index: {}]
  %s2 = inlined_call_operand.vmem [shape: f32[2,1,64], index: 2, kind: input, shape index: {}]
  %s3 = inlined_call_operand.vmem [shape: bf16[4,32], index: 3, kind: input, shape index: {}]
  %s4 = inlined_call_operand.vmem [shape: f32[1,32], index: 4, kind: input, shape index: {}]
  %s5 = inlined_call_operand.vmem [shape: bf16[2,32,96], index: 5, kind: input, shape index: {}]
  %s6 = inlined_call_operand.vmem [shape: f32[2,1,96], index: 6, kind: input, shape index: {}]
  %s7 = inlined_call_operand.vmem [shape: bf16[2,32,32], index: 7, kind: input, shape index: {}]
  %s8 = inlined_call_operand.vmem [shape: f32[2,1,32], index: 8, kind: input, shape index: {}]
  %s9 = inlined_call_operand.vmem [shape: f32[2,1,32], index: 9, kind: input, shape index: {}]
  %s10 = inlined_call_operand.vmem [shape: f32[2,1,32], index: 10, kind: input, shape index: {}]
  %s11 = inlined_call_operand.vmem [shape: bf16[2,32,2048], index: 11, kind: input, shape index: {}]
  %s12 = inlined_call_operand.vmem [shape: f32[2,1,2048], index: 12, kind: input, shape index: {}]
  %s13 = inlined_call_operand.vmem [shape: bf16[2,2048,32], index: 13, kind: input, shape index: {}]
  %s14 = inlined_call_operand.vmem [shape: f32[2,1,32], index: 14, kind: input, shape index: {}]
  %s15 = inlined_call_operand.vmem [shape: f32[2,1,32], index: 15, kind: input, shape index: {}]
  %s16 = inlined_call_operand.vmem [shape: f32[2,1,32], index: 16, kind: input, shape index: {}]
  %s17 = inlined_call_operand.hbm [shape: f32[2,1,32], index: 17, kind: output, shape index: {}]
  %s18 = sld [smem:[#allocation0]]
  $region109: #{transformer_forward.1} parent=0
    _
  %s20 = ssub.s32 1, %s18
  %s21 = scalar_select 0, %s20, %s18
  $region1: #{transformer_forward.1} parent=0
    #allocation3 [shape = 'u8[1024]{0}', space=vmem, size = 0x400, scoped, tag = 'output window, operand 0']
    #allocation4 [shape = 's32[2]{0}', space=sflag, size = 0x8, scoped, tag = 'scoped memory for transformer_forward.1']
    %22 = vsyncpa [#allocation4], 0
    %s23 = scalar_lea.sflag [#allocation4], 1
    %24 = vsyncpa %s23, 0
    loop: start=0, step=1, limit=6
    $region2: #{transformer_forward.1} parent=1 // loop_pre_header
      _
    $region3: #{transformer_forward.1} parent=1 // loop_header
      %s26 = sphi 0, %s30
      %p27 = scmp.ge.s32.totalorder %s26, 6
      %s33 = sphi 0, %s45
      %s34 = sphi 0, %s41
      %s35 = sphi 0, %s33
      %s36 = sphi 0, %s34
      %s37 = sphi 0, %s35
      %s38 = sphi 0, %s36
      %s48 = sphi 0, %s50
      %s51 = sphi 0, %s48
      %s52 = sphi 0, %s51
      %s68 = sphi 0, %s52
      %s72 = sphi 0, %s72
      %s74 = sphi 0, %s72
      %s75 = sphi 0, %s74
      %s89 = sphi 0, %s75
      %s95 = sphi 0, %s97
      %s98 = sphi 0, %s95
      %s99 = sphi 0, %s98
      %s115 = sphi 0, %s99
      %s119 = sphi 0, %s119
      %s121 = sphi 0, %s119
      %s122 = sphi 0, %s121
      %s136 = sphi 0, %s122
      %s140 = sphi 0, %s140
      %s142 = sphi 0, %s140
      %s143 = sphi 0, %s142
      %s157 = sphi 0, %s143
      %s163 = sphi 0, %s165
      %s166 = sphi 0, %s163
      %s167 = sphi 0, %s166
      %s183 = sphi 0, %s167
      %s189 = sphi 0, %s191
      %s192 = sphi 0, %s189
      %s193 = sphi 0, %s192
      %s209 = sphi 0, %s193
      %s215 = sphi 0, %s217
      %s218 = sphi 0, %s215
      %s219 = sphi 0, %s218
      %s235 = sphi 0, %s219
      %s241 = sphi 0, %s243
      %s244 = sphi 0, %s241
      %s245 = sphi 0, %s244
      %s261 = sphi 0, %s245
      %s267 = sphi 0, %s269
      %s270 = sphi 0, %s267
      %s271 = sphi 0, %s270
      %s287 = sphi 0, %s271
      %s293 = sphi 0, %s295
      %s296 = sphi 0, %s293
      %s297 = sphi 0, %s296
      %s313 = sphi 0, %s297
      %s319 = sphi 0, %s321
      %s322 = sphi 0, %s319
      %s323 = sphi 0, %s322
      %s339 = sphi 0, %s323
      %s345 = sphi 0, %s347
      %s348 = sphi 0, %s345
      %s349 = sphi 0, %s348
      %s365 = sphi 0, %s349
      %s371 = sphi 0, %s373
      %s374 = sphi 0, %s371
      %s375 = sphi 0, %s374
      %s391 = sphi 0, %s375
      %s397 = sphi 0, %s399
      %s400 = sphi 0, %s397
      %s401 = sphi 0, %s400
      %s417 = sphi 0, %s401
      %s423 = sphi 0, %s425
      %s426 = sphi 0, %s423
      %s427 = sphi 0, %s426
      %s443 = sphi 0, %s427
      %s449 = sphi 0, %s451
      %s452 = sphi 0, %s449
      %s453 = sphi 0, %s452
      %s469 = sphi 0, %s453
      %s475 = sphi 0, %s477
      %s478 = sphi 0, %s475
      %s479 = sphi 0, %s478
      %s495 = sphi 0, %s479
    $region4: #{transformer_forward.1} parent=1 // loop_header_branch
      %29 = sbr.rel (%p27) target = $region8
    $region5: #{transformer_forward.1} parent=1 // loop_body
      %s31 = ssub.s32 %s26, 1
      %s32 = ssub.s32 %s26, 2
      %s39 = sadd.s32 1, %s34
      %p40 = scmp.ge.s32.totalorder %s39, 2
      %s41 = scalar_select %p40, 0, %s39
      %s42 = sadd.s32 1, %s33
      %s43 = scalar_select %p40, %s42, %s33
      %p44 = scmp.ge.s32.totalorder %s43, 2
      %s45 = scalar_select %p44, 0, %s43
      %s46 = ssub.s32 %s33, %s45
      %p47 = scmp.eq.s32.totalorder %s46, 0
      %s49 = sadd.s32 %s48, 1
      %s50 = scalar_select %p47, %s48, %s49
      %p53 = pneg %p47
      %p54 = scmp.eq.s32.totalorder %s26, 3
      %p55 = por %p53, %p54
      %p56 = scmp.ne.s32.totalorder %s48, %s51
      %p57 = scmp.eq.s32.totalorder %s26, 0
      %p58 = por %p56, %p57
      %p59 = scmp.ne.s32.totalorder %s48, %s51
      %p60 = scmp.eq.s32.totalorder %s31, 3
      %p61 = por %p59, %p60
      %p62 = scmp.ne.s32.totalorder %s51, %s52
      %p63 = scmp.eq.s32.totalorder %s31, 0
      %p64 = por %p62, %p63
      %p65 = scmp.ne.s32.totalorder %s51, %s52
      %p66 = scmp.eq.s32.totalorder %s32, 3
      %p67 = por %p65, %p66
      %p69 = scmp.ne.s32.totalorder %s52, %s68
      %p70 = scmp.eq.s32.totalorder %s32, 0
      %p71 = por %p69, %p70
      %s73 = sadd.s32 %s72, 1
      %p76 = scmp.eq.s32.totalorder %s26, 3
      %p77 = scmp.ne.s32.totalorder %s72, %s74
      %p78 = scmp.eq.s32.totalorder %s26, 0
      %p79 = por %p77, %p78
      %p80 = scmp.ne.s32.totalorder %s72, %s74
      %p81 = scmp.eq.s32.totalorder %s31, 3
      %p82 = por %p80, %p81
      %p83 = scmp.ne.s32.totalorder %s74, %s75
      %p84 = scmp.eq.s32.totalorder %s31, 0
      %p85 = por %p83, %p84
      %p86 = scmp.ne.s32.totalorder %s74, %s75
      %p87 = scmp.eq.s32.totalorder %s32, 3
      %p88 = por %p86, %p87
      %p90 = scmp.ne.s32.totalorder %s75, %s89
      %p91 = scmp.eq.s32.totalorder %s32, 0
      %p92 = por %p90, %p91
      %s93 = ssub.s32 %s33, %s45
      %p94 = scmp.eq.s32.totalorder %s93, 0
      %s96 = sadd.s32 %s95, 1
      %s97 = scalar_select %p94, %s95, %s96
      %p100 = pneg %p94
      %p101 = scmp.eq.s32.totalorder %s26, 3
      %p102 = por %p100, %p101
      %p103 = scmp.ne.s32.totalorder %s95, %s98
      %p104 = scmp.eq.s32.totalorder %s26, 0
      %p105 = por %p103, %p104
      %p106 = scmp.ne.s32.totalorder %s95, %s98
      %p107 = scmp.eq.s32.totalorder %s31, 3
      %p108 = por %p106, %p107
      %p109 = scmp.ne.s32.totalorder %s98, %s99
      %p110 = scmp.eq.s32.totalorder %s31, 0
      %p111 = por %p109, %p110
      %p112 = scmp.ne.s32.totalorder %s98, %s99
      %p113 = scmp.eq.s32.totalorder %s32, 3
      %p114 = por %p112, %p113
      %p116 = scmp.ne.s32.totalorder %s99, %s115
      %p117 = scmp.eq.s32.totalorder %s32, 0
      %p118 = por %p116, %p117
      %s120 = sadd.s32 %s119, 1
      %p123 = scmp.eq.s32.totalorder %s26, 3
      %p124 = scmp.ne.s32.totalorder %s119, %s121
      %p125 = scmp.eq.s32.totalorder %s26, 0
      %p126 = por %p124, %p125
      %p127 = scmp.ne.s32.totalorder %s119, %s121
      %p128 = scmp.eq.s32.totalorder %s31, 3
      %p129 = por %p127, %p128
      %p130 = scmp.ne.s32.totalorder %s121, %s122
      %p131 = scmp.eq.s32.totalorder %s31, 0
      %p132 = por %p130, %p131
      %p133 = scmp.ne.s32.totalorder %s121, %s122
      %p134 = scmp.eq.s32.totalorder %s32, 3
      %p135 = por %p133, %p134
      %p137 = scmp.ne.s32.totalorder %s122, %s136
      %p138 = scmp.eq.s32.totalorder %s32, 0
      %p139 = por %p137, %p138
      %s141 = sadd.s32 %s140, 1
      %p144 = scmp.eq.s32.totalorder %s26, 3
      %p145 = scmp.ne.s32.totalorder %s140, %s142
      %p146 = scmp.eq.s32.totalorder %s26, 0
      %p147 = por %p145, %p146
      %p148 = scmp.ne.s32.totalorder %s140, %s142
      %p149 = scmp.eq.s32.totalorder %s31, 3
      %p150 = por %p148, %p149
      %p151 = scmp.ne.s32.totalorder %s142, %s143
      %p152 = scmp.eq.s32.totalorder %s31, 0
      %p153 = por %p151, %p152
      %p154 = scmp.ne.s32.totalorder %s142, %s143
      %p155 = scmp.eq.s32.totalorder %s32, 3
      %p156 = por %p154, %p155
      %p158 = scmp.ne.s32.totalorder %s143, %s157
      %p159 = scmp.eq.s32.totalorder %s32, 0
      %p160 = por %p158, %p159
      %s161 = ssub.s32 %s34, %s41
      %p162 = scmp.eq.s32.totalorder %s161, 0
      %s164 = sadd.s32 %s163, 1
      %s165 = scalar_select %p162, %s163, %s164
      %p168 = pneg %p162
      %p169 = scmp.eq.s32.totalorder %s26, 3
      %p170 = por %p168, %p169
      %p171 = scmp.ne.s32.totalorder %s163, %s166
      %p172 = scmp.eq.s32.totalorder %s26, 0
      %p173 = por %p171, %p172
      %p174 = scmp.ne.s32.totalorder %s163, %s166
      %p175 = scmp.eq.s32.totalorder %s31, 3
      %p176 = por %p174, %p175
      %p177 = scmp.ne.s32.totalorder %s166, %s167
      %p178 = scmp.eq.s32.totalorder %s31, 0
      %p179 = por %p177, %p178
      %p180 = scmp.ne.s32.totalorder %s166, %s167
      %p181 = scmp.eq.s32.totalorder %s32, 3
      %p182 = por %p180, %p181
      %p184 = scmp.ne.s32.totalorder %s167, %s183
      %p185 = scmp.eq.s32.totalorder %s32, 0
      %p186 = por %p184, %p185
      %s187 = ssub.s32 %s34, %s41
      %p188 = scmp.eq.s32.totalorder %s187, 0
      %s190 = sadd.s32 %s189, 1
      %s191 = scalar_select %p188, %s189, %s190
      %p194 = pneg %p188
      %p195 = scmp.eq.s32.totalorder %s26, 3
      %p196 = por %p194, %p195
      %p197 = scmp.ne.s32.totalorder %s189, %s192
      %p198 = scmp.eq.s32.totalorder %s26, 0
      %p199 = por %p197, %p198
      %p200 = scmp.ne.s32.totalorder %s189, %s192
      %p201 = scmp.eq.s32.totalorder %s31, 3
      %p202 = por %p200, %p201
      %p203 = scmp.ne.s32.totalorder %s192, %s193
      %p204 = scmp.eq.s32.totalorder %s31, 0
      %p205 = por %p203, %p204
      %p206 = scmp.ne.s32.totalorder %s192, %s193
      %p207 = scmp.eq.s32.totalorder %s32, 3
      %p208 = por %p206, %p207
      %p210 = scmp.ne.s32.totalorder %s193, %s209
      %p211 = scmp.eq.s32.totalorder %s32, 0
      %p212 = por %p210, %p211
      %s213 = ssub.s32 %s34, %s41
      %p214 = scmp.eq.s32.totalorder %s213, 0
      %s216 = sadd.s32 %s215, 1
      %s217 = scalar_select %p214, %s215, %s216
      %p220 = pneg %p214
      %p221 = scmp.eq.s32.totalorder %s26, 3
      %p222 = por %p220, %p221
      %p223 = scmp.ne.s32.totalorder %s215, %s218
      %p224 = scmp.eq.s32.totalorder %s26, 0
      %p225 = por %p223, %p224
      %p226 = scmp.ne.s32.totalorder %s215, %s218
      %p227 = scmp.eq.s32.totalorder %s31, 3
      %p228 = por %p226, %p227
      %p229 = scmp.ne.s32.totalorder %s218, %s219
      %p230 = scmp.eq.s32.totalorder %s31, 0
      %p231 = por %p229, %p230
      %p232 = scmp.ne.s32.totalorder %s218, %s219
      %p233 = scmp.eq.s32.totalorder %s32, 3
      %p234 = por %p232, %p233
      %p236 = scmp.ne.s32.totalorder %s219, %s235
      %p237 = scmp.eq.s32.totalorder %s32, 0
      %p238 = por %p236, %p237
      %s239 = ssub.s32 %s34, %s41
      %p240 = scmp.eq.s32.totalorder %s239, 0
      %s242 = sadd.s32 %s241, 1
      %s243 = scalar_select %p240, %s241, %s242
      %p246 = pneg %p240
      %p247 = scmp.eq.s32.totalorder %s26, 3
      %p248 = por %p246, %p247
      %p249 = scmp.ne.s32.totalorder %s241, %s244
      %p250 = scmp.eq.s32.totalorder %s26, 0
      %p251 = por %p249, %p250
      %p252 = scmp.ne.s32.totalorder %s241, %s244
      %p253 = scmp.eq.s32.totalorder %s31, 3
      %p254 = por %p252, %p253
      %p255 = scmp.ne.s32.totalorder %s244, %s245
      %p256 = scmp.eq.s32.totalorder %s31, 0
      %p257 = por %p255, %p256
      %p258 = scmp.ne.s32.totalorder %s244, %s245
      %p259 = scmp.eq.s32.totalorder %s32, 3
      %p260 = por %p258, %p259
      %p262 = scmp.ne.s32.totalorder %s245, %s261
      %p263 = scmp.eq.s32.totalorder %s32, 0
      %p264 = por %p262, %p263
      %s265 = ssub.s32 %s34, %s41
      %p266 = scmp.eq.s32.totalorder %s265, 0
      %s268 = sadd.s32 %s267, 1
      %s269 = scalar_select %p266, %s267, %s268
      %p272 = pneg %p266
      %p273 = scmp.eq.s32.totalorder %s26, 3
      %p274 = por %p272, %p273
      %p275 = scmp.ne.s32.totalorder %s267, %s270
      %p276 = scmp.eq.s32.totalorder %s26, 0
      %p277 = por %p275, %p276
      %p278 = scmp.ne.s32.totalorder %s267, %s270
      %p279 = scmp.eq.s32.totalorder %s31, 3
      %p280 = por %p278, %p279
      %p281 = scmp.ne.s32.totalorder %s270, %s271
      %p282 = scmp.eq.s32.totalorder %s31, 0
      %p283 = por %p281, %p282
      %p284 = scmp.ne.s32.totalorder %s270, %s271
      %p285 = scmp.eq.s32.totalorder %s32, 3
      %p286 = por %p284, %p285
      %p288 = scmp.ne.s32.totalorder %s271, %s287
      %p289 = scmp.eq.s32.totalorder %s32, 0
      %p290 = por %p288, %p289
      %s291 = ssub.s32 %s34, %s41
      %p292 = scmp.eq.s32.totalorder %s291, 0
      %s294 = sadd.s32 %s293, 1
      %s295 = scalar_select %p292, %s293, %s294
      %p298 = pneg %p292
      %p299 = scmp.eq.s32.totalorder %s26, 3
      %p300 = por %p298, %p299
      %p301 = scmp.ne.s32.totalorder %s293, %s296
      %p302 = scmp.eq.s32.totalorder %s26, 0
      %p303 = por %p301, %p302
      %p304 = scmp.ne.s32.totalorder %s293, %s296
      %p305 = scmp.eq.s32.totalorder %s31, 3
      %p306 = por %p304, %p305
      %p307 = scmp.ne.s32.totalorder %s296, %s297
      %p308 = scmp.eq.s32.totalorder %s31, 0
      %p309 = por %p307, %p308
      %p310 = scmp.ne.s32.totalorder %s296, %s297
      %p311 = scmp.eq.s32.totalorder %s32, 3
      %p312 = por %p310, %p311
      %p314 = scmp.ne.s32.totalorder %s297, %s313
      %p315 = scmp.eq.s32.totalorder %s32, 0
      %p316 = por %p314, %p315
      %s317 = ssub.s32 %s34, %s41
      %p318 = scmp.eq.s32.totalorder %s317, 0
      %s320 = sadd.s32 %s319, 1
      %s321 = scalar_select %p318, %s319, %s320
      %p324 = pneg %p318
      %p325 = scmp.eq.s32.totalorder %s26, 3
      %p326 = por %p324, %p325
      %p327 = scmp.ne.s32.totalorder %s319, %s322
      %p328 = scmp.eq.s32.totalorder %s26, 0
      %p329 = por %p327, %p328
      %p330 = scmp.ne.s32.totalorder %s319, %s322
      %p331 = scmp.eq.s32.totalorder %s31, 3
      %p332 = por %p330, %p331
      %p333 = scmp.ne.s32.totalorder %s322, %s323
      %p334 = scmp.eq.s32.totalorder %s31, 0
      %p335 = por %p333, %p334
      %p336 = scmp.ne.s32.totalorder %s322, %s323
      %p337 = scmp.eq.s32.totalorder %s32, 3
      %p338 = por %p336, %p337
      %p340 = scmp.ne.s32.totalorder %s323, %s339
      %p341 = scmp.eq.s32.totalorder %s32, 0
      %p342 = por %p340, %p341
      %s343 = ssub.s32 %s34, %s41
      %p344 = scmp.eq.s32.totalorder %s343, 0
      %s346 = sadd.s32 %s345, 1
      %s347 = scalar_select %p344, %s345, %s346
      %p350 = pneg %p344
      %p351 = scmp.eq.s32.totalorder %s26, 3
      %p352 = por %p350, %p351
      %p353 = scmp.ne.s32.totalorder %s345, %s348
      %p354 = scmp.eq.s32.totalorder %s26, 0
      %p355 = por %p353, %p354
      %p356 = scmp.ne.s32.totalorder %s345, %s348
      %p357 = scmp.eq.s32.totalorder %s31, 3
      %p358 = por %p356, %p357
      %p359 = scmp.ne.s32.totalorder %s348, %s349
      %p360 = scmp.eq.s32.totalorder %s31, 0
      %p361 = por %p359, %p360
      %p362 = scmp.ne.s32.totalorder %s348, %s349
      %p363 = scmp.eq.s32.totalorder %s32, 3
      %p364 = por %p362, %p363
      %p366 = scmp.ne.s32.totalorder %s349, %s365
      %p367 = scmp.eq.s32.totalorder %s32, 0
      %p368 = por %p366, %p367
      %s369 = ssub.s32 %s34, %s41
      %p370 = scmp.eq.s32.totalorder %s369, 0
      %s372 = sadd.s32 %s371, 1
      %s373 = scalar_select %p370, %s371, %s372
      %p376 = pneg %p370
      %p377 = scmp.eq.s32.totalorder %s26, 3
      %p378 = por %p376, %p377
      %p379 = scmp.ne.s32.totalorder %s371, %s374
      %p380 = scmp.eq.s32.totalorder %s26, 0
      %p381 = por %p379, %p380
      %p382 = scmp.ne.s32.totalorder %s371, %s374
      %p383 = scmp.eq.s32.totalorder %s31, 3
      %p384 = por %p382, %p383
      %p385 = scmp.ne.s32.totalorder %s374, %s375
      %p386 = scmp.eq.s32.totalorder %s31, 0
      %p387 = por %p385, %p386
      %p388 = scmp.ne.s32.totalorder %s374, %s375
      %p389 = scmp.eq.s32.totalorder %s32, 3
      %p390 = por %p388, %p389
      %p392 = scmp.ne.s32.totalorder %s375, %s391
      %p393 = scmp.eq.s32.totalorder %s32, 0
      %p394 = por %p392, %p393
      %s395 = ssub.s32 %s34, %s41
      %p396 = scmp.eq.s32.totalorder %s395, 0
      %s398 = sadd.s32 %s397, 1
      %s399 = scalar_select %p396, %s397, %s398
      %p402 = pneg %p396
      %p403 = scmp.eq.s32.totalorder %s26, 3
      %p404 = por %p402, %p403
      %p405 = scmp.ne.s32.totalorder %s397, %s400
      %p406 = scmp.eq.s32.totalorder %s26, 0
      %p407 = por %p405, %p406
      %p408 = scmp.ne.s32.totalorder %s397, %s400
      %p409 = scmp.eq.s32.totalorder %s31, 3
      %p410 = por %p408, %p409
      %p411 = scmp.ne.s32.totalorder %s400, %s401
      %p412 = scmp.eq.s32.totalorder %s31, 0
      %p413 = por %p411, %p412
      %p414 = scmp.ne.s32.totalorder %s400, %s401
      %p415 = scmp.eq.s32.totalorder %s32, 3
      %p416 = por %p414, %p415
      %p418 = scmp.ne.s32.totalorder %s401, %s417
      %p419 = scmp.eq.s32.totalorder %s32, 0
      %p420 = por %p418, %p419
      %s421 = ssub.s32 %s34, %s41
      %p422 = scmp.eq.s32.totalorder %s421, 0
      %s424 = sadd.s32 %s423, 1
      %s425 = scalar_select %p422, %s423, %s424
      %p428 = pneg %p422
      %p429 = scmp.eq.s32.totalorder %s26, 3
      %p430 = por %p428, %p429
      %p431 = scmp.ne.s32.totalorder %s423, %s426
      %p432 = scmp.eq.s32.totalorder %s26, 0
      %p433 = por %p431, %p432
      %p434 = scmp.ne.s32.totalorder %s423, %s426
      %p435 = scmp.eq.s32.totalorder %s31, 3
      %p436 = por %p434, %p435
      %p437 = scmp.ne.s32.totalorder %s426, %s427
      %p438 = scmp.eq.s32.totalorder %s31, 0
      %p439 = por %p437, %p438
      %p440 = scmp.ne.s32.totalorder %s426, %s427
      %p441 = scmp.eq.s32.totalorder %s32, 3
      %p442 = por %p440, %p441
      %p444 = scmp.ne.s32.totalorder %s427, %s443
      %p445 = scmp.eq.s32.totalorder %s32, 0
      %p446 = por %p444, %p445
      %s447 = ssub.s32 %s34, %s41
      %p448 = scmp.eq.s32.totalorder %s447, 0
      %s450 = sadd.s32 %s449, 1
      %s451 = scalar_select %p448, %s449, %s450
      %p454 = pneg %p448
      %p455 = scmp.eq.s32.totalorder %s26, 3
      %p456 = por %p454, %p455
      %p457 = scmp.ne.s32.totalorder %s449, %s452
      %p458 = scmp.eq.s32.totalorder %s26, 0
      %p459 = por %p457, %p458
      %p460 = scmp.ne.s32.totalorder %s449, %s452
      %p461 = scmp.eq.s32.totalorder %s31, 3
      %p462 = por %p460, %p461
      %p463 = scmp.ne.s32.totalorder %s452, %s453
      %p464 = scmp.eq.s32.totalorder %s31, 0
      %p465 = por %p463, %p464
      %p466 = scmp.ne.s32.totalorder %s452, %s453
      %p467 = scmp.eq.s32.totalorder %s32, 3
      %p468 = por %p466, %p467
      %p470 = scmp.ne.s32.totalorder %s453, %s469
      %p471 = scmp.eq.s32.totalorder %s32, 0
      %p472 = por %p470, %p471
      %s473 = ssub.s32 %s33, %s45
      %p474 = scmp.eq.s32.totalorder %s473, 0
      %s476 = sadd.s32 %s475, 1
      %s477 = scalar_select %p474, %s475, %s476
      %p480 = pneg %p474
      %p481 = scmp.eq.s32.totalorder %s26, 3
      %p482 = por %p480, %p481
      %p483 = scmp.ne.s32.totalorder %s475, %s478
      %p484 = scmp.eq.s32.totalorder %s26, 0
      %p485 = por %p483, %p484
      %p486 = scmp.ne.s32.totalorder %s475, %s478
      %p487 = scmp.eq.s32.totalorder %s31, 3
      %p488 = por %p486, %p487
      %p489 = scmp.ne.s32.totalorder %s478, %s479
      %p490 = scmp.eq.s32.totalorder %s31, 0
      %p491 = por %p489, %p490
      %p492 = scmp.ne.s32.totalorder %s478, %s479
      %p493 = scmp.eq.s32.totalorder %s32, 3
      %p494 = por %p492, %p493
      %p496 = scmp.ne.s32.totalorder %s479, %s495
      %p497 = scmp.eq.s32.totalorder %s32, 0
      %p498 = por %p496, %p497
      %p499 = scmp.le.s32.totalorder 1, %s26
      %p500 = scmp.lt.s32.totalorder %s26, 5
      %p501 = pnand %p499, %p500
      %p502 = pneg %p501
      // Predicated region
      $region9: #{transformer_forward.1} parent=5 // pred_check
        _
      $region10: #{transformer_forward.1} parent=5 // pred_check_branch
        %504 = sbr.rel (%p501) target = $region12
      $region11: #{transformer_forward.1} parent=5 // pred_region
        %s505 = ssub.s32 %s26, 1
        // Predicated region
        $region13: #{transformer_forward.1} parent=11 // pred_check
          %p506 = pneg %p85
        $region14: #{transformer_forward.1} parent=11 // pred_check_branch
          %508 = sbr.rel (%p506) target = $region16
        $region15: #{transformer_forward.1} parent=11 // pred_region
          _
        $region16: #{transformer_forward.1} parent=11 // pred_fallthru
          _
        // Predicated region
        $region17: #{transformer_forward.1} parent=11 // pred_check
          %p509 = pneg %p132
        $region18: #{transformer_forward.1} parent=11 // pred_check_branch
          %511 = sbr.rel (%p509) target = $region20
        $region19: #{transformer_forward.1} parent=11 // pred_region
          _
        $region20: #{transformer_forward.1} parent=11 // pred_fallthru
          _
        // Predicated region
        $region21: #{transformer_forward.1} parent=11 // pred_check
          %p512 = pneg %p153
        $region22: #{transformer_forward.1} parent=11 // pred_check_branch
          %514 = sbr.rel (%p512) target = $region24
        $region23: #{transformer_forward.1} parent=11 // pred_region
          _
        $region24: #{transformer_forward.1} parent=11 // pred_fallthru
          _
      $region12: #{transformer_forward.1} parent=5 // pred_fallthru
        _
      %p515 = scmp.lt.s32.totalorder %s26, 4
      // Predicated region
      $region25: #{transformer_forward.1} parent=5 // pred_check
        %p516 = pneg %p515
      $region26: #{transformer_forward.1} parent=5 // pred_check_branch
        %518 = sbr.rel (%p516) target = $region28
      $region27: #{transformer_forward.1} parent=5 // pred_region
        // Predicated region
        $region29: #{transformer_forward.1} parent=27 // pred_check
          %p519 = pneg %p58
        $region30: #{transformer_forward.1} parent=27 // pred_check_branch
          %521 = sbr.rel (%p519) target = $region32
        $region31: #{transformer_forward.1} parent=27 // pred_region
          %p522 = scmp.lt.s32.totalorder %s33, 1
          %s523 = scalar_select %p522, %s33, 1
          %s524 = smul.addr %s523, 8
          %s525 = smul.addr %s524, 8
          %s526 = scalar_lea.vmem %s0, %s525
        $region32: #{transformer_forward.1} parent=27 // pred_fallthru
          _
        // Predicated region
        $region33: #{transformer_forward.1} parent=27 // pred_check
          %p527 = pneg %p105
        $region34: #{transformer_forward.1} parent=27 // pred_check_branch
          %529 = sbr.rel (%p527) target = $region36
        $region35: #{transformer_forward.1} parent=27 // pred_region
          %p530 = scmp.lt.s32.totalorder %s33, 1
          %s531 = scalar_select %p530, %s33, 1
          %s532 = scalar_lea.vmem %s2, %s531
        $region36: #{transformer_forward.1} parent=27 // pred_fallthru
          _
        // Predicated region
        $region37: #{transformer_forward.1} parent=27 // pred_check
          %p533 = pneg %p173
        $region38: #{transformer_forward.1} parent=27 // pred_check_branch
          %535 = sbr.rel (%p533) target = $region40
        $region39: #{transformer_forward.1} parent=27 // pred_region
          %p536 = scmp.lt.s32.totalorder %s34, 1
          %s537 = scalar_select %p536, %s34, 1
          %s538 = smul.addr %s537, 4
          %s539 = smul.addr %s538, 4
          %s540 = scalar_lea.vmem %s5, %s539
        $region40: #{transformer_forward.1} parent=27 // pred_fallthru
          _
        // Predicated region
        $region41: #{transformer_forward.1} parent=27 // pred_check
          %p541 = pneg %p199
        $region42: #{transformer_forward.1} parent=27 // pred_check_branch
          %543 = sbr.rel (%p541) target = $region44
        $region43: #{transformer_forward.1} parent=27 // pred_region
          %p544 = scmp.lt.s32.totalorder %s34, 1
          %s545 = scalar_select %p544, %s34, 1
          %s546 = scalar_lea.vmem %s6, %s545
        $region44: #{transformer_forward.1} parent=27 // pred_fallthru
          _
        // Predicated region
        $region45: #{transformer_forward.1} parent=27 // pred_check
          %p547 = pneg %p225
        $region46: #{transformer_forward.1} parent=27 // pred_check_branch
          %549 = sbr.rel (%p547) target = $region48
        $region47: #{transformer_forward.1} parent=27 // pred_region
          %p550 = scmp.lt.s32.totalorder %s34, 1
          %s551 = scalar_select %p550, %s34, 1
          %s552 = smul.addr %s551, 4
          %s553 = smul.addr %s552, 4
          %s554 = scalar_lea.vmem %s7, %s553
        $region48: #{transformer_forward.1} parent=27 // pred_fallthru
          _
        // Predicated region
        $region49: #{transformer_forward.1} parent=27 // pred_check
          %p555 = pneg %p251
        $region50: #{transformer_forward.1} parent=27 // pred_check_branch
          %557 = sbr.rel (%p555) target = $region52
        $region51: #{transformer_forward.1} parent=27 // pred_region
          %p558 = scmp.lt.s32.totalorder %s34, 1
          %s559 = scalar_select %p558, %s34, 1
          %s560 = scalar_lea.vmem %s8, %s559
        $region52: #{transformer_forward.1} parent=27 // pred_fallthru
          _
        // Predicated region
        $region53: #{transformer_forward.1} parent=27 // pred_check
          %p561 = pneg %p277
        $region54: #{transformer_forward.1} parent=27 // pred_check_branch
          %563 = sbr.rel (%p561) target = $region56
        $region55: #{transformer_forward.1} parent=27 // pred_region
          %p564 = scmp.lt.s32.totalorder %s34, 1
          %s565 = scalar_select %p564, %s34, 1
          %s566 = scalar_lea.vmem %s9, %s565
        $region56: #{transformer_forward.1} parent=27 // pred_fallthru
          _
        // Predicated region
        $region57: #{transformer_forward.1} parent=27 // pred_check
          %p567 = pneg %p303
        $region58: #{transformer_forward.1} parent=27 // pred_check_branch
          %569 = sbr.rel (%p567) target = $region60
        $region59: #{transformer_forward.1} parent=27 // pred_region
          %p570 = scmp.lt.s32.totalorder %s34, 1
          %s571 = scalar_select %p570, %s34, 1
          %s572 = scalar_lea.vmem %s10, %s571
        $region60: #{transformer_forward.1} parent=27 // pred_fallthru
          _
        // Predicated region
        $region61: #{transformer_forward.1} parent=27 // pred_check
          %p573 = pneg %p329
        $region62: #{transformer_forward.1} parent=27 // pred_check_branch
          %575 = sbr.rel (%p573) target = $region64
        $region63: #{transformer_forward.1} parent=27 // pred_region
          %p576 = scmp.lt.s32.totalorder %s34, 1
          %s577 = scalar_select %p576, %s34, 1
          %s578 = smul.addr %s577, 64
          %s579 = smul.addr %s578, 4
          %s580 = scalar_lea.vmem %s11, %s579
        $region64: #{transformer_forward.1} parent=27 // pred_fallthru
          _
        // Predicated region
        $region65: #{transformer_forward.1} parent=27 // pred_check
          %p581 = pneg %p355
        $region66: #{transformer_forward.1} parent=27 // pred_check_branch
          %583 = sbr.rel (%p581) target = $region68
        $region67: #{transformer_forward.1} parent=27 // pred_region
          %p584 = scmp.lt.s32.totalorder %s34, 1
          %s585 = scalar_select %p584, %s34, 1
          %s586 = smul.addr %s585, 16
          %s587 = scalar_lea.vmem %s12, %s586
        $region68: #{transformer_forward.1} parent=27 // pred_fallthru
          _
        // Predicated region
        $region69: #{transformer_forward.1} parent=27 // pred_check
          %p588 = pneg %p381
        $region70: #{transformer_forward.1} parent=27 // pred_check_branch
          %590 = sbr.rel (%p588) target = $region72
        $region71: #{transformer_forward.1} parent=27 // pred_region
          %p591 = scmp.lt.s32.totalorder %s34, 1
          %s592 = scalar_select %p591, %s34, 1
          %s593 = smul.addr %s592, 256
          %s594 = smul.addr %s593, 4
          %s595 = scalar_lea.vmem %s13, %s594
        $region72: #{transformer_forward.1} parent=27 // pred_fallthru
          _
        // Predicated region
        $region73: #{transformer_forward.1} parent=27 // pred_check
          %p596 = pneg %p407
        $region74: #{transformer_forward.1} parent=27 // pred_check_branch
          %598 = sbr.rel (%p596) target = $region76
        $region75: #{transformer_forward.1} parent=27 // pred_region
          %p599 = scmp.lt.s32.totalorder %s34, 1
          %s600 = scalar_select %p599, %s34, 1
          %s601 = scalar_lea.vmem %s14, %s600
        $region76: #{transformer_forward.1} parent=27 // pred_fallthru
          _
        // Predicated region
        $region77: #{transformer_forward.1} parent=27 // pred_check
          %p602 = pneg %p433
        $region78: #{transformer_forward.1} parent=27 // pred_check_branch
          %604 = sbr.rel (%p602) target = $region80
        $region79: #{transformer_forward.1} parent=27 // pred_region
          %p605 = scmp.lt.s32.totalorder %s34, 1
          %s606 = scalar_select %p605, %s34, 1
          %s607 = scalar_lea.vmem %s15, %s606
        $region80: #{transformer_forward.1} parent=27 // pred_fallthru
          _
        // Predicated region
        $region81: #{transformer_forward.1} parent=27 // pred_check
          %p608 = pneg %p459
        $region82: #{transformer_forward.1} parent=27 // pred_check_branch
          %610 = sbr.rel (%p608) target = $region84
        $region83: #{transformer_forward.1} parent=27 // pred_region
          %p611 = scmp.lt.s32.totalorder %s34, 1
          %s612 = scalar_select %p611, %s34, 1
          %s613 = scalar_lea.vmem %s16, %s612
        $region84: #{transformer_forward.1} parent=27 // pred_fallthru
          _
      $region28: #{transformer_forward.1} parent=5 // pred_fallthru
        _
      %p614 = scmp.le.s32.totalorder 1, %s26
      %p615 = scmp.lt.s32.totalorder %s26, 5
      %p616 = pnand %p614, %p615
      %p617 = pneg %p616
      // Predicated region
      $region85: #{transformer_forward.1} parent=5 // pred_check
        _
      $region86: #{transformer_forward.1} parent=5 // pred_check_branch
        %619 = sbr.rel (%p616) target = $region88
      $region87: #{transformer_forward.1} parent=5 // pred_region
        %s620 = ssub.s32 %s26, 1
        %p621 = scmp.lt.s32.totalorder %s35, 1
        %s622 = scalar_select %p621, %s35, 1
        %s623 = smul.addr %s622, 8
        %s624 = smul.addr %s623, 8
        %s625 = scalar_lea.vmem %s0, %s624
        %p626 = pneg %p64
        %p627 = pneg %p61
        %p628 = pneg %p85
        %p629 = pneg %p82
        %p630 = scmp.lt.s32.totalorder %s35, 1
        %s631 = scalar_select %p630, %s35, 1
        %s632 = scalar_lea.vmem %s2, %s631
        %p633 = pneg %p111
        %p634 = pneg %p108
        %p635 = pneg %p132
        %p636 = pneg %p129
        %p637 = pneg %p153
        %p638 = pneg %p150
        %p639 = scmp.lt.s32.totalorder %s36, 1
        %s640 = scalar_select %p639, %s36, 1
        %s641 = smul.addr %s640, 4
        %s642 = smul.addr %s641, 4
        %s643 = scalar_lea.vmem %s5, %s642
        %p644 = pneg %p179
        %p645 = pneg %p176
        %p646 = scmp.lt.s32.totalorder %s36, 1
        %s647 = scalar_select %p646, %s36, 1
        %s648 = scalar_lea.vmem %s6, %s647
        %p649 = pneg %p205
        %p650 = pneg %p202
        %p651 = scmp.lt.s32.totalorder %s36, 1
        %s652 = scalar_select %p651, %s36, 1
        %s653 = smul.addr %s652, 4
        %s654 = smul.addr %s653, 4
        %s655 = scalar_lea.vmem %s7, %s654
        %p656 = pneg %p231
        %p657 = pneg %p228
        %p658 = scmp.lt.s32.totalorder %s36, 1
        %s659 = scalar_select %p658, %s36, 1
        %s660 = scalar_lea.vmem %s8, %s659
        %p661 = pneg %p257
        %p662 = pneg %p254
        %p663 = scmp.lt.s32.totalorder %s36, 1
        %s664 = scalar_select %p663, %s36, 1
        %s665 = scalar_lea.vmem %s9, %s664
        %p666 = pneg %p283
        %p667 = pneg %p280
        %p668 = scmp.lt.s32.totalorder %s36, 1
        %s669 = scalar_select %p668, %s36, 1
        %s670 = scalar_lea.vmem %s10, %s669
        %p671 = pneg %p309
        %p672 = pneg %p306
        %p673 = scmp.lt.s32.totalorder %s36, 1
        %s674 = scalar_select %p673, %s36, 1
        %s675 = smul.addr %s674, 64
        %s676 = smul.addr %s675, 4
        %s677 = scalar_lea.vmem %s11, %s676
        %p678 = pneg %p335
        %p679 = pneg %p332
        %p680 = scmp.lt.s32.totalorder %s36, 1
        %s681 = scalar_select %p680, %s36, 1
        %s682 = smul.addr %s681, 16
        %s683 = scalar_lea.vmem %s12, %s682
        %p684 = pneg %p361
        %p685 = pneg %p358
        %p686 = scmp.lt.s32.totalorder %s36, 1
        %s687 = scalar_select %p686, %s36, 1
        %s688 = smul.addr %s687, 256
        %s689 = smul.addr %s688, 4
        %s690 = scalar_lea.vmem %s13, %s689
        %p691 = pneg %p387
        %p692 = pneg %p384
        %p693 = scmp.lt.s32.totalorder %s36, 1
        %s694 = scalar_select %p693, %s36, 1
        %s695 = scalar_lea.vmem %s14, %s694
        %p696 = pneg %p413
        %p697 = pneg %p410
        %p698 = scmp.lt.s32.totalorder %s36, 1
        %s699 = scalar_select %p698, %s36, 1
        %s700 = scalar_lea.vmem %s15, %s699
        %p701 = pneg %p439
        %p702 = pneg %p436
        %p703 = scmp.lt.s32.totalorder %s36, 1
        %s704 = scalar_select %p703, %s36, 1
        %s705 = scalar_lea.vmem %s16, %s704
        %p706 = pneg %p465
        %p707 = pneg %p462
        %p708 = pneg %p491
        %p709 = pneg %p488
        %s710 = sand.u32 %s478, 1
        %s711 = scalar_lea.sflag [#allocation4], %s710
        %s712 = sand.u32 %s478, 1
        %s713 = scalar_lea.vmem [#allocation3], %s712
        %p714 = scmp.lt.s32.totalorder %s35, 1
        %s715 = scalar_select %p714, %s35, 1
        %s716 = smul.addr %s715, 8
        %s717 = smul.addr %s716, 8
        %s718 = scalar_lea.vmem %s0, %s717
        %p719 = scmp.lt.s32.totalorder %s35, 1
        %s720 = scalar_select %p719, %s35, 1
        %s721 = scalar_lea.vmem %s2, %s720
        %p722 = scmp.lt.s32.totalorder %s36, 1
        %s723 = scalar_select %p722, %s36, 1
        %s724 = smul.addr %s723, 4
        %s725 = smul.addr %s724, 4
        %s726 = scalar_lea.vmem %s5, %s725
        %p727 = scmp.lt.s32.totalorder %s36, 1
        %s728 = scalar_select %p727, %s36, 1
        %s729 = scalar_lea.vmem %s6, %s728
        %p730 = scmp.lt.s32.totalorder %s36, 1
        %s731 = scalar_select %p730, %s36, 1
        %s732 = smul.addr %s731, 4
        %s733 = smul.addr %s732, 4
        %s734 = scalar_lea.vmem %s7, %s733
        %p735 = scmp.lt.s32.totalorder %s36, 1
        %s736 = scalar_select %p735, %s36, 1
        %s737 = scalar_lea.vmem %s8, %s736
        %p738 = scmp.lt.s32.totalorder %s36, 1
        %s739 = scalar_select %p738, %s36, 1
        %s740 = scalar_lea.vmem %s9, %s739
        %p741 = scmp.lt.s32.totalorder %s36, 1
        %s742 = scalar_select %p741, %s36, 1
        %s743 = scalar_lea.vmem %s10, %s742
        %p744 = scmp.lt.s32.totalorder %s36, 1
        %s745 = scalar_select %p744, %s36, 1
        %s746 = smul.addr %s745, 64
        %s747 = smul.addr %s746, 4
        %s748 = scalar_lea.vmem %s11, %s747
        %p749 = scmp.lt.s32.totalorder %s36, 1
        %s750 = scalar_select %p749, %s36, 1
        %s751 = smul.addr %s750, 16
        %s752 = scalar_lea.vmem %s12, %s751
        %p753 = scmp.lt.s32.totalorder %s36, 1
        %s754 = scalar_select %p753, %s36, 1
        %s755 = smul.addr %s754, 256
        %s756 = smul.addr %s755, 4
        %s757 = scalar_lea.vmem %s13, %s756
        %p758 = scmp.lt.s32.totalorder %s36, 1
        %s759 = scalar_select %p758, %s36, 1
        %s760 = scalar_lea.vmem %s14, %s759
        %p761 = scmp.lt.s32.totalorder %s36, 1
        %s762 = scalar_select %p761, %s36, 1
        %s763 = scalar_lea.vmem %s15, %s762
        %p764 = scmp.lt.s32.totalorder %s36, 1
        %s765 = scalar_select %p764, %s36, 1
        %s766 = scalar_lea.vmem %s16, %s765
        %p768 = scmp.eq.s32.totalorder %s36, 0
        // Predicated region
        $region89: #{transformer_forward.1} parent=87 // pred_check
          %p769 = pneg %p768
        $region90: #{transformer_forward.1} parent=87 // pred_check_branch
          %771 = sbr.rel (%p769) target = $region92
        $region91: #{transformer_forward.1} parent=87 // pred_region
          %v772 = vld [vmem:[%s718] sm:$0xff]
          %v773 = vld [vmem:[%s718 + $0x8] sm:$0xff]
          %v774 = vld [vmem:[%s718 + $0x10] sm:$0xff]
          %v775 = vld [vmem:[%s718 + $0x18] sm:$0xff]
          %v776 = vld [vmem:[%s718 + $0x20] sm:$0xff]
          %v777 = vld [vmem:[%s718 + $0x28] sm:$0xff]
          %v778 = vld [vmem:[%s718 + $0x30] sm:$0xff]
          %v779 = vld [vmem:[%s718 + $0x38] sm:$0xff]
          %v780 = vpack.c.bf16 %v773, %v772
          %v781 = vpack.c.bf16 %v775, %v774
          %v782 = vpack.c.bf16 %v777, %v776
          %v783 = vpack.c.bf16 %v779, %v778
          %v784 = vld [vmem:[%s3] sm:$0x3]
          %v785 = vld [vmem:[%s4] sm:$0x1]
          %v787 = vlaneseq
          %v788 = vshrl.u32 %v787, 7
          %v789 = vsub.s32 0, %v788
          %v790 = vrot.slane %v785, %v789
          %vm792 = vcmask 31744
          %v794 = vsel %vm792, %v780, 0
          %v797 = vsel %vm792, %v781, 0
          %v800 = vsel %vm792, %v782, 0
          %v803 = vsel %vm792, %v783, 0
          %vm805 = vcmask 1041408
          %v807 = vsel %vm805, %v784, 0
          %809 = vmatprep.subr.bf16.mxu0 0
          %810 = vmatpush1.bf16.msra.mxu0 %v807
          %811 = vmatprep.subr.bf16.mxu0 0
          %812 = vmatpush1.bf16.msra.mxu0 0
          %813 = vmatprep.subr.bf16.mxu0 0
          %814 = vmatpush1.bf16.msra.mxu0 0
          %815 = vmatprep.subr.bf16.mxu0 0
          %816 = vmatpush1.bf16.msra.mxu0 0
          %817 = vmatprep.subr.bf16.mxu0 0
          %818 = vmatpush1.bf16.msra.mxu0 0
          %819 = vmatprep.subr.bf16.mxu0 0
          %820 = vmatpush1.bf16.msra.mxu0 0
          %821 = vmatprep.subr.bf16.mxu0 0
          %822 = vmatpush1.bf16.msra.mxu0 0
          %823 = vmatprep.subr.bf16.mxu0 0
          %824 = vmatpush1.bf16.msra.mxu0 0
          %825 = vmatprep.subr.bf16.mxu0 0
          %826 = vmatpush1.bf16.msra.mxu0 0
          %827 = vmatprep.subr.bf16.mxu0 0
          %828 = vmatpush1.bf16.msra.mxu0 0
          %829 = vmatprep.subr.bf16.mxu0 0
          %830 = vmatpush1.bf16.msra.mxu0 0
          %831 = vmatprep.subr.bf16.mxu0 0
          %832 = vmatpush1.bf16.msra.mxu0 0
          %833 = vmatprep.subr.bf16.mxu0 0
          %834 = vmatpush1.bf16.msra.mxu0 0
          %835 = vmatprep.subr.bf16.mxu0 0
          %836 = vmatpush1.bf16.msra.mxu0 0
          %837 = vmatprep.subr.bf16.mxu0 0
          %838 = vmatpush1.bf16.msra.mxu0 0
          %839 = vmatprep.subr.bf16.mxu0 0
          %840 = vmatpush1.bf16.msra.mxu0 0
          %841 = vmatprep.mubr.bf16.mxu0 0
          %842 = vmatmul.mubr.bf16.gmra.mrb[0].mxu0 %v794
          %v843 = vpop.f32.mrb[0].mxu0
          %v844 = vadd.f32 %v790, %v843
          %v845 = vpop.f32.mrb[0].mxu0
          %v846 = vpop.f32.mrb[0].mxu0
          %v847 = vadd.f32 %v790, %v846
          %v848 = vpop.f32.mrb[0].mxu0
          %849 = vmatprep.mubr.bf16.mxu0 0
          %850 = vmatmul.mubr.bf16.gmra.mrb[0].mxu0 %v797
          %v851 = vpop.f32.mrb[0].mxu0
          %v852 = vadd.f32 %v790, %v851
          %v853 = vpop.f32.mrb[0].mxu0
          %v854 = vpop.f32.mrb[0].mxu0
          %v855 = vadd.f32 %v790, %v854
          %v856 = vpop.f32.mrb[0].mxu0
          %857 = vmatprep.mubr.bf16.mxu0 0
          %858 = vmatmul.mubr.bf16.gmra.mrb[0].mxu0 %v800
          %v859 = vpop.f32.mrb[0].mxu0
          %v860 = vadd.f32 %v790, %v859
          %v861 = vpop.f32.mrb[0].mxu0
          %v862 = vpop.f32.mrb[0].mxu0
          %v863 = vadd.f32 %v790, %v862
          %v864 = vpop.f32.mrb[0].mxu0
          %865 = vmatprep.mubr.bf16.mxu0 0
          %866 = vmatmul.mubr.bf16.gmra.mrb[0].mxu0 %v803
          %v867 = vpop.f32.mrb[0].mxu0
          %v868 = vadd.f32 %v790, %v867
          %v869 = vpop.f32.mrb[0].mxu0
          %v870 = vpop.f32.mrb[0].mxu0
          %v871 = vadd.f32 %v790, %v870
          %v872 = vpop.f32.mrb[0].mxu0
          %873 = vdwg.mxu0
          %v874 = vld [vmem:[%s1] sm:$0xff]
          %v875 = vld [vmem:[%s1 + $0x8] sm:$0xff]
          %v876 = vld [vmem:[%s1 + $0x10] sm:$0xff]
          %v877 = vld [vmem:[%s1 + $0x18] sm:$0xff]
          %v878 = vld [vmem:[%s1 + $0x20] sm:$0xff]
          %v879 = vld [vmem:[%s1 + $0x28] sm:$0xff]
          %v880 = vld [vmem:[%s1 + $0x30] sm:$0xff]
          %v881 = vld [vmem:[%s1 + $0x38] sm:$0xff]
          %v882 = vadd.f32 %v844, %v874
          %v883 = vadd.f32 %v847, %v875
          %v884 = vadd.f32 %v852, %v876
          %v885 = vadd.f32 %v855, %v877
          %v886 = vadd.f32 %v860, %v878
          %v887 = vadd.f32 %v863, %v879
          %v888 = vadd.f32 %v868, %v880
          %v889 = vadd.f32 %v871, %v881
          %vm890 = vcmask 261120
          %891 = vst.msk [vmem:[#allocation2] sm:$0xff] %vm890, %v882
          %892 = vst.msk [vmem:[#allocation2 + $0x8] sm:$0xff] %vm890, %v883
          %893 = vst.msk [vmem:[#allocation2 + $0x10] sm:$0xff] %vm890, %v884
          %894 = vst.msk [vmem:[#allocation2 + $0x18] sm:$0xff] %vm890, %v885
          %895 = vst.msk [vmem:[#allocation2 + $0x20] sm:$0xff] %vm890, %v886
          %896 = vst.msk [vmem:[#allocation2 + $0x28] sm:$0xff] %vm890, %v887
          %897 = vst.msk [vmem:[#allocation2 + $0x30] sm:$0xff] %vm890, %v888
          %898 = vst.msk [vmem:[#allocation2 + $0x38] sm:$0xff] %vm890, %v889
        $region92: #{transformer_forward.1} parent=87 // pred_fallthru
          _
        %v899 = vld [vmem:[#allocation2] sm:$0xff]
        %v900 = vld [vmem:[#allocation2 + $0x8] sm:$0xff]
        %v901 = vld [vmem:[#allocation2 + $0x10] sm:$0xff]
        %v902 = vld [vmem:[#allocation2 + $0x18] sm:$0xff]
        %v903 = vld [vmem:[#allocation2 + $0x20] sm:$0xff]
        %v904 = vld [vmem:[#allocation2 + $0x28] sm:$0xff]
        %v905 = vld [vmem:[#allocation2 + $0x30] sm:$0xff]
        %v906 = vld [vmem:[#allocation2 + $0x38] sm:$0xff]
        %v907 = vld [vmem:[%s721] sm:$0x1]
        %v909 = vlaneseq
        %v910 = vshrl.u32 %v909, 7
        %v911 = vsub.s32 0, %v910
        %v912 = vrot.slane %v907, %v911
        %v914 = vpack.c.bf16 %v900, %v899
        %v915 = vpack.c.bf16 %v902, %v901
        %v916 = vpack.c.bf16 %v904, %v903
        %v917 = vpack.c.bf16 %v906, %v905
        %v918 = vld [vmem:[%s726] sm:$0xf]
        %v919 = vld [vmem:[%s726 + $0x4] sm:$0xf]
        %v920 = vld [vmem:[%s726 + $0x8] sm:$0xf]
        %v921 = vld [vmem:[%s726 + $0xc] sm:$0xf]
        %v922 = vld [vmem:[%s729] sm:$0x1]
        %v924 = vlaneseq
        %v925 = vshrl.u32 %v924, 7
        %v926 = vsub.s32 0, %v925
        %v927 = vrot.slane %v922, %v926
        %v933 = vunpack.c.l.b16 %v918
        %v934 = vunpack.c.l.b16 %v919
        %v935 = vunpack.c.l.b16 %v920
        %v936 = vunpack.c.l.b16 %v921
        %v937 = vpack.c.b16 %v934, %v933
        %v938 = vpack.c.b16 %v936, %v935
        %vm941 = vcmask 261120
        %v943 = vsel %vm941, %v914, 0
        %v946 = vsel %vm941, %v915, 0
        %v949 = vsel %vm941, %v916, 0
        %v952 = vsel %vm941, %v917, 0
        %954 = vmatprep.subr.bf16.mxu0 0
        %955 = vmatpush1.bf16.msra.mxu0 %v937
        %956 = vmatprep.subr.bf16.mxu0 0
        %957 = vmatpush1.bf16.msra.mxu0 %v938
        %958 = vmatprep.subr.bf16.mxu0 0
        %959 = vmatpush1.bf16.msra.mxu0 0
        %960 = vmatprep.subr.bf16.mxu0 0
        %961 = vmatpush1.bf16.msra.mxu0 0
        %962 = vmatprep.subr.bf16.mxu0 0
        %963 = vmatpush1.bf16.msra.mxu0 0
        %964 = vmatprep.subr.bf16.mxu0 0
        %965 = vmatpush1.bf16.msra.mxu0 0
        %966 = vmatprep.subr.bf16.mxu0 0
        %967 = vmatpush1.bf16.msra.mxu0 0
        %968 = vmatprep.subr.bf16.mxu0 0
        %969 = vmatpush1.bf16.msra.mxu0 0
        %970 = vmatprep.subr.bf16.mxu0 0
        %971 = vmatpush1.bf16.msra.mxu0 0
        %972 = vmatprep.subr.bf16.mxu0 0
        %973 = vmatpush1.bf16.msra.mxu0 0
        %974 = vmatprep.subr.bf16.mxu0 0
        %975 = vmatpush1.bf16.msra.mxu0 0
        %976 = vmatprep.subr.bf16.mxu0 0
        %977 = vmatpush1.bf16.msra.mxu0 0
        %978 = vmatprep.subr.bf16.mxu0 0
        %979 = vmatpush1.bf16.msra.mxu0 0
        %980 = vmatprep.subr.bf16.mxu0 0
        %981 = vmatpush1.bf16.msra.mxu0 0
        %982 = vmatprep.subr.bf16.mxu0 0
        %983 = vmatpush1.bf16.msra.mxu0 0
        %984 = vmatprep.subr.bf16.mxu0 0
        %985 = vmatpush1.bf16.msra.mxu0 0
        %986 = vmatprep.mubr.bf16.mxu0 0
        %987 = vmatmul.mubr.bf16.gmra.mrb[0].mxu0 %v943
        %v988 = vpop.f32.mrb[0].mxu0
        %v989 = vadd.f32 %v927, %v988
        %v990 = vpop.f32.mrb[0].mxu0
        %v991 = vpop.f32.mrb[0].mxu0
        %v992 = vadd.f32 %v927, %v991
        %v993 = vpop.f32.mrb[0].mxu0
        %994 = vmatprep.mubr.bf16.mxu0 0
        %995 = vmatmul.mubr.bf16.gmra.mrb[0].mxu0 %v946
        %v996 = vpop.f32.mrb[0].mxu0
        %v997 = vadd.f32 %v927, %v996
        %v998 = vpop.f32.mrb[0].mxu0
        %v999 = vpop.f32.mrb[0].mxu0
        %v1000 = vadd.f32 %v927, %v999
        %v1001 = vpop.f32.mrb[0].mxu0
        %1002 = vmatprep.mubr.bf16.mxu0 0
        %1003 = vmatmul.mubr.bf16.gmra.mrb[0].mxu0 %v949
        %v1004 = vpop.f32.mrb[0].mxu0
        %v1005 = vadd.f32 %v927, %v1004
        %v1006 = vpop.f32.mrb[0].mxu0
        %v1007 = vpop.f32.mrb[0].mxu0
        %v1008 = vadd.f32 %v927, %v1007
        %v1009 = vpop.f32.mrb[0].mxu0
        %1010 = vmatprep.mubr.bf16.mxu0 0
        %1011 = vmatmul.mubr.bf16.gmra.mrb[0].mxu0 %v952
        %v1012 = vpop.f32.mrb[0].mxu0
        %v1013 = vadd.f32 %v927, %v1012
        %v1014 = vpop.f32.mrb[0].mxu0
        %v1015 = vpop.f32.mrb[0].mxu0
        %v1016 = vadd.f32 %v927, %v1015
        %v1017 = vpop.f32.mrb[0].mxu0
        %1018 = vdwg.mxu0
        %1027 = vrot.lane.b32.xlu0 %v989, 96
        %v1028 = vpop.permute.xlu0 %1027
        %1029 = vrot.lane.b32.xlu0 %v992, 96
        %v1030 = vpop.permute.xlu0 %1029
        %1031 = vrot.lane.b32.xlu0 %v997, 96
        %v1032 = vpop.permute.xlu0 %1031
        %1033 = vrot.lane.b32.xlu0 %v1000, 96
        %v1034 = vpop.permute.xlu0 %1033
        %1035 = vrot.lane.b32.xlu0 %v1005, 96
        %v1036 = vpop.permute.xlu0 %1035
        %1037 = vrot.lane.b32.xlu0 %v1008, 96
        %v1038 = vpop.permute.xlu0 %1037
        %1039 = vrot.lane.b32.xlu0 %v1013, 96
        %v1040 = vpop.permute.xlu0 %1039
        %1041 = vrot.lane.b32.xlu0 %v1016, 96
        %v1042 = vpop.permute.xlu0 %1041
        %vm1043 = vcmask 64512
        %v1044 = vsel %vm1043, %v989, 0
        %v1046 = vsel %vm1043, %v992, 0
        %v1048 = vsel %vm1043, %v997, 0
        %v1050 = vsel %vm1043, %v1000, 0
        %v1052 = vsel %vm1043, %v1005, 0
        %v1054 = vsel %vm1043, %v1008, 0
        %v1056 = vsel %vm1043, %v1013, 0
        %v1058 = vsel %vm1043, %v1016, 0
        %v1060 = vsel %vm1043, %v1028, 0
        %v1062 = vsel %vm1043, %v1030, 0
        %v1064 = vsel %vm1043, %v1032, 0
        %v1066 = vsel %vm1043, %v1034, 0
        %v1068 = vsel %vm1043, %v1036, 0
        %v1070 = vsel %vm1043, %v1038, 0
        %v1072 = vsel %vm1043, %v1040, 0
        %v1074 = vsel %vm1043, %v1042, 0
        %1076 = vmatprep.subr.mxu0 0.0
        %1077 = vmatpush1.xpose.msra.mxu0 %v1060
        %1078 = vmatprep.subr.mxu0 0.0
        %1079 = vmatpush1.xpose.msra.mxu0 %v1062
        %1080 = vmatprep.subr.mxu0 0.0
        %1081 = vmatpush1.xpose.msra.mxu0 %v1064
        %1082 = vmatprep.subr.mxu0 0.0
        %1083 = vmatpush1.xpose.msra.mxu0 %v1066
        %1084 = vmatprep.subr.mxu0 0.0
        %1085 = vmatpush1.xpose.msra.mxu0 %v1068
        %1086 = vmatprep.subr.mxu0 0.0
        %1087 = vmatpush1.xpose.msra.mxu0 %v1070
        %1088 = vmatprep.subr.mxu0 0.0
        %1089 = vmatpush1.xpose.msra.mxu0 %v1072
        %1090 = vmatprep.subr.mxu0 0.0
        %1091 = vmatpush1.xpose.msra.mxu0 %v1074
        %1092 = vmatprep.subr.mxu0 0.0
        %1093 = vmatpush1.xpose.msra.mxu0 0.0
        %1094 = vmatprep.subr.mxu0 0.0
        %1095 = vmatpush1.xpose.msra.mxu0 0.0
        %1096 = vmatprep.subr.mxu0 0.0
        %1097 = vmatpush1.xpose.msra.mxu0 0.0
        %1098 = vmatprep.subr.mxu0 0.0
        %1099 = vmatpush1.xpose.msra.mxu0 0.0
        %1100 = vmatprep.subr.mxu0 0.0
        %1101 = vmatpush1.xpose.msra.mxu0 0.0
        %1102 = vmatprep.subr.mxu0 0.0
        %1103 = vmatpush1.xpose.msra.mxu0 0.0
        %1104 = vmatprep.subr.mxu0 0.0
        %1105 = vmatpush1.xpose.msra.mxu0 0.0
        %1106 = vmatprep.subr.mxu0 0.0
        %1107 = vmatpush1.xpose.msra.mxu0 0.0
        %1108 = vmatprep.subr.mxu0 0.0
        %1109 = vmatpush1.xpose.msra.mxu0 0.0
        %1110 = vmatprep.subr.mxu0 0.0
        %1111 = vmatpush1.xpose.msra.mxu0 0.0
        %1112 = vmatprep.subr.mxu0 0.0
        %1113 = vmatpush1.xpose.msra.mxu0 0.0
        %1114 = vmatprep.subr.mxu0 0.0
        %1115 = vmatpush1.xpose.msra.mxu0 0.0
        %1116 = vmatprep.subr.mxu0 0.0
        %1117 = vmatpush1.xpose.msra.mxu0 0.0
        %1118 = vmatprep.subr.mxu0 0.0
        %1119 = vmatpush1.xpose.msra.mxu0 0.0
        %1120 = vmatprep.subr.mxu0 0.0
        %1121 = vmatpush1.xpose.msra.mxu0 0.0
        %1122 = vmatprep.subr.mxu0 0.0
        %1123 = vmatpush1.xpose.msra.mxu0 0.0
        %1124 = vmatprep.subr.mxu0 0.0
        %1125 = vmatpush1.xpose.msra.mxu0 0.0
        %1126 = vmatprep.subr.mxu0 0.0
        %1127 = vmatpush1.xpose.msra.mxu0 0.0
        %1128 = vmatprep.subr.mxu0 0.0
        %1129 = vmatpush1.xpose.msra.mxu0 0.0
        %1130 = vmatprep.subr.mxu0 0.0
        %1131 = vmatpush1.xpose.msra.mxu0 0.0
        %1132 = vmatprep.subr.mxu0 0.0
        %1133 = vmatpush1.xpose.msra.mxu0 0.0
        %1134 = vmatprep.subr.mxu0 0.0
        %1135 = vmatpush1.xpose.msra.mxu0 0.0
        %1136 = vmatprep.subr.mxu0 0.0
        %1137 = vmatpush1.xpose.msra.mxu0 0.0
        %1138 = vmatprep.subr.mxu0 0.0
        %1139 = vmatpush1.xpose.msra.mxu0 0.0
        %1140 = vmatprep.mubr.f32.mxu0 0.0
        %1141 = vmatmul.mubr.f32.gmra.mrb[0].mxu0 %v1044
        %v1142 = vpop.f32.mrb[0].mxu0
        %v1143 = vadd.f32 %v912, %v1142
        %v1144 = vpop.f32.mrb[0].mxu0
        %1145 = vmatprep.mubr.f32.mxu0 0.0
        %1146 = vmatmul.mubr.f32.gmra.mrb[0].mxu0 %v1046
        %v1147 = vpop.f32.mrb[0].mxu0
        %v1148 = vadd.f32 %v912, %v1147
        %v1149 = vpop.f32.mrb[0].mxu0
        %1150 = vmatprep.mubr.f32.mxu0 0.0
        %1151 = vmatmul.mubr.f32.gmra.mrb[0].mxu0 %v1048
        %v1152 = vpop.f32.mrb[0].mxu0
        %v1153 = vadd.f32 %v912, %v1152
        %v1154 = vpop.f32.mrb[0].mxu0
        %1155 = vmatprep.mubr.f32.mxu0 0.0
        %1156 = vmatmul.mubr.f32.gmra.mrb[0].mxu0 %v1050
        %v1157 = vpop.f32.mrb[0].mxu0
        %v1158 = vadd.f32 %v912, %v1157
        %v1159 = vpop.f32.mrb[0].mxu0
        %1160 = vmatprep.mubr.f32.mxu0 0.0
        %1161 = vmatmul.mubr.f32.gmra.mrb[0].mxu0 %v1052
        %v1162 = vpop.f32.mrb[0].mxu0
        %v1163 = vadd.f32 %v912, %v1162
        %v1164 = vpop.f32.mrb[0].mxu0
        %1165 = vmatprep.mubr.f32.mxu0 0.0
        %1166 = vmatmul.mubr.f32.gmra.mrb[0].mxu0 %v1054
        %v1167 = vpop.f32.mrb[0].mxu0
        %v1168 = vadd.f32 %v912, %v1167
        %v1169 = vpop.f32.mrb[0].mxu0
        %1170 = vmatprep.mubr.f32.mxu0 0.0
        %1171 = vmatmul.mubr.f32.gmra.mrb[0].mxu0 %v1056
        %v1172 = vpop.f32.mrb[0].mxu0
        %v1173 = vadd.f32 %v912, %v1172
        %v1174 = vpop.f32.mrb[0].mxu0
        %1175 = vmatprep.mubr.f32.mxu0 0.0
        %1176 = vmatmul.mubr.f32.gmra.mrb[0].mxu0 %v1058
        %v1177 = vpop.f32.mrb[0].mxu0
        %v1178 = vadd.f32 %v912, %v1177
        %v1179 = vpop.f32.mrb[0].mxu0
        %1180 = vdwg.mxu0
        %vm1181 = vcmask 523264
        %v1182 = vsel %vm1181, %v1143, -inf
        %1183 = vmax.xlane.f32.xlu0 %v1182
        %v1184 = vpop.xlane.xlu0 %1183
        %v1185 = vsel %vm1181, %v1148, -inf
        %1186 = vmax.xlane.f32.xlu0 %v1185
        %v1187 = vpop.xlane.xlu0 %1186
        %v1188 = vsel %vm1181, %v1153, -inf
        %1189 = vmax.xlane.f32.xlu0 %v1188
        %v1190 = vpop.xlane.xlu0 %1189
        %v1191 = vsel %vm1181, %v1158, -inf
        %1192 = vmax.xlane.f32.xlu0 %v1191
        %v1193 = vpop.xlane.xlu0 %1192
        %v1194 = vsel %vm1181, %v1163, -inf
        %1195 = vmax.xlane.f32.xlu0 %v1194
        %v1196 = vpop.xlane.xlu0 %1195
        %v1197 = vsel %vm1181, %v1168, -inf
        %1198 = vmax.xlane.f32.xlu0 %v1197
        %v1199 = vpop.xlane.xlu0 %1198
        %v1200 = vsel %vm1181, %v1173, -inf
        %1201 = vmax.xlane.f32.xlu0 %v1200
        %v1202 = vpop.xlane.xlu0 %1201
        %v1203 = vsel %vm1181, %v1178, -inf
        %1204 = vmax.xlane.f32.xlu0 %v1203
        %v1205 = vpop.xlane.xlu0 %1204
        %v1206 = vsub.f32 %v1143, %v1184
        %v1207 = vsub.f32 %v1148, %v1187
        %v1208 = vsub.f32 %v1153, %v1190
        %v1209 = vsub.f32 %v1158, %v1193
        %v1210 = vsub.f32 %v1163, %v1196
        %v1211 = vsub.f32 %v1168, %v1199
        %v1212 = vsub.f32 %v1173, %v1202
        %v1213 = vsub.f32 %v1178, %v1205
        %v1214 = vmul.f32 %v1206, 1.442695
        %v1215 = vpow.pop %v1214
        %v1216 = vmul.f32 %v1207, 1.442695
        %v1217 = vpow.pop %v1216
        %v1218 = vmul.f32 %v1208, 1.442695
        %v1219 = vpow.pop %v1218
        %v1220 = vmul.f32 %v1209, 1.442695
        %v1221 = vpow.pop %v1220
        %v1222 = vmul.f32 %v1210, 1.442695
        %v1223 = vpow.pop %v1222
        %v1224 = vmul.f32 %v1211, 1.442695
        %v1225 = vpow.pop %v1224
        %v1226 = vmul.f32 %v1212, 1.442695
        %v1227 = vpow.pop %v1226
        %v1228 = vmul.f32 %v1213, 1.442695
        %v1229 = vpow.pop %v1228
        %v1230 = vsel %vm1181, %v1215, 0.0
        %1231 = vadd.xlane.f32.xlu0 %v1230
        %v1232 = vpop.xlane.xlu0 %1231
        %v1233 = vsel %vm1181, %v1217, 0.0
        %1234 = vadd.xlane.f32.xlu0 %v1233
        %v1235 = vpop.xlane.xlu0 %1234
        %v1236 = vsel %vm1181, %v1219, 0.0
        %1237 = vadd.xlane.f32.xlu0 %v1236
        %v1238 = vpop.xlane.xlu0 %1237
        %v1239 = vsel %vm1181, %v1221, 0.0
        %1240 = vadd.xlane.f32.xlu0 %v1239
        %v1241 = vpop.xlane.xlu0 %1240
        %v1242 = vsel %vm1181, %v1223, 0.0
        %1243 = vadd.xlane.f32.xlu0 %v1242
        %v1244 = vpop.xlane.xlu0 %1243
        %v1245 = vsel %vm1181, %v1225, 0.0
        %1246 = vadd.xlane.f32.xlu0 %v1245
        %v1247 = vpop.xlane.xlu0 %1246
        %v1248 = vsel %vm1181, %v1227, 0.0
        %1249 = vadd.xlane.f32.xlu0 %v1248
        %v1250 = vpop.xlane.xlu0 %1249
        %v1251 = vsel %vm1181, %v1229, 0.0
        %1252 = vadd.xlane.f32.xlu0 %v1251
        %v1253 = vpop.xlane.xlu0 %1252
        %v1254 = vrcp.pop %v1232
        %v1255 = vrcp.pop %v1235
        %v1256 = vrcp.pop %v1238
        %v1257 = vrcp.pop %v1241
        %v1258 = vrcp.pop %v1244
        %v1259 = vrcp.pop %v1247
        %v1260 = vrcp.pop %v1250
        %v1261 = vrcp.pop %v1253
        %v1262 = vmul.f32 %v1215, %v1254
        %v1263 = vmul.f32 %v1217, %v1255
        %v1264 = vmul.f32 %v1219, %v1256
        %v1265 = vmul.f32 %v1221, %v1257
        %v1266 = vmul.f32 %v1223, %v1258
        %v1267 = vmul.f32 %v1225, %v1259
        %v1268 = vmul.f32 %v1227, %v1260
        %v1269 = vmul.f32 %v1229, %v1261
        %1270 = vrot.lane.b32.xlu0 %v989, 64
        %v1271 = vpop.permute.xlu0 %1270
        %1272 = vrot.lane.b32.xlu0 %v992, 64
        %v1273 = vpop.permute.xlu0 %1272
        %1274 = vrot.lane.b32.xlu0 %v997, 64
        %v1275 = vpop.permute.xlu0 %1274
        %1276 = vrot.lane.b32.xlu0 %v1000, 64
        %v1277 = vpop.permute.xlu0 %1276
        %1278 = vrot.lane.b32.xlu0 %v1005, 64
        %v1279 = vpop.permute.xlu0 %1278
        %1280 = vrot.lane.b32.xlu0 %v1008, 64
        %v1281 = vpop.permute.xlu0 %1280
        %1282 = vrot.lane.b32.xlu0 %v1013, 64
        %v1283 = vpop.permute.xlu0 %1282
        %1284 = vrot.lane.b32.xlu0 %v1016, 64
        %v1285 = vpop.permute.xlu0 %1284
        %v1295 = vsel %vm1181, %v1262, 0
        %v1298 = vsel %vm1181, %v1263, 0
        %v1301 = vsel %vm1181, %v1264, 0
        %v1304 = vsel %vm1181, %v1265, 0
        %v1307 = vsel %vm1181, %v1266, 0
        %v1310 = vsel %vm1181, %v1267, 0
        %v1313 = vsel %vm1181, %v1268, 0
        %v1316 = vsel %vm1181, %v1269, 0
        %1318 = vmatprep.subr.mxu0 0.0
        %1319 = vmatpush1.msra.mxu0 %v1271
        %1320 = vmatprep.subr.mxu0 0.0
        %1321 = vmatpush1.msra.mxu0 %v1273
        %1322 = vmatprep.subr.mxu0 0.0
        %1323 = vmatpush1.msra.mxu0 %v1275
        %1324 = vmatprep.subr.mxu0 0.0
        %1325 = vmatpush1.msra.mxu0 %v1277
        %1326 = vmatprep.subr.mxu0 0.0
        %1327 = vmatpush1.msra.mxu0 %v1279
        %1328 = vmatprep.subr.mxu0 0.0
        %1329 = vmatpush1.msra.mxu0 %v1281
        %1330 = vmatprep.subr.mxu0 0.0
        %1331 = vmatpush1.msra.mxu0 %v1283
        %1332 = vmatprep.subr.mxu0 0.0
        %1333 = vmatpush1.msra.mxu0 %v1285
        %1334 = vmatprep.subr.mxu0 0.0
        %1335 = vmatpush1.msra.mxu0 0.0
        %1336 = vmatprep.subr.mxu0 0.0
        %1337 = vmatpush1.msra.mxu0 0.0
        %1338 = vmatprep.subr.mxu0 0.0
        %1339 = vmatpush1.msra.mxu0 0.0
        %1340 = vmatprep.subr.mxu0 0.0
        %1341 = vmatpush1.msra.mxu0 0.0
        %1342 = vmatprep.subr.mxu0 0.0
        %1343 = vmatpush1.msra.mxu0 0.0
        %1344 = vmatprep.subr.mxu0 0.0
        %1345 = vmatpush1.msra.mxu0 0.0
        %1346 = vmatprep.subr.mxu0 0.0
        %1347 = vmatpush1.msra.mxu0 0.0
        %1348 = vmatprep.subr.mxu0 0.0
        %1349 = vmatpush1.msra.mxu0 0.0
        %1350 = vmatprep.subr.mxu0 0.0
        %1351 = vmatpush1.msra.mxu0 0.0
        %1352 = vmatprep.subr.mxu0 0.0
        %1353 = vmatpush1.msra.mxu0 0.0
        %1354 = vmatprep.subr.mxu0 0.0
        %1355 = vmatpush1.msra.mxu0 0.0
        %1356 = vmatprep.subr.mxu0 0.0
        %1357 = vmatpush1.msra.mxu0 0.0
        %1358 = vmatprep.subr.mxu0 0.0
        %1359 = vmatpush1.msra.mxu0 0.0
        %1360 = vmatprep.subr.mxu0 0.0
        %1361 = vmatpush1.msra.mxu0 0.0
        %1362 = vmatprep.subr.mxu0 0.0
        %1363 = vmatpush1.msra.mxu0 0.0
        %1364 = vmatprep.subr.mxu0 0.0
        %1365 = vmatpush1.msra.mxu0 0.0
        %1366 = vmatprep.subr.mxu0 0.0
        %1367 = vmatpush1.msra.mxu0 0.0
        %1368 = vmatprep.subr.mxu0 0.0
        %1369 = vmatpush1.msra.mxu0 0.0
        %1370 = vmatprep.subr.mxu0 0.0
        %1371 = vmatpush1.msra.mxu0 0.0
        %1372 = vmatprep.subr.mxu0 0.0
        %1373 = vmatpush1.msra.mxu0 0.0
        %1374 = vmatprep.subr.mxu0 0.0
        %1375 = vmatpush1.msra.mxu0 0.0
        %1376 = vmatprep.subr.mxu0 0.0
        %1377 = vmatpush1.msra.mxu0 0.0
        %1378 = vmatprep.subr.mxu0 0.0
        %1379 = vmatpush1.msra.mxu0 0.0
        %1380 = vmatprep.subr.mxu0 0.0
        %1381 = vmatpush1.msra.mxu0 0.0
        %1382 = vmatprep.mubr.f32.mxu0 0.0
        %1383 = vmatmul.mubr.f32.gmra.mrb[0].mxu0 %v1295
        %v1384 = vpop.f32.mrb[0].mxu0
        %v1385 = vadd.f32 0.0, %v1384
        %v1386 = vpop.f32.mrb[0].mxu0
        %1387 = vmatprep.mubr.f32.mxu0 0.0
        %1388 = vmatmul.mubr.f32.gmra.mrb[0].mxu0 %v1298
        %v1389 = vpop.f32.mrb[0].mxu0
        %v1390 = vadd.f32 0.0, %v1389
        %v1391 = vpop.f32.mrb[0].mxu0
        %1392 = vmatprep.mubr.f32.mxu0 0.0
        %1393 = vmatmul.mubr.f32.gmra.mrb[0].mxu0 %v1301
        %v1394 = vpop.f32.mrb[0].mxu0
        %v1395 = vadd.f32 0.0, %v1394
        %v1396 = vpop.f32.mrb[0].mxu0
        %1397 = vmatprep.mubr.f32.mxu0 0.0
        %1398 = vmatmul.mubr.f32.gmra.mrb[0].mxu0 %v1304
        %v1399 = vpop.f32.mrb[0].mxu0
        %v1400 = vadd.f32 0.0, %v1399
        %v1401 = vpop.f32.mrb[0].mxu0
        %1402 = vmatprep.mubr.f32.mxu0 0.0
        %1403 = vmatmul.mubr.f32.gmra.mrb[0].mxu0 %v1307
        %v1404 = vpop.f32.mrb[0].mxu0
        %v1405 = vadd.f32 0.0, %v1404
        %v1406 = vpop.f32.mrb[0].mxu0
        %1407 = vmatprep.mubr.f32.mxu0 0.0
        %1408 = vmatmul.mubr.f32.gmra.mrb[0].mxu0 %v1310
        %v1409 = vpop.f32.mrb[0].mxu0
        %v1410 = vadd.f32 0.0, %v1409
        %v1411 = vpop.f32.mrb[0].mxu0
        %1412 = vmatprep.mubr.f32.mxu0 0.0
        %1413 = vmatmul.mubr.f32.gmra.mrb[0].mxu0 %v1313
        %v1414 = vpop.f32.mrb[0].mxu0
        %v1415 = vadd.f32 0.0, %v1414
        %v1416 = vpop.f32.mrb[0].mxu0
        %1417 = vmatprep.mubr.f32.mxu0 0.0
        %1418 = vmatmul.mubr.f32.gmra.mrb[0].mxu0 %v1316
        %v1419 = vpop.f32.mrb[0].mxu0
        %v1420 = vadd.f32 0.0, %v1419
        %v1421 = vpop.f32.mrb[0].mxu0
        %1422 = vdwg.mxu0
        %1423 = vrot.lane.b32.xlu0 %v989, 120
        %v1424 = vpop.permute.xlu0 %1423
        %1425 = vrot.lane.b32.xlu0 %v992, 120
        %v1426 = vpop.permute.xlu0 %1425
        %1427 = vrot.lane.b32.xlu0 %v997, 120
        %v1428 = vpop.permute.xlu0 %1427
        %1429 = vrot.lane.b32.xlu0 %v1000, 120
        %v1430 = vpop.permute.xlu0 %1429
        %1431 = vrot.lane.b32.xlu0 %v1005, 120
        %v1432 = vpop.permute.xlu0 %1431
        %1433 = vrot.lane.b32.xlu0 %v1008, 120
        %v1434 = vpop.permute.xlu0 %1433
        %1435 = vrot.lane.b32.xlu0 %v1013, 120
        %v1436 = vpop.permute.xlu0 %1435
        %1437 = vrot.lane.b32.xlu0 %v1016, 120
        %v1438 = vpop.permute.xlu0 %1437
        %1439 = vrot.lane.b32.xlu0 %v989, 88
        %v1440 = vpop.permute.xlu0 %1439
        %1441 = vrot.lane.b32.xlu0 %v992, 88
        %v1442 = vpop.permute.xlu0 %1441
        %1443 = vrot.lane.b32.xlu0 %v997, 88
        %v1444 = vpop.permute.xlu0 %1443
        %1445 = vrot.lane.b32.xlu0 %v1000, 88
        %v1446 = vpop.permute.xlu0 %1445
        %1447 = vrot.lane.b32.xlu0 %v1005, 88
        %v1448 = vpop.permute.xlu0 %1447
        %1449 = vrot.lane.b32.xlu0 %v1008, 88
        %v1450 = vpop.permute.xlu0 %1449
        %1451 = vrot.lane.b32.xlu0 %v1013, 88
        %v1452 = vpop.permute.xlu0 %1451
        %1453 = vrot.lane.b32.xlu0 %v1016, 88
        %v1454 = vpop.permute.xlu0 %1453
        %v1455 = vsel %vm1043, %v1424, 0
        %v1457 = vsel %vm1043, %v1426, 0
        %v1459 = vsel %vm1043, %v1428, 0
        %v1461 = vsel %vm1043, %v1430, 0
        %v1463 = vsel %vm1043, %v1432, 0
        %v1465 = vsel %vm1043, %v1434, 0
        %v1467 = vsel %vm1043, %v1436, 0
        %v1469 = vsel %vm1043, %v1438, 0
        %v1471 = vsel %vm1043, %v1440, 0
        %v1473 = vsel %vm1043, %v1442, 0
        %v1475 = vsel %vm1043, %v1444, 0
        %v1477 = vsel %vm1043, %v1446, 0
        %v1479 = vsel %vm1043, %v1448, 0
        %v1481 = vsel %vm1043, %v1450, 0
        %v1483 = vsel %vm1043, %v1452, 0
        %v1485 = vsel %vm1043, %v1454, 0
        %1487 = vmatprep.subr.mxu0 0.0
        %1488 = vmatpush1.xpose.msra.mxu0 %v1471
        %1489 = vmatprep.subr.mxu0 0.0
        %1490 = vmatpush1.xpose.msra.mxu0 %v1473
        %1491 = vmatprep.subr.mxu0 0.0
        %1492 = vmatpush1.xpose.msra.mxu0 %v1475
        %1493 = vmatprep.subr.mxu0 0.0
        %1494 = vmatpush1.xpose.msra.mxu0 %v1477
        %1495 = vmatprep.subr.mxu0 0.0
        %1496 = vmatpush1.xpose.msra.mxu0 %v1479
        %1497 = vmatprep.subr.mxu0 0.0
        %1498 = vmatpush1.xpose.msra.mxu0 %v1481
        %1499 = vmatprep.subr.mxu0 0.0
        %1500 = vmatpush1.xpose.msra.mxu0 %v1483
        %1501 = vmatprep.subr.mxu0 0.0
        %1502 = vmatpush1.xpose.msra.mxu0 %v1485
        %1503 = vmatprep.subr.mxu0 0.0
        %1504 = vmatpush1.xpose.msra.mxu0 0.0
        %1505 = vmatprep.subr.mxu0 0.0
        %1506 = vmatpush1.xpose.msra.mxu0 0.0
        %1507 = vmatprep.subr.mxu0 0.0
        %1508 = vmatpush1.xpose.msra.mxu0 0.0
        %1509 = vmatprep.subr.mxu0 0.0
        %1510 = vmatpush1.xpose.msra.mxu0 0.0
        %1511 = vmatprep.subr.mxu0 0.0
        %1512 = vmatpush1.xpose.msra.mxu0 0.0
        %1513 = vmatprep.subr.mxu0 0.0
        %1514 = vmatpush1.xpose.msra.mxu0 0.0
        %1515 = vmatprep.subr.mxu0 0.0
        %1516 = vmatpush1.xpose.msra.mxu0 0.0
        %1517 = vmatprep.subr.mxu0 0.0
        %1518 = vmatpush1.xpose.msra.mxu0 0.0
        %1519 = vmatprep.subr.mxu0 0.0
        %1520 = vmatpush1.xpose.msra.mxu0 0.0
        %1521 = vmatprep.subr.mxu0 0.0
        %1522 = vmatpush1.xpose.msra.mxu0 0.0
        %1523 = vmatprep.subr.mxu0 0.0
        %1524 = vmatpush1.xpose.msra.mxu0 0.0
        %1525 = vmatprep.subr.mxu0 0.0
        %1526 = vmatpush1.xpose.msra.mxu0 0.0
        %1527 = vmatprep.subr.mxu0 0.0
        %1528 = vmatpush1.xpose.msra.mxu0 0.0
        %1529 = vmatprep.subr.mxu0 0.0
        %1530 = vmatpush1.xpose.msra.mxu0 0.0
        %1531 = vmatprep.subr.mxu0 0.0
        %1532 = vmatpush1.xpose.msra.mxu0 0.0
        %1533 = vmatprep.subr.mxu0 0.0
        %1534 = vmatpush1.xpose.msra.mxu0 0.0
        %1535 = vmatprep.subr.mxu0 0.0
        %1536 = vmatpush1.xpose.msra.mxu0 0.0
        %1537 = vmatprep.subr.mxu0 0.0
        %1538 = vmatpush1.xpose.msra.mxu0 0.0
        %1539 = vmatprep.subr.mxu0 0.0
        %1540 = vmatpush1.xpose.msra.mxu0 0.0
        %1541 = vmatprep.subr.mxu0 0.0
        %1542 = vmatpush1.xpose.msra.mxu0 0.0
        %1543 = vmatprep.subr.mxu0 0.0
        %1544 = vmatpush1.xpose.msra.mxu0 0.0
        %1545 = vmatprep.subr.mxu0 0.0
        %1546 = vmatpush1.xpose.msra.mxu0 0.0
        %1547 = vmatprep.subr.mxu0 0.0
        %1548 = vmatpush1.xpose.msra.mxu0 0.0
        %1549 = vmatprep.subr.mxu0 0.0
        %1550 = vmatpush1.xpose.msra.mxu0 0.0
        %1551 = vmatprep.mubr.f32.mxu0 0.0
        %1552 = vmatmul.mubr.f32.gmra.mrb[0].mxu0 %v1455
        %v1553 = vpop.f32.mrb[0].mxu0
        %v1554 = vadd.f32 %v912, %v1553
        %v1555 = vpop.f32.mrb[0].mxu0
        %1556 = vmatprep.mubr.f32.mxu0 0.0
        %1557 = vmatmul.mubr.f32.gmra.mrb[0].mxu0 %v1457
        %v1558 = vpop.f32.mrb[0].mxu0
        %v1559 = vadd.f32 %v912, %v1558
        %v1560 = vpop.f32.mrb[0].mxu0
        %1561 = vmatprep.mubr.f32.mxu0 0.0
        %1562 = vmatmul.mubr.f32.gmra.mrb[0].mxu0 %v1459
        %v1563 = vpop.f32.mrb[0].mxu0
        %v1564 = vadd.f32 %v912, %v1563
        %v1565 = vpop.f32.mrb[0].mxu0
        %1566 = vmatprep.mubr.f32.mxu0 0.0
        %1567 = vmatmul.mubr.f32.gmra.mrb[0].mxu0 %v1461
        %v1568 = vpop.f32.mrb[0].mxu0
        %v1569 = vadd.f32 %v912, %v1568
        %v1570 = vpop.f32.mrb[0].mxu0
        %1571 = vmatprep.mubr.f32.mxu0 0.0
        %1572 = vmatmul.mubr.f32.gmra.mrb[0].mxu0 %v1463
        %v1573 = vpop.f32.mrb[0].mxu0
        %v1574 = vadd.f32 %v912, %v1573
        %v1575 = vpop.f32.mrb[0].mxu0
        %1576 = vmatprep.mubr.f32.mxu0 0.0
        %1577 = vmatmul.mubr.f32.gmra.mrb[0].mxu0 %v1465
        %v1578 = vpop.f32.mrb[0].mxu0
        %v1579 = vadd.f32 %v912, %v1578
        %v1580 = vpop.f32.mrb[0].mxu0
        %1581 = vmatprep.mubr.f32.mxu0 0.0
        %1582 = vmatmul.mubr.f32.gmra.mrb[0].mxu0 %v1467
        %v1583 = vpop.f32.mrb[0].mxu0
        %v1584 = vadd.f32 %v912, %v1583
        %v1585 = vpop.f32.mrb[0].mxu0
        %1586 = vmatprep.mubr.f32.mxu0 0.0
        %1587 = vmatmul.mubr.f32.gmra.mrb[0].mxu0 %v1469
        %v1588 = vpop.f32.mrb[0].mxu0
        %v1589 = vadd.f32 %v912, %v1588
        %v1590 = vpop.f32.mrb[0].mxu0
        %1591 = vdwg.mxu0
        %v1592 = vsel %vm1181, %v1554, -inf
        %1593 = vmax.xlane.f32.xlu0 %v1592
        %v1594 = vpop.xlane.xlu0 %1593
        %v1595 = vsel %vm1181, %v1559, -inf
        %1596 = vmax.xlane.f32.xlu0 %v1595
        %v1597 = vpop.xlane.xlu0 %1596
        %v1598 = vsel %vm1181, %v1564, -inf
        %1599 = vmax.xlane.f32.xlu0 %v1598
        %v1600 = vpop.xlane.xlu0 %1599
        %v1601 = vsel %vm1181, %v1569, -inf
        %1602 = vmax.xlane.f32.xlu0 %v1601
        %v1603 = vpop.xlane.xlu0 %1602
        %v1604 = vsel %vm1181, %v1574, -inf
        %1605 = vmax.xlane.f32.xlu0 %v1604
        %v1606 = vpop.xlane.xlu0 %1605
        %v1607 = vsel %vm1181, %v1579, -inf
        %1608 = vmax.xlane.f32.xlu0 %v1607
        %v1609 = vpop.xlane.xlu0 %1608
        %v1610 = vsel %vm1181, %v1584, -inf
        %1611 = vmax.xlane.f32.xlu0 %v1610
        %v1612 = vpop.xlane.xlu0 %1611
        %v1613 = vsel %vm1181, %v1589, -inf
        %1614 = vmax.xlane.f32.xlu0 %v1613
        %v1615 = vpop.xlane.xlu0 %1614
        %v1616 = vsub.f32 %v1554, %v1594
        %v1617 = vsub.f32 %v1559, %v1597
        %v1618 = vsub.f32 %v1564, %v1600
        %v1619 = vsub.f32 %v1569, %v1603
        %v1620 = vsub.f32 %v1574, %v1606
        %v1621 = vsub.f32 %v1579, %v1609
        %v1622 = vsub.f32 %v1584, %v1612
        %v1623 = vsub.f32 %v1589, %v1615
        %v1624 = vmul.f32 %v1616, 1.442695
        %v1625 = vpow.pop %v1624
        %v1626 = vmul.f32 %v1617, 1.442695
        %v1627 = vpow.pop %v1626
        %v1628 = vmul.f32 %v1618, 1.442695
        %v1629 = vpow.pop %v1628
        %v1630 = vmul.f32 %v1619, 1.442695
        %v1631 = vpow.pop %v1630
        %v1632 = vmul.f32 %v1620, 1.442695
        %v1633 = vpow.pop %v1632
        %v1634 = vmul.f32 %v1621, 1.442695
        %v1635 = vpow.pop %v1634
        %v1636 = vmul.f32 %v1622, 1.442695
        %v1637 = vpow.pop %v1636
        %v1638 = vmul.f32 %v1623, 1.442695
        %v1639 = vpow.pop %v1638
        %v1640 = vsel %vm1181, %v1625, 0.0
        %1641 = vadd.xlane.f32.xlu0 %v1640
        %v1642 = vpop.xlane.xlu0 %1641
        %v1643 = vsel %vm1181, %v1627, 0.0
        %1644 = vadd.xlane.f32.xlu0 %v1643
        %v1645 = vpop.xlane.xlu0 %1644
        %v1646 = vsel %vm1181, %v1629, 0.0
        %1647 = vadd.xlane.f32.xlu0 %v1646
        %v1648 = vpop.xlane.xlu0 %1647
        %v1649 = vsel %vm1181, %v1631, 0.0
        %1650 = vadd.xlane.f32.xlu0 %v1649
        %v1651 = vpop.xlane.xlu0 %1650
        %v1652 = vsel %vm1181, %v1633, 0.0
        %1653 = vadd.xlane.f32.xlu0 %v1652
        %v1654 = vpop.xlane.xlu0 %1653
        %v1655 = vsel %vm1181, %v1635, 0.0
        %1656 = vadd.xlane.f32.xlu0 %v1655
        %v1657 = vpop.xlane.xlu0 %1656
        %v1658 = vsel %vm1181, %v1637, 0.0
        %1659 = vadd.xlane.f32.xlu0 %v1658
        %v1660 = vpop.xlane.xlu0 %1659
        %v1661 = vsel %vm1181, %v1639, 0.0
        %1662 = vadd.xlane.f32.xlu0 %v1661
        %v1663 = vpop.xlane.xlu0 %1662
        %v1664 = vrcp.pop %v1642
        %v1665 = vrcp.pop %v1645
        %v1666 = vrcp.pop %v1648
        %v1667 = vrcp.pop %v1651
        %v1668 = vrcp.pop %v1654
        %v1669 = vrcp.pop %v1657
        %v1670 = vrcp.pop %v1660
        %v1671 = vrcp.pop %v1663
        %v1672 = vmul.f32 %v1625, %v1664
        %v1673 = vmul.f32 %v1627, %v1665
        %v1674 = vmul.f32 %v1629, %v1666
        %v1675 = vmul.f32 %v1631, %v1667
        %v1676 = vmul.f32 %v1633, %v1668
        %v1677 = vmul.f32 %v1635, %v1669
        %v1678 = vmul.f32 %v1637, %v1670
        %v1679 = vmul.f32 %v1639, %v1671
        %1680 = vrot.lane.b32.xlu0 %v989, 56
        %v1681 = vpop.permute.xlu0 %1680
        %1682 = vrot.lane.b32.xlu0 %v992, 56
        %v1683 = vpop.permute.xlu0 %1682
        %1684 = vrot.lane.b32.xlu0 %v997, 56
        %v1685 = vpop.permute.xlu0 %1684
        %1686 = vrot.lane.b32.xlu0 %v1000, 56
        %v1687 = vpop.permute.xlu0 %1686
        %1688 = vrot.lane.b32.xlu0 %v1005, 56
        %v1689 = vpop.permute.xlu0 %1688
        %1690 = vrot.lane.b32.xlu0 %v1008, 56
        %v1691 = vpop.permute.xlu0 %1690
        %1692 = vrot.lane.b32.xlu0 %v1013, 56
        %v1693 = vpop.permute.xlu0 %1692
        %1694 = vrot.lane.b32.xlu0 %v1016, 56
        %v1695 = vpop.permute.xlu0 %1694
        %v1705 = vsel %vm1181, %v1672, 0
        %v1708 = vsel %vm1181, %v1673, 0
        %v1711 = vsel %vm1181, %v1674, 0
        %v1714 = vsel %vm1181, %v1675, 0
        %v1717 = vsel %vm1181, %v1676, 0
        %v1720 = vsel %vm1181, %v1677, 0
        %v1723 = vsel %vm1181, %v1678, 0
        %v1726 = vsel %vm1181, %v1679, 0
        %1728 = vmatprep.subr.mxu0 0.0
        %1729 = vmatpush1.msra.mxu0 %v1681
        %1730 = vmatprep.subr.mxu0 0.0
        %1731 = vmatpush1.msra.mxu0 %v1683
        %1732 = vmatprep.subr.mxu0 0.0
        %1733 = vmatpush1.msra.mxu0 %v1685
        %1734 = vmatprep.subr.mxu0 0.0
        %1735 = vmatpush1.msra.mxu0 %v1687
        %1736 = vmatprep.subr.mxu0 0.0
        %1737 = vmatpush1.msra.mxu0 %v1689
        %1738 = vmatprep.subr.mxu0 0.0
        %1739 = vmatpush1.msra.mxu0 %v1691
        %1740 = vmatprep.subr.mxu0 0.0
        %1741 = vmatpush1.msra.mxu0 %v1693
        %1742 = vmatprep.subr.mxu0 0.0
        %1743 = vmatpush1.msra.mxu0 %v1695
        %1744 = vmatprep.subr.mxu0 0.0
        %1745 = vmatpush1.msra.mxu0 0.0
        %1746 = vmatprep.subr.mxu0 0.0
        %1747 = vmatpush1.msra.mxu0 0.0
        %1748 = vmatprep.subr.mxu0 0.0
        %1749 = vmatpush1.msra.mxu0 0.0
        %1750 = vmatprep.subr.mxu0 0.0
        %1751 = vmatpush1.msra.mxu0 0.0
        %1752 = vmatprep.subr.mxu0 0.0
        %1753 = vmatpush1.msra.mxu0 0.0
        %1754 = vmatprep.subr.mxu0 0.0
        %1755 = vmatpush1.msra.mxu0 0.0
        %1756 = vmatprep.subr.mxu0 0.0
        %1757 = vmatpush1.msra.mxu0 0.0
        %1758 = vmatprep.subr.mxu0 0.0
        %1759 = vmatpush1.msra.mxu0 0.0
        %1760 = vmatprep.subr.mxu0 0.0
        %1761 = vmatpush1.msra.mxu0 0.0
        %1762 = vmatprep.subr.mxu0 0.0
        %1763 = vmatpush1.msra.mxu0 0.0
        %1764 = vmatprep.subr.mxu0 0.0
        %1765 = vmatpush1.msra.mxu0 0.0
        %1766 = vmatprep.subr.mxu0 0.0
        %1767 = vmatpush1.msra.mxu0 0.0
        %1768 = vmatprep.subr.mxu0 0.0
        %1769 = vmatpush1.msra.mxu0 0.0
        %1770 = vmatprep.subr.mxu0 0.0
        %1771 = vmatpush1.msra.mxu0 0.0
        %1772 = vmatprep.subr.mxu0 0.0
        %1773 = vmatpush1.msra.mxu0 0.0
        %1774 = vmatprep.subr.mxu0 0.0
        %1775 = vmatpush1.msra.mxu0 0.0
        %1776 = vmatprep.subr.mxu0 0.0
        %1777 = vmatpush1.msra.mxu0 0.0
        %1778 = vmatprep.subr.mxu0 0.0
        %1779 = vmatpush1.msra.mxu0 0.0
        %1780 = vmatprep.subr.mxu0 0.0
        %1781 = vmatpush1.msra.mxu0 0.0
        %1782 = vmatprep.subr.mxu0 0.0
        %1783 = vmatpush1.msra.mxu0 0.0
        %1784 = vmatprep.subr.mxu0 0.0
        %1785 = vmatpush1.msra.mxu0 0.0
        %1786 = vmatprep.subr.mxu0 0.0
        %1787 = vmatpush1.msra.mxu0 0.0
        %1788 = vmatprep.subr.mxu0 0.0
        %1789 = vmatpush1.msra.mxu0 0.0
        %1790 = vmatprep.subr.mxu0 0.0
        %1791 = vmatpush1.msra.mxu0 0.0
        %1792 = vmatprep.mubr.f32.mxu0 0.0
        %1793 = vmatmul.mubr.f32.gmra.mrb[0].mxu0 %v1705
        %v1794 = vpop.f32.mrb[0].mxu0
        %v1795 = vadd.f32 0.0, %v1794
        %v1796 = vpop.f32.mrb[0].mxu0
        %1797 = vmatprep.mubr.f32.mxu0 0.0
        %1798 = vmatmul.mubr.f32.gmra.mrb[0].mxu0 %v1708
        %v1799 = vpop.f32.mrb[0].mxu0
        %v1800 = vadd.f32 0.0, %v1799
        %v1801 = vpop.f32.mrb[0].mxu0
        %1802 = vmatprep.mubr.f32.mxu0 0.0
        %1803 = vmatmul.mubr.f32.gmra.mrb[0].mxu0 %v1711
        %v1804 = vpop.f32.mrb[0].mxu0
        %v1805 = vadd.f32 0.0, %v1804
        %v1806 = vpop.f32.mrb[0].mxu0
        %1807 = vmatprep.mubr.f32.mxu0 0.0
        %1808 = vmatmul.mubr.f32.gmra.mrb[0].mxu0 %v1714
        %v1809 = vpop.f32.mrb[0].mxu0
        %v1810 = vadd.f32 0.0, %v1809
        %v1811 = vpop.f32.mrb[0].mxu0
        %1812 = vmatprep.mubr.f32.mxu0 0.0
        %1813 = vmatmul.mubr.f32.gmra.mrb[0].mxu0 %v1717
        %v1814 = vpop.f32.mrb[0].mxu0
        %v1815 = vadd.f32 0.0, %v1814
        %v1816 = vpop.f32.mrb[0].mxu0
        %1817 = vmatprep.mubr.f32.mxu0 0.0
        %1818 = vmatmul.mubr.f32.gmra.mrb[0].mxu0 %v1720
        %v1819 = vpop.f32.mrb[0].mxu0
        %v1820 = vadd.f32 0.0, %v1819
        %v1821 = vpop.f32.mrb[0].mxu0
        %1822 = vmatprep.mubr.f32.mxu0 0.0
        %1823 = vmatmul.mubr.f32.gmra.mrb[0].mxu0 %v1723
        %v1824 = vpop.f32.mrb[0].mxu0
        %v1825 = vadd.f32 0.0, %v1824
        %v1826 = vpop.f32.mrb[0].mxu0
        %1827 = vmatprep.mubr.f32.mxu0 0.0
        %1828 = vmatmul.mubr.f32.gmra.mrb[0].mxu0 %v1726
        %v1829 = vpop.f32.mrb[0].mxu0
        %v1830 = vadd.f32 0.0, %v1829
        %v1831 = vpop.f32.mrb[0].mxu0
        %1832 = vdwg.mxu0
        %1833 = vrot.lane.b32.xlu0 %v989, 112
        %v1834 = vpop.permute.xlu0 %1833
        %1835 = vrot.lane.b32.xlu0 %v992, 112
        %v1836 = vpop.permute.xlu0 %1835
        %1837 = vrot.lane.b32.xlu0 %v997, 112
        %v1838 = vpop.permute.xlu0 %1837
        %1839 = vrot.lane.b32.xlu0 %v1000, 112
        %v1840 = vpop.permute.xlu0 %1839
        %1841 = vrot.lane.b32.xlu0 %v1005, 112
        %v1842 = vpop.permute.xlu0 %1841
        %1843 = vrot.lane.b32.xlu0 %v1008, 112
        %v1844 = vpop.permute.xlu0 %1843
        %1845 = vrot.lane.b32.xlu0 %v1013, 112
        %v1846 = vpop.permute.xlu0 %1845
        %1847 = vrot.lane.b32.xlu0 %v1016, 112
        %v1848 = vpop.permute.xlu0 %1847
        %1849 = vrot.lane.b32.xlu0 %v989, 80
        %v1850 = vpop.permute.xlu0 %1849
        %1851 = vrot.lane.b32.xlu0 %v992, 80
        %v1852 = vpop.permute.xlu0 %1851
        %1853 = vrot.lane.b32.xlu0 %v997, 80
        %v1854 = vpop.permute.xlu0 %1853
        %1855 = vrot.lane.b32.xlu0 %v1000, 80
        %v1856 = vpop.permute.xlu0 %1855
        %1857 = vrot.lane.b32.xlu0 %v1005, 80
        %v1858 = vpop.permute.xlu0 %1857
        %1859 = vrot.lane.b32.xlu0 %v1008, 80
        %v1860 = vpop.permute.xlu0 %1859
        %1861 = vrot.lane.b32.xlu0 %v1013, 80
        %v1862 = vpop.permute.xlu0 %1861
        %1863 = vrot.lane.b32.xlu0 %v1016, 80
        %v1864 = vpop.permute.xlu0 %1863
        %v1865 = vsel %vm1043, %v1834, 0
        %v1867 = vsel %vm1043, %v1836, 0
        %v1869 = vsel %vm1043, %v1838, 0
        %v1871 = vsel %vm1043, %v1840, 0
        %v1873 = vsel %vm1043, %v1842, 0
        %v1875 = vsel %vm1043, %v1844, 0
        %v1877 = vsel %vm1043, %v1846, 0
        %v1879 = vsel %vm1043, %v1848, 0
        %v1881 = vsel %vm1043, %v1850, 0
        %v1883 = vsel %vm1043, %v1852, 0
        %v1885 = vsel %vm1043, %v1854, 0
        %v1887 = vsel %vm1043, %v1856, 0
        %v1889 = vsel %vm1043, %v1858, 0
        %v1891 = vsel %vm1043, %v1860, 0
        %v1893 = vsel %vm1043, %v1862, 0
        %v1895 = vsel %vm1043, %v1864, 0
        %1897 = vmatprep.subr.mxu0 0.0
        %1898 = vmatpush1.xpose.msra.mxu0 %v1881
        %1899 = vmatprep.subr.mxu0 0.0
        %1900 = vmatpush1.xpose.msra.mxu0 %v1883
        %1901 = vmatprep.subr.mxu0 0.0
        %1902 = vmatpush1.xpose.msra.mxu0 %v1885
        %1903 = vmatprep.subr.mxu0 0.0
        %1904 = vmatpush1.xpose.msra.mxu0 %v1887
        %1905 = vmatprep.subr.mxu0 0.0
        %1906 = vmatpush1.xpose.msra.mxu0 %v1889
        %1907 = vmatprep.subr.mxu0 0.0
        %1908 = vmatpush1.xpose.msra.mxu0 %v1891
        %1909 = vmatprep.subr.mxu0 0.0
        %1910 = vmatpush1.xpose.msra.mxu0 %v1893
        %1911 = vmatprep.subr.mxu0 0.0
        %1912 = vmatpush1.xpose.msra.mxu0 %v1895
        %1913 = vmatprep.subr.mxu0 0.0
        %1914 = vmatpush1.xpose.msra.mxu0 0.0
        %1915 = vmatprep.subr.mxu0 0.0
        %1916 = vmatpush1.xpose.msra.mxu0 0.0
        %1917 = vmatprep.subr.mxu0 0.0
        %1918 = vmatpush1.xpose.msra.mxu0 0.0
        %1919 = vmatprep.subr.mxu0 0.0
        %1920 = vmatpush1.xpose.msra.mxu0 0.0
        %1921 = vmatprep.subr.mxu0 0.0
        %1922 = vmatpush1.xpose.msra.mxu0 0.0
        %1923 = vmatprep.subr.mxu0 0.0
        %1924 = vmatpush1.xpose.msra.mxu0 0.0
        %1925 = vmatprep.subr.mxu0 0.0
        %1926 = vmatpush1.xpose.msra.mxu0 0.0
        %1927 = vmatprep.subr.mxu0 0.0
        %1928 = vmatpush1.xpose.msra.mxu0 0.0
        %1929 = vmatprep.subr.mxu0 0.0
        %1930 = vmatpush1.xpose.msra.mxu0 0.0
        %1931 = vmatprep.subr.mxu0 0.0
        %1932 = vmatpush1.xpose.msra.mxu0 0.0
        %1933 = vmatprep.subr.mxu0 0.0
        %1934 = vmatpush1.xpose.msra.mxu0 0.0
        %1935 = vmatprep.subr.mxu0 0.0
        %1936 = vmatpush1.xpose.msra.mxu0 0.0
        %1937 = vmatprep.subr.mxu0 0.0
        %1938 = vmatpush1.xpose.msra.mxu0 0.0
        %1939 = vmatprep.subr.mxu0 0.0
        %1940 = vmatpush1.xpose.msra.mxu0 0.0
        %1941 = vmatprep.subr.mxu0 0.0
        %1942 = vmatpush1.xpose.msra.mxu0 0.0
        %1943 = vmatprep.subr.mxu0 0.0
        %1944 = vmatpush1.xpose.msra.mxu0 0.0
        %1945 = vmatprep.subr.mxu0 0.0
        %1946 = vmatpush1.xpose.msra.mxu0 0.0
        %1947 = vmatprep.subr.mxu0 0.0
        %1948 = vmatpush1.xpose.msra.mxu0 0.0
        %1949 = vmatprep.subr.mxu0 0.0
        %1950 = vmatpush1.xpose.msra.mxu0 0.0
        %1951 = vmatprep.subr.mxu0 0.0
        %1952 = vmatpush1.xpose.msra.mxu0 0.0
        %1953 = vmatprep.subr.mxu0 0.0
        %1954 = vmatpush1.xpose.msra.mxu0 0.0
        %1955 = vmatprep.subr.mxu0 0.0
        %1956 = vmatpush1.xpose.msra.mxu0 0.0
        %1957 = vmatprep.subr.mxu0 0.0
        %1958 = vmatpush1.xpose.msra.mxu0 0.0
        %1959 = vmatprep.subr.mxu0 0.0
        %1960 = vmatpush1.xpose.msra.mxu0 0.0
        %1961 = vmatprep.mubr.f32.mxu0 0.0
        %1962 = vmatmul.mubr.f32.gmra.mrb[0].mxu0 %v1865
        %v1963 = vpop.f32.mrb[0].mxu0
        %v1964 = vadd.f32 %v912, %v1963
        %v1965 = vpop.f32.mrb[0].mxu0
        %1966 = vmatprep.mubr.f32.mxu0 0.0
        %1967 = vmatmul.mubr.f32.gmra.mrb[0].mxu0 %v1867
        %v1968 = vpop.f32.mrb[0].mxu0
        %v1969 = vadd.f32 %v912, %v1968
        %v1970 = vpop.f32.mrb[0].mxu0
        %1971 = vmatprep.mubr.f32.mxu0 0.0
        %1972 = vmatmul.mubr.f32.gmra.mrb[0].mxu0 %v1869
        %v1973 = vpop.f32.mrb[0].mxu0
        %v1974 = vadd.f32 %v912, %v1973
        %v1975 = vpop.f32.mrb[0].mxu0
        %1976 = vmatprep.mubr.f32.mxu0 0.0
        %1977 = vmatmul.mubr.f32.gmra.mrb[0].mxu0 %v1871
        %v1978 = vpop.f32.mrb[0].mxu0
        %v1979 = vadd.f32 %v912, %v1978
        %v1980 = vpop.f32.mrb[0].mxu0
        %1981 = vmatprep.mubr.f32.mxu0 0.0
        %1982 = vmatmul.mubr.f32.gmra.mrb[0].mxu0 %v1873
        %v1983 = vpop.f32.mrb[0].mxu0
        %v1984 = vadd.f32 %v912, %v1983
        %v1985 = vpop.f32.mrb[0].mxu0
        %1986 = vmatprep.mubr.f32.mxu0 0.0
        %1987 = vmatmul.mubr.f32.gmra.mrb[0].mxu0 %v1875
        %v1988 = vpop.f32.mrb[0].mxu0
        %v1989 = vadd.f32 %v912, %v1988
        %v1990 = vpop.f32.mrb[0].mxu0
        %1991 = vmatprep.mubr.f32.mxu0 0.0
        %1992 = vmatmul.mubr.f32.gmra.mrb[0].mxu0 %v1877
        %v1993 = vpop.f32.mrb[0].mxu0
        %v1994 = vadd.f32 %v912, %v1993
        %v1995 = vpop.f32.mrb[0].mxu0
        %1996 = vmatprep.mubr.f32.mxu0 0.0
        %1997 = vmatmul.mubr.f32.gmra.mrb[0].mxu0 %v1879
        %v1998 = vpop.f32.mrb[0].mxu0
        %v1999 = vadd.f32 %v912, %v1998
        %v2000 = vpop.f32.mrb[0].mxu0
        %2001 = vdwg.mxu0
        %v2002 = vsel %vm1181, %v1964, -inf
        %2003 = vmax.xlane.f32.xlu0 %v2002
        %v2004 = vpop.xlane.xlu0 %2003
        %v2005 = vsel %vm1181, %v1969, -inf
        %2006 = vmax.xlane.f32.xlu0 %v2005
        %v2007 = vpop.xlane.xlu0 %2006
        %v2008 = vsel %vm1181, %v1974, -inf
        %2009 = vmax.xlane.f32.xlu0 %v2008
        %v2010 = vpop.xlane.xlu0 %2009
        %v2011 = vsel %vm1181, %v1979, -inf
        %2012 = vmax.xlane.f32.xlu0 %v2011
        %v2013 = vpop.xlane.xlu0 %2012
        %v2014 = vsel %vm1181, %v1984, -inf
        %2015 = vmax.xlane.f32.xlu0 %v2014
        %v2016 = vpop.xlane.xlu0 %2015
        %v2017 = vsel %vm1181, %v1989, -inf
        %2018 = vmax.xlane.f32.xlu0 %v2017
        %v2019 = vpop.xlane.xlu0 %2018
        %v2020 = vsel %vm1181, %v1994, -inf
        %2021 = vmax.xlane.f32.xlu0 %v2020
        %v2022 = vpop.xlane.xlu0 %2021
        %v2023 = vsel %vm1181, %v1999, -inf
        %2024 = vmax.xlane.f32.xlu0 %v2023
        %v2025 = vpop.xlane.xlu0 %2024
        %v2026 = vsub.f32 %v1964, %v2004
        %v2027 = vsub.f32 %v1969, %v2007
        %v2028 = vsub.f32 %v1974, %v2010
        %v2029 = vsub.f32 %v1979, %v2013
        %v2030 = vsub.f32 %v1984, %v2016
        %v2031 = vsub.f32 %v1989, %v2019
        %v2032 = vsub.f32 %v1994, %v2022
        %v2033 = vsub.f32 %v1999, %v2025
        %v2034 = vmul.f32 %v2026, 1.442695
        %v2035 = vpow.pop %v2034
        %v2036 = vmul.f32 %v2027, 1.442695
        %v2037 = vpow.pop %v2036
        %v2038 = vmul.f32 %v2028, 1.442695
        %v2039 = vpow.pop %v2038
        %v2040 = vmul.f32 %v2029, 1.442695
        %v2041 = vpow.pop %v2040
        %v2042 = vmul.f32 %v2030, 1.442695
        %v2043 = vpow.pop %v2042
        %v2044 = vmul.f32 %v2031, 1.442695
        %v2045 = vpow.pop %v2044
        %v2046 = vmul.f32 %v2032, 1.442695
        %v2047 = vpow.pop %v2046
        %v2048 = vmul.f32 %v2033, 1.442695
        %v2049 = vpow.pop %v2048
        %v2050 = vsel %vm1181, %v2035, 0.0
        %2051 = vadd.xlane.f32.xlu0 %v2050
        %v2052 = vpop.xlane.xlu0 %2051
        %v2053 = vsel %vm1181, %v2037, 0.0
        %2054 = vadd.xlane.f32.xlu0 %v2053
        %v2055 = vpop.xlane.xlu0 %2054
        %v2056 = vsel %vm1181, %v2039, 0.0
        %2057 = vadd.xlane.f32.xlu0 %v2056
        %v2058 = vpop.xlane.xlu0 %2057
        %v2059 = vsel %vm1181, %v2041, 0.0
        %2060 = vadd.xlane.f32.xlu0 %v2059
        %v2061 = vpop.xlane.xlu0 %2060
        %v2062 = vsel %vm1181, %v2043, 0.0
        %2063 = vadd.xlane.f32.xlu0 %v2062
        %v2064 = vpop.xlane.xlu0 %2063
        %v2065 = vsel %vm1181, %v2045, 0.0
        %2066 = vadd.xlane.f32.xlu0 %v2065
        %v2067 = vpop.xlane.xlu0 %2066
        %v2068 = vsel %vm1181, %v2047, 0.0
        %2069 = vadd.xlane.f32.xlu0 %v2068
        %v2070 = vpop.xlane.xlu0 %2069
        %v2071 = vsel %vm1181, %v2049, 0.0
        %2072 = vadd.xlane.f32.xlu0 %v2071
        %v2073 = vpop.xlane.xlu0 %2072
        %v2074 = vrcp.pop %v2052
        %v2075 = vrcp.pop %v2055
        %v2076 = vrcp.pop %v2058
        %v2077 = vrcp.pop %v2061
        %v2078 = vrcp.pop %v2064
        %v2079 = vrcp.pop %v2067
        %v2080 = vrcp.pop %v2070
        %v2081 = vrcp.pop %v2073
        %v2082 = vmul.f32 %v2035, %v2074
        %v2083 = vmul.f32 %v2037, %v2075
        %v2084 = vmul.f32 %v2039, %v2076
        %v2085 = vmul.f32 %v2041, %v2077
        %v2086 = vmul.f32 %v2043, %v2078
        %v2087 = vmul.f32 %v2045, %v2079
        %v2088 = vmul.f32 %v2047, %v2080
        %v2089 = vmul.f32 %v2049, %v2081
        %2090 = vrot.lane.b32.xlu0 %v989, 48
        %v2091 = vpop.permute.xlu0 %2090
        %2092 = vrot.lane.b32.xlu0 %v992, 48
        %v2093 = vpop.permute.xlu0 %2092
        %2094 = vrot.lane.b32.xlu0 %v997, 48
        %v2095 = vpop.permute.xlu0 %2094
        %2096 = vrot.lane.b32.xlu0 %v1000, 48
        %v2097 = vpop.permute.xlu0 %2096
        %2098 = vrot.lane.b32.xlu0 %v1005, 48
        %v2099 = vpop.permute.xlu0 %2098
        %2100 = vrot.lane.b32.xlu0 %v1008, 48
        %v2101 = vpop.permute.xlu0 %2100
        %2102 = vrot.lane.b32.xlu0 %v1013, 48
        %v2103 = vpop.permute.xlu0 %2102
        %2104 = vrot.lane.b32.xlu0 %v1016, 48
        %v2105 = vpop.permute.xlu0 %2104
        %v2115 = vsel %vm1181, %v2082, 0
        %v2118 = vsel %vm1181, %v2083, 0
        %v2121 = vsel %vm1181, %v2084, 0
        %v2124 = vsel %vm1181, %v2085, 0
        %v2127 = vsel %vm1181, %v2086, 0
        %v2130 = vsel %vm1181, %v2087, 0
        %v2133 = vsel %vm1181, %v2088, 0
        %v2136 = vsel %vm1181, %v2089, 0
        %2138 = vmatprep.subr.mxu0 0.0
        %2139 = vmatpush1.msra.mxu0 %v2091
        %2140 = vmatprep.subr.mxu0 0.0
        %2141 = vmatpush1.msra.mxu0 %v2093
        %2142 = vmatprep.subr.mxu0 0.0
        %2143 = vmatpush1.msra.mxu0 %v2095
        %2144 = vmatprep.subr.mxu0 0.0
        %2145 = vmatpush1.msra.mxu0 %v2097
        %2146 = vmatprep.subr.mxu0 0.0
        %2147 = vmatpush1.msra.mxu0 %v2099
        %2148 = vmatprep.subr.mxu0 0.0
        %2149 = vmatpush1.msra.mxu0 %v2101
        %2150 = vmatprep.subr.mxu0 0.0
        %2151 = vmatpush1.msra.mxu0 %v2103
        %2152 = vmatprep.subr.mxu0 0.0
        %2153 = vmatpush1.msra.mxu0 %v2105
        %2154 = vmatprep.subr.mxu0 0.0
        %2155 = vmatpush1.msra.mxu0 0.0
        %2156 = vmatprep.subr.mxu0 0.0
        %2157 = vmatpush1.msra.mxu0 0.0
        %2158 = vmatprep.subr.mxu0 0.0
        %2159 = vmatpush1.msra.mxu0 0.0
        %2160 = vmatprep.subr.mxu0 0.0
        %2161 = vmatpush1.msra.mxu0 0.0
        %2162 = vmatprep.subr.mxu0 0.0
        %2163 = vmatpush1.msra.mxu0 0.0
        %2164 = vmatprep.subr.mxu0 0.0
        %2165 = vmatpush1.msra.mxu0 0.0
        %2166 = vmatprep.subr.mxu0 0.0
        %2167 = vmatpush1.msra.mxu0 0.0
        %2168 = vmatprep.subr.mxu0 0.0
        %2169 = vmatpush1.msra.mxu0 0.0
        %2170 = vmatprep.subr.mxu0 0.0
        %2171 = vmatpush1.msra.mxu0 0.0
        %2172 = vmatprep.subr.mxu0 0.0
        %2173 = vmatpush1.msra.mxu0 0.0
        %2174 = vmatprep.subr.mxu0 0.0
        %2175 = vmatpush1.msra.mxu0 0.0
        %2176 = vmatprep.subr.mxu0 0.0
        %2177 = vmatpush1.msra.mxu0 0.0
        %2178 = vmatprep.subr.mxu0 0.0
        %2179 = vmatpush1.msra.mxu0 0.0
        %2180 = vmatprep.subr.mxu0 0.0
        %2181 = vmatpush1.msra.mxu0 0.0
        %2182 = vmatprep.subr.mxu0 0.0
        %2183 = vmatpush1.msra.mxu0 0.0
        %2184 = vmatprep.subr.mxu0 0.0
        %2185 = vmatpush1.msra.mxu0 0.0
        %2186 = vmatprep.subr.mxu0 0.0
        %2187 = vmatpush1.msra.mxu0 0.0
        %2188 = vmatprep.subr.mxu0 0.0
        %2189 = vmatpush1.msra.mxu0 0.0
        %2190 = vmatprep.subr.mxu0 0.0
        %2191 = vmatpush1.msra.mxu0 0.0
        %2192 = vmatprep.subr.mxu0 0.0
        %2193 = vmatpush1.msra.mxu0 0.0
        %2194 = vmatprep.subr.mxu0 0.0
        %2195 = vmatpush1.msra.mxu0 0.0
        %2196 = vmatprep.subr.mxu0 0.0
        %2197 = vmatpush1.msra.mxu0 0.0
        %2198 = vmatprep.subr.mxu0 0.0
        %2199 = vmatpush1.msra.mxu0 0.0
        %2200 = vmatprep.subr.mxu0 0.0
        %2201 = vmatpush1.msra.mxu0 0.0
        %2202 = vmatprep.mubr.f32.mxu0 0.0
        %2203 = vmatmul.mubr.f32.gmra.mrb[0].mxu0 %v2115
        %v2204 = vpop.f32.mrb[0].mxu0
        %v2205 = vadd.f32 0.0, %v2204
        %v2206 = vpop.f32.mrb[0].mxu0
        %2207 = vmatprep.mubr.f32.mxu0 0.0
        %2208 = vmatmul.mubr.f32.gmra.mrb[0].mxu0 %v2118
        %v2209 = vpop.f32.mrb[0].mxu0
        %v2210 = vadd.f32 0.0, %v2209
        %v2211 = vpop.f32.mrb[0].mxu0
        %2212 = vmatprep.mubr.f32.mxu0 0.0
        %2213 = vmatmul.mubr.f32.gmra.mrb[0].mxu0 %v2121
        %v2214 = vpop.f32.mrb[0].mxu0
        %v2215 = vadd.f32 0.0, %v2214
        %v2216 = vpop.f32.mrb[0].mxu0
        %2217 = vmatprep.mubr.f32.mxu0 0.0
        %2218 = vmatmul.mubr.f32.gmra.mrb[0].mxu0 %v2124
        %v2219 = vpop.f32.mrb[0].mxu0
        %v2220 = vadd.f32 0.0, %v2219
        %v2221 = vpop.f32.mrb[0].mxu0
        %2222 = vmatprep.mubr.f32.mxu0 0.0
        %2223 = vmatmul.mubr.f32.gmra.mrb[0].mxu0 %v2127
        %v2224 = vpop.f32.mrb[0].mxu0
        %v2225 = vadd.f32 0.0, %v2224
        %v2226 = vpop.f32.mrb[0].mxu0
        %2227 = vmatprep.mubr.f32.mxu0 0.0
        %2228 = vmatmul.mubr.f32.gmra.mrb[0].mxu0 %v2130
        %v2229 = vpop.f32.mrb[0].mxu0
        %v2230 = vadd.f32 0.0, %v2229
        %v2231 = vpop.f32.mrb[0].mxu0
        %2232 = vmatprep.mubr.f32.mxu0 0.0
        %2233 = vmatmul.mubr.f32.gmra.mrb[0].mxu0 %v2133
        %v2234 = vpop.f32.mrb[0].mxu0
        %v2235 = vadd.f32 0.0, %v2234
        %v2236 = vpop.f32.mrb[0].mxu0
        %2237 = vmatprep.mubr.f32.mxu0 0.0
        %2238 = vmatmul.mubr.f32.gmra.mrb[0].mxu0 %v2136
        %v2239 = vpop.f32.mrb[0].mxu0
        %v2240 = vadd.f32 0.0, %v2239
        %v2241 = vpop.f32.mrb[0].mxu0
        %2242 = vdwg.mxu0
        %2243 = vrot.lane.b32.xlu0 %v989, 104
        %v2244 = vpop.permute.xlu0 %2243
        %2245 = vrot.lane.b32.xlu0 %v992, 104
        %v2246 = vpop.permute.xlu0 %2245
        %2247 = vrot.lane.b32.xlu0 %v997, 104
        %v2248 = vpop.permute.xlu0 %2247
        %2249 = vrot.lane.b32.xlu0 %v1000, 104
        %v2250 = vpop.permute.xlu0 %2249
        %2251 = vrot.lane.b32.xlu0 %v1005, 104
        %v2252 = vpop.permute.xlu0 %2251
        %2253 = vrot.lane.b32.xlu0 %v1008, 104
        %v2254 = vpop.permute.xlu0 %2253
        %2255 = vrot.lane.b32.xlu0 %v1013, 104
        %v2256 = vpop.permute.xlu0 %2255
        %2257 = vrot.lane.b32.xlu0 %v1016, 104
        %v2258 = vpop.permute.xlu0 %2257
        %2259 = vrot.lane.b32.xlu0 %v989, 72
        %v2260 = vpop.permute.xlu0 %2259
        %2261 = vrot.lane.b32.xlu0 %v992, 72
        %v2262 = vpop.permute.xlu0 %2261
        %2263 = vrot.lane.b32.xlu0 %v997, 72
        %v2264 = vpop.permute.xlu0 %2263
        %2265 = vrot.lane.b32.xlu0 %v1000, 72
        %v2266 = vpop.permute.xlu0 %2265
        %2267 = vrot.lane.b32.xlu0 %v1005, 72
        %v2268 = vpop.permute.xlu0 %2267
        %2269 = vrot.lane.b32.xlu0 %v1008, 72
        %v2270 = vpop.permute.xlu0 %2269
        %2271 = vrot.lane.b32.xlu0 %v1013, 72
        %v2272 = vpop.permute.xlu0 %2271
        %2273 = vrot.lane.b32.xlu0 %v1016, 72
        %v2274 = vpop.permute.xlu0 %2273
        %v2275 = vsel %vm1043, %v2244, 0
        %v2277 = vsel %vm1043, %v2246, 0
        %v2279 = vsel %vm1043, %v2248, 0
        %v2281 = vsel %vm1043, %v2250, 0
        %v2283 = vsel %vm1043, %v2252, 0
        %v2285 = vsel %vm1043, %v2254, 0
        %v2287 = vsel %vm1043, %v2256, 0
        %v2289 = vsel %vm1043, %v2258, 0
        %v2291 = vsel %vm1043, %v2260, 0
        %v2293 = vsel %vm1043, %v2262, 0
        %v2295 = vsel %vm1043, %v2264, 0
        %v2297 = vsel %vm1043, %v2266, 0
        %v2299 = vsel %vm1043, %v2268, 0
        %v2301 = vsel %vm1043, %v2270, 0
        %v2303 = vsel %vm1043, %v2272, 0
        %v2305 = vsel %vm1043, %v2274, 0
        %2307 = vmatprep.subr.mxu0 0.0
        %2308 = vmatpush1.xpose.msra.mxu0 %v2291
        %2309 = vmatprep.subr.mxu0 0.0
        %2310 = vmatpush1.xpose.msra.mxu0 %v2293
        %2311 = vmatprep.subr.mxu0 0.0
        %2312 = vmatpush1.xpose.msra.mxu0 %v2295
        %2313 = vmatprep.subr.mxu0 0.0
        %2314 = vmatpush1.xpose.msra.mxu0 %v2297
        %2315 = vmatprep.subr.mxu0 0.0
        %2316 = vmatpush1.xpose.msra.mxu0 %v2299
        %2317 = vmatprep.subr.mxu0 0.0
        %2318 = vmatpush1.xpose.msra.mxu0 %v2301
        %2319 = vmatprep.subr.mxu0 0.0
        %2320 = vmatpush1.xpose.msra.mxu0 %v2303
        %2321 = vmatprep.subr.mxu0 0.0
        %2322 = vmatpush1.xpose.msra.mxu0 %v2305
        %2323 = vmatprep.subr.mxu0 0.0
        %2324 = vmatpush1.xpose.msra.mxu0 0.0
        %2325 = vmatprep.subr.mxu0 0.0
        %2326 = vmatpush1.xpose.msra.mxu0 0.0
        %2327 = vmatprep.subr.mxu0 0.0
        %2328 = vmatpush1.xpose.msra.mxu0 0.0
        %2329 = vmatprep.subr.mxu0 0.0
        %2330 = vmatpush1.xpose.msra.mxu0 0.0
        %2331 = vmatprep.subr.mxu0 0.0
        %2332 = vmatpush1.xpose.msra.mxu0 0.0
        %2333 = vmatprep.subr.mxu0 0.0
        %2334 = vmatpush1.xpose.msra.mxu0 0.0
        %2335 = vmatprep.subr.mxu0 0.0
        %2336 = vmatpush1.xpose.msra.mxu0 0.0
        %2337 = vmatprep.subr.mxu0 0.0
        %2338 = vmatpush1.xpose.msra.mxu0 0.0
        %2339 = vmatprep.subr.mxu0 0.0
        %2340 = vmatpush1.xpose.msra.mxu0 0.0
        %2341 = vmatprep.subr.mxu0 0.0
        %2342 = vmatpush1.xpose.msra.mxu0 0.0
        %2343 = vmatprep.subr.mxu0 0.0
        %2344 = vmatpush1.xpose.msra.mxu0 0.0
        %2345 = vmatprep.subr.mxu0 0.0
        %2346 = vmatpush1.xpose.msra.mxu0 0.0
        %2347 = vmatprep.subr.mxu0 0.0
        %2348 = vmatpush1.xpose.msra.mxu0 0.0
        %2349 = vmatprep.subr.mxu0 0.0
        %2350 = vmatpush1.xpose.msra.mxu0 0.0
        %2351 = vmatprep.subr.mxu0 0.0
        %2352 = vmatpush1.xpose.msra.mxu0 0.0
        %2353 = vmatprep.subr.mxu0 0.0
        %2354 = vmatpush1.xpose.msra.mxu0 0.0
        %2355 = vmatprep.subr.mxu0 0.0
        %2356 = vmatpush1.xpose.msra.mxu0 0.0
        %2357 = vmatprep.subr.mxu0 0.0
        %2358 = vmatpush1.xpose.msra.mxu0 0.0
        %2359 = vmatprep.subr.mxu0 0.0
        %2360 = vmatpush1.xpose.msra.mxu0 0.0
        %2361 = vmatprep.subr.mxu0 0.0
        %2362 = vmatpush1.xpose.msra.mxu0 0.0
        %2363 = vmatprep.subr.mxu0 0.0
        %2364 = vmatpush1.xpose.msra.mxu0 0.0
        %2365 = vmatprep.subr.mxu0 0.0
        %2366 = vmatpush1.xpose.msra.mxu0 0.0
        %2367 = vmatprep.subr.mxu0 0.0
        %2368 = vmatpush1.xpose.msra.mxu0 0.0
        %2369 = vmatprep.subr.mxu0 0.0
        %2370 = vmatpush1.xpose.msra.mxu0 0.0
        %2371 = vmatprep.mubr.f32.mxu0 0.0
        %2372 = vmatmul.mubr.f32.gmra.mrb[0].mxu0 %v2275
        %v2373 = vpop.f32.mrb[0].mxu0
        %v2374 = vadd.f32 %v912, %v2373
        %v2375 = vpop.f32.mrb[0].mxu0
        %2376 = vmatprep.mubr.f32.mxu0 0.0
        %2377 = vmatmul.mubr.f32.gmra.mrb[0].mxu0 %v2277
        %v2378 = vpop.f32.mrb[0].mxu0
        %v2379 = vadd.f32 %v912, %v2378
        %v2380 = vpop.f32.mrb[0].mxu0
        %2381 = vmatprep.mubr.f32.mxu0 0.0
        %2382 = vmatmul.mubr.f32.gmra.mrb[0].mxu0 %v2279
        %v2383 = vpop.f32.mrb[0].mxu0
        %v2384 = vadd.f32 %v912, %v2383
        %v2385 = vpop.f32.mrb[0].mxu0
        %2386 = vmatprep.mubr.f32.mxu0 0.0
        %2387 = vmatmul.mubr.f32.gmra.mrb[0].mxu0 %v2281
        %v2388 = vpop.f32.mrb[0].mxu0
        %v2389 = vadd.f32 %v912, %v2388
        %v2390 = vpop.f32.mrb[0].mxu0
        %2391 = vmatprep.mubr.f32.mxu0 0.0
        %2392 = vmatmul.mubr.f32.gmra.mrb[0].mxu0 %v2283
        %v2393 = vpop.f32.mrb[0].mxu0
        %v2394 = vadd.f32 %v912, %v2393
        %v2395 = vpop.f32.mrb[0].mxu0
        %2396 = vmatprep.mubr.f32.mxu0 0.0
        %2397 = vmatmul.mubr.f32.gmra.mrb[0].mxu0 %v2285
        %v2398 = vpop.f32.mrb[0].mxu0
        %v2399 = vadd.f32 %v912, %v2398
        %v2400 = vpop.f32.mrb[0].mxu0
        %2401 = vmatprep.mubr.f32.mxu0 0.0
        %2402 = vmatmul.mubr.f32.gmra.mrb[0].mxu0 %v2287
        %v2403 = vpop.f32.mrb[0].mxu0
        %v2404 = vadd.f32 %v912, %v2403
        %v2405 = vpop.f32.mrb[0].mxu0
        %2406 = vmatprep.mubr.f32.mxu0 0.0
        %2407 = vmatmul.mubr.f32.gmra.mrb[0].mxu0 %v2289
        %v2408 = vpop.f32.mrb[0].mxu0
        %v2409 = vadd.f32 %v912, %v2408
        %v2410 = vpop.f32.mrb[0].mxu0
        %2411 = vdwg.mxu0
        %v2412 = vsel %vm1181, %v2374, -inf
        %2413 = vmax.xlane.f32.xlu0 %v2412
        %v2414 = vpop.xlane.xlu0 %2413
        %v2415 = vsel %vm1181, %v2379, -inf
        %2416 = vmax.xlane.f32.xlu0 %v2415
        %v2417 = vpop.xlane.xlu0 %2416
        %v2418 = vsel %vm1181, %v2384, -inf
        %2419 = vmax.xlane.f32.xlu0 %v2418
        %v2420 = vpop.xlane.xlu0 %2419
        %v2421 = vsel %vm1181, %v2389, -inf
        %2422 = vmax.xlane.f32.xlu0 %v2421
        %v2423 = vpop.xlane.xlu0 %2422
        %v2424 = vsel %vm1181, %v2394, -inf
        %2425 = vmax.xlane.f32.xlu0 %v2424
        %v2426 = vpop.xlane.xlu0 %2425
        %v2427 = vsel %vm1181, %v2399, -inf
        %2428 = vmax.xlane.f32.xlu0 %v2427
        %v2429 = vpop.xlane.xlu0 %2428
        %v2430 = vsel %vm1181, %v2404, -inf
        %2431 = vmax.xlane.f32.xlu0 %v2430
        %v2432 = vpop.xlane.xlu0 %2431
        %v2433 = vsel %vm1181, %v2409, -inf
        %2434 = vmax.xlane.f32.xlu0 %v2433
        %v2435 = vpop.xlane.xlu0 %2434
        %v2436 = vsub.f32 %v2374, %v2414
        %v2437 = vsub.f32 %v2379, %v2417
        %v2438 = vsub.f32 %v2384, %v2420
        %v2439 = vsub.f32 %v2389, %v2423
        %v2440 = vsub.f32 %v2394, %v2426
        %v2441 = vsub.f32 %v2399, %v2429
        %v2442 = vsub.f32 %v2404, %v2432
        %v2443 = vsub.f32 %v2409, %v2435
        %v2444 = vmul.f32 %v2436, 1.442695
        %v2445 = vpow.pop %v2444
        %v2446 = vmul.f32 %v2437, 1.442695
        %v2447 = vpow.pop %v2446
        %v2448 = vmul.f32 %v2438, 1.442695
        %v2449 = vpow.pop %v2448
        %v2450 = vmul.f32 %v2439, 1.442695
        %v2451 = vpow.pop %v2450
        %v2452 = vmul.f32 %v2440, 1.442695
        %v2453 = vpow.pop %v2452
        %v2454 = vmul.f32 %v2441, 1.442695
        %v2455 = vpow.pop %v2454
        %v2456 = vmul.f32 %v2442, 1.442695
        %v2457 = vpow.pop %v2456
        %v2458 = vmul.f32 %v2443, 1.442695
        %v2459 = vpow.pop %v2458
        %v2460 = vsel %vm1181, %v2445, 0.0
        %2461 = vadd.xlane.f32.xlu0 %v2460
        %v2462 = vpop.xlane.xlu0 %2461
        %v2463 = vsel %vm1181, %v2447, 0.0
        %2464 = vadd.xlane.f32.xlu0 %v2463
        %v2465 = vpop.xlane.xlu0 %2464
        %v2466 = vsel %vm1181, %v2449, 0.0
        %2467 = vadd.xlane.f32.xlu0 %v2466
        %v2468 = vpop.xlane.xlu0 %2467
        %v2469 = vsel %vm1181, %v2451, 0.0
        %2470 = vadd.xlane.f32.xlu0 %v2469
        %v2471 = vpop.xlane.xlu0 %2470
        %v2472 = vsel %vm1181, %v2453, 0.0
        %2473 = vadd.xlane.f32.xlu0 %v2472
        %v2474 = vpop.xlane.xlu0 %2473
        %v2475 = vsel %vm1181, %v2455, 0.0
        %2476 = vadd.xlane.f32.xlu0 %v2475
        %v2477 = vpop.xlane.xlu0 %2476
        %v2478 = vsel %vm1181, %v2457, 0.0
        %2479 = vadd.xlane.f32.xlu0 %v2478
        %v2480 = vpop.xlane.xlu0 %2479
        %v2481 = vsel %vm1181, %v2459, 0.0
        %2482 = vadd.xlane.f32.xlu0 %v2481
        %v2483 = vpop.xlane.xlu0 %2482
        %v2484 = vrcp.pop %v2462
        %v2485 = vrcp.pop %v2465
        %v2486 = vrcp.pop %v2468
        %v2487 = vrcp.pop %v2471
        %v2488 = vrcp.pop %v2474
        %v2489 = vrcp.pop %v2477
        %v2490 = vrcp.pop %v2480
        %v2491 = vrcp.pop %v2483
        %v2492 = vmul.f32 %v2445, %v2484
        %v2493 = vmul.f32 %v2447, %v2485
        %v2494 = vmul.f32 %v2449, %v2486
        %v2495 = vmul.f32 %v2451, %v2487
        %v2496 = vmul.f32 %v2453, %v2488
        %v2497 = vmul.f32 %v2455, %v2489
        %v2498 = vmul.f32 %v2457, %v2490
        %v2499 = vmul.f32 %v2459, %v2491
        %2500 = vrot.lane.b32.xlu0 %v989, 40
        %v2501 = vpop.permute.xlu0 %2500
        %2502 = vrot.lane.b32.xlu0 %v992, 40
        %v2503 = vpop.permute.xlu0 %2502
        %2504 = vrot.lane.b32.xlu0 %v997, 40
        %v2505 = vpop.permute.xlu0 %2504
        %2506 = vrot.lane.b32.xlu0 %v1000, 40
        %v2507 = vpop.permute.xlu0 %2506
        %2508 = vrot.lane.b32.xlu0 %v1005, 40
        %v2509 = vpop.permute.xlu0 %2508
        %2510 = vrot.lane.b32.xlu0 %v1008, 40
        %v2511 = vpop.permute.xlu0 %2510
        %2512 = vrot.lane.b32.xlu0 %v1013, 40
        %v2513 = vpop.permute.xlu0 %2512
        %2514 = vrot.lane.b32.xlu0 %v1016, 40
        %v2515 = vpop.permute.xlu0 %2514
        %v2525 = vsel %vm1181, %v2492, 0
        %v2528 = vsel %vm1181, %v2493, 0
        %v2531 = vsel %vm1181, %v2494, 0
        %v2534 = vsel %vm1181, %v2495, 0
        %v2537 = vsel %vm1181, %v2496, 0
        %v2540 = vsel %vm1181, %v2497, 0
        %v2543 = vsel %vm1181, %v2498, 0
        %v2546 = vsel %vm1181, %v2499, 0
        %2548 = vmatprep.subr.mxu0 0.0
        %2549 = vmatpush1.msra.mxu0 %v2501
        %2550 = vmatprep.subr.mxu0 0.0
        %2551 = vmatpush1.msra.mxu0 %v2503
        %2552 = vmatprep.subr.mxu0 0.0
        %2553 = vmatpush1.msra.mxu0 %v2505
        %2554 = vmatprep.subr.mxu0 0.0
        %2555 = vmatpush1.msra.mxu0 %v2507
        %2556 = vmatprep.subr.mxu0 0.0
        %2557 = vmatpush1.msra.mxu0 %v2509
        %2558 = vmatprep.subr.mxu0 0.0
        %2559 = vmatpush1.msra.mxu0 %v2511
        %2560 = vmatprep.subr.mxu0 0.0
        %2561 = vmatpush1.msra.mxu0 %v2513
        %2562 = vmatprep.subr.mxu0 0.0
        %2563 = vmatpush1.msra.mxu0 %v2515
        %2564 = vmatprep.subr.mxu0 0.0
        %2565 = vmatpush1.msra.mxu0 0.0
        %2566 = vmatprep.subr.mxu0 0.0
        %2567 = vmatpush1.msra.mxu0 0.0
        %2568 = vmatprep.subr.mxu0 0.0
        %2569 = vmatpush1.msra.mxu0 0.0
        %2570 = vmatprep.subr.mxu0 0.0
        %2571 = vmatpush1.msra.mxu0 0.0
        %2572 = vmatprep.subr.mxu0 0.0
        %2573 = vmatpush1.msra.mxu0 0.0
        %2574 = vmatprep.subr.mxu0 0.0
        %2575 = vmatpush1.msra.mxu0 0.0
        %2576 = vmatprep.subr.mxu0 0.0
        %2577 = vmatpush1.msra.mxu0 0.0
        %2578 = vmatprep.subr.mxu0 0.0
        %2579 = vmatpush1.msra.mxu0 0.0
        %2580 = vmatprep.subr.mxu0 0.0
        %2581 = vmatpush1.msra.mxu0 0.0
        %2582 = vmatprep.subr.mxu0 0.0
        %2583 = vmatpush1.msra.mxu0 0.0
        %2584 = vmatprep.subr.mxu0 0.0
        %2585 = vmatpush1.msra.mxu0 0.0
        %2586 = vmatprep.subr.mxu0 0.0
        %2587 = vmatpush1.msra.mxu0 0.0
        %2588 = vmatprep.subr.mxu0 0.0
        %2589 = vmatpush1.msra.mxu0 0.0
        %2590 = vmatprep.subr.mxu0 0.0
        %2591 = vmatpush1.msra.mxu0 0.0
        %2592 = vmatprep.subr.mxu0 0.0
        %2593 = vmatpush1.msra.mxu0 0.0
        %2594 = vmatprep.subr.mxu0 0.0
        %2595 = vmatpush1.msra.mxu0 0.0
        %2596 = vmatprep.subr.mxu0 0.0
        %2597 = vmatpush1.msra.mxu0 0.0
        %2598 = vmatprep.subr.mxu0 0.0
        %2599 = vmatpush1.msra.mxu0 0.0
        %2600 = vmatprep.subr.mxu0 0.0
        %2601 = vmatpush1.msra.mxu0 0.0
        %2602 = vmatprep.subr.mxu0 0.0
        %2603 = vmatpush1.msra.mxu0 0.0
        %2604 = vmatprep.subr.mxu0 0.0
        %2605 = vmatpush1.msra.mxu0 0.0
        %2606 = vmatprep.subr.mxu0 0.0
        %2607 = vmatpush1.msra.mxu0 0.0
        %2608 = vmatprep.subr.mxu0 0.0
        %2609 = vmatpush1.msra.mxu0 0.0
        %2610 = vmatprep.subr.mxu0 0.0
        %2611 = vmatpush1.msra.mxu0 0.0
        %2612 = vmatprep.mubr.f32.mxu0 0.0
        %2613 = vmatmul.mubr.f32.gmra.mrb[0].mxu0 %v2525
        %v2614 = vpop.f32.mrb[0].mxu0
        %v2615 = vadd.f32 0.0, %v2614
        %v2616 = vpop.f32.mrb[0].mxu0
        %2617 = vmatprep.mubr.f32.mxu0 0.0
        %2618 = vmatmul.mubr.f32.gmra.mrb[0].mxu0 %v2528
        %v2619 = vpop.f32.mrb[0].mxu0
        %v2620 = vadd.f32 0.0, %v2619
        %v2621 = vpop.f32.mrb[0].mxu0
        %2622 = vmatprep.mubr.f32.mxu0 0.0
        %2623 = vmatmul.mubr.f32.gmra.mrb[0].mxu0 %v2531
        %v2624 = vpop.f32.mrb[0].mxu0
        %v2625 = vadd.f32 0.0, %v2624
        %v2626 = vpop.f32.mrb[0].mxu0
        %2627 = vmatprep.mubr.f32.mxu0 0.0
        %2628 = vmatmul.mubr.f32.gmra.mrb[0].mxu0 %v2534
        %v2629 = vpop.f32.mrb[0].mxu0
        %v2630 = vadd.f32 0.0, %v2629
        %v2631 = vpop.f32.mrb[0].mxu0
        %2632 = vmatprep.mubr.f32.mxu0 0.0
        %2633 = vmatmul.mubr.f32.gmra.mrb[0].mxu0 %v2537
        %v2634 = vpop.f32.mrb[0].mxu0
        %v2635 = vadd.f32 0.0, %v2634
        %v2636 = vpop.f32.mrb[0].mxu0
        %2637 = vmatprep.mubr.f32.mxu0 0.0
        %2638 = vmatmul.mubr.f32.gmra.mrb[0].mxu0 %v2540
        %v2639 = vpop.f32.mrb[0].mxu0
        %v2640 = vadd.f32 0.0, %v2639
        %v2641 = vpop.f32.mrb[0].mxu0
        %2642 = vmatprep.mubr.f32.mxu0 0.0
        %2643 = vmatmul.mubr.f32.gmra.mrb[0].mxu0 %v2543
        %v2644 = vpop.f32.mrb[0].mxu0
        %v2645 = vadd.f32 0.0, %v2644
        %v2646 = vpop.f32.mrb[0].mxu0
        %2647 = vmatprep.mubr.f32.mxu0 0.0
        %2648 = vmatmul.mubr.f32.gmra.mrb[0].mxu0 %v2546
        %v2649 = vpop.f32.mrb[0].mxu0
        %v2650 = vadd.f32 0.0, %v2649
        %v2651 = vpop.f32.mrb[0].mxu0
        %2652 = vdwg.mxu0
        %2661 = vrot.lane.b32.xlu0 %v1795, 8
        %v2662 = vpop.permute.xlu0 %2661
        %2663 = vrot.lane.b32.xlu0 %v1800, 8
        %v2664 = vpop.permute.xlu0 %2663
        %2665 = vrot.lane.b32.xlu0 %v1805, 8
        %v2666 = vpop.permute.xlu0 %2665
        %2667 = vrot.lane.b32.xlu0 %v1810, 8
        %v2668 = vpop.permute.xlu0 %2667
        %2669 = vrot.lane.b32.xlu0 %v1815, 8
        %v2670 = vpop.permute.xlu0 %2669
        %2671 = vrot.lane.b32.xlu0 %v1820, 8
        %v2672 = vpop.permute.xlu0 %2671
        %2673 = vrot.lane.b32.xlu0 %v1825, 8
        %v2674 = vpop.permute.xlu0 %2673
        %2675 = vrot.lane.b32.xlu0 %v1830, 8
        %v2676 = vpop.permute.xlu0 %2675
        %2693 = vrot.lane.b32.xlu0 %v2205, 16
        %v2694 = vpop.permute.xlu0 %2693
        %2695 = vrot.lane.b32.xlu0 %v2210, 16
        %v2696 = vpop.permute.xlu0 %2695
        %2697 = vrot.lane.b32.xlu0 %v2215, 16
        %v2698 = vpop.permute.xlu0 %2697
        %2699 = vrot.lane.b32.xlu0 %v2220, 16
        %v2700 = vpop.permute.xlu0 %2699
        %2701 = vrot.lane.b32.xlu0 %v2225, 16
        %v2702 = vpop.permute.xlu0 %2701
        %2703 = vrot.lane.b32.xlu0 %v2230, 16
        %v2704 = vpop.permute.xlu0 %2703
        %2705 = vrot.lane.b32.xlu0 %v2235, 16
        %v2706 = vpop.permute.xlu0 %2705
        %2707 = vrot.lane.b32.xlu0 %v2240, 16
        %v2708 = vpop.permute.xlu0 %2707
        %2725 = vrot.lane.b32.xlu0 %v2615, 24
        %v2726 = vpop.permute.xlu0 %2725
        %2727 = vrot.lane.b32.xlu0 %v2620, 24
        %v2728 = vpop.permute.xlu0 %2727
        %2729 = vrot.lane.b32.xlu0 %v2625, 24
        %v2730 = vpop.permute.xlu0 %2729
        %2731 = vrot.lane.b32.xlu0 %v2630, 24
        %v2732 = vpop.permute.xlu0 %2731
        %2733 = vrot.lane.b32.xlu0 %v2635, 24
        %v2734 = vpop.permute.xlu0 %2733
        %2735 = vrot.lane.b32.xlu0 %v2640, 24
        %v2736 = vpop.permute.xlu0 %2735
        %2737 = vrot.lane.b32.xlu0 %v2645, 24
        %v2738 = vpop.permute.xlu0 %2737
        %2739 = vrot.lane.b32.xlu0 %v2650, 24
        %v2740 = vpop.permute.xlu0 %2739
        %v2749 = vsel %vm1043, %v1385, %v2662
        %v2750 = vsel %vm1043, %v1390, %v2664
        %v2751 = vsel %vm1043, %v1395, %v2666
        %v2752 = vsel %vm1043, %v1400, %v2668
        %v2753 = vsel %vm1043, %v1405, %v2670
        %v2754 = vsel %vm1043, %v1410, %v2672
        %v2755 = vsel %vm1043, %v1415, %v2674
        %v2756 = vsel %vm1043, %v1420, %v2676
        %vm2757 = vcmask 130048
        %v2758 = vsel %vm2757, %v2749, %v2694
        %v2759 = vsel %vm2757, %v2750, %v2696
        %v2760 = vsel %vm2757, %v2751, %v2698
        %v2761 = vsel %vm2757, %v2752, %v2700
        %v2762 = vsel %vm2757, %v2753, %v2702
        %v2763 = vsel %vm2757, %v2754, %v2704
        %v2764 = vsel %vm2757, %v2755, %v2706
        %v2765 = vsel %vm2757, %v2756, %v2708
        %vm2766 = vcmask 195584
        %v2767 = vsel %vm2766, %v2758, %v2726
        %v2768 = vsel %vm2766, %v2759, %v2728
        %v2769 = vsel %vm2766, %v2760, %v2730
        %v2770 = vsel %vm2766, %v2761, %v2732
        %v2771 = vsel %vm2766, %v2762, %v2734
        %v2772 = vsel %vm2766, %v2763, %v2736
        %v2773 = vsel %vm2766, %v2764, %v2738
        %v2774 = vsel %vm2766, %v2765, %v2740
        %v2775 = vpack.c.bf16 %v2768, %v2767
        %v2776 = vpack.c.bf16 %v2770, %v2769
        %v2777 = vpack.c.bf16 %v2772, %v2771
        %v2778 = vpack.c.bf16 %v2774, %v2773
        %v2779 = vld [vmem:[%s734] sm:$0xf]
        %v2780 = vld [vmem:[%s734 + $0x4] sm:$0xf]
        %v2781 = vld [vmem:[%s734 + $0x8] sm:$0xf]
        %v2782 = vld [vmem:[%s734 + $0xc] sm:$0xf]
        %v2783 = vld [vmem:[%s737] sm:$0x1]
        %v2785 = vlaneseq
        %v2786 = vshrl.u32 %v2785, 7
        %v2787 = vsub.s32 0, %v2786
        %v2788 = vrot.slane %v2783, %v2787
        %v2794 = vunpack.c.l.b16 %v2779
        %v2795 = vunpack.c.l.b16 %v2780
        %v2796 = vunpack.c.l.b16 %v2781
        %v2797 = vunpack.c.l.b16 %v2782
        %v2798 = vpack.c.b16 %v2795, %v2794
        %v2799 = vpack.c.b16 %v2797, %v2796
        %v2803 = vsel %vm941, %v2775, 0
        %v2806 = vsel %vm941, %v2776, 0
        %v2809 = vsel %vm941, %v2777, 0
        %v2812 = vsel %vm941, %v2778, 0
        %2814 = vmatprep.subr.bf16.mxu0 0
        %2815 = vmatpush1.bf16.msra.mxu0 %v2798
        %2816 = vmatprep.subr.bf16.mxu0 0
        %2817 = vmatpush1.bf16.msra.mxu0 %v2799
        %2818 = vmatprep.subr.bf16.mxu0 0
        %2819 = vmatpush1.bf16.msra.mxu0 0
        %2820 = vmatprep.subr.bf16.mxu0 0
        %2821 = vmatpush1.bf16.msra.mxu0 0
        %2822 = vmatprep.subr.bf16.mxu0 0
        %2823 = vmatpush1.bf16.msra.mxu0 0
        %2824 = vmatprep.subr.bf16.mxu0 0
        %2825 = vmatpush1.bf16.msra.mxu0 0
        %2826 = vmatprep.subr.bf16.mxu0 0
        %2827 = vmatpush1.bf16.msra.mxu0 0
        %2828 = vmatprep.subr.bf16.mxu0 0
        %2829 = vmatpush1.bf16.msra.mxu0 0
        %2830 = vmatprep.subr.bf16.mxu0 0
        %2831 = vmatpush1.bf16.msra.mxu0 0
        %2832 = vmatprep.subr.bf16.mxu0 0
        %2833 = vmatpush1.bf16.msra.mxu0 0
        %2834 = vmatprep.subr.bf16.mxu0 0
        %2835 = vmatpush1.bf16.msra.mxu0 0
        %2836 = vmatprep.subr.bf16.mxu0 0
        %2837 = vmatpush1.bf16.msra.mxu0 0
        %2838 = vmatprep.subr.bf16.mxu0 0
        %2839 = vmatpush1.bf16.msra.mxu0 0
        %2840 = vmatprep.subr.bf16.mxu0 0
        %2841 = vmatpush1.bf16.msra.mxu0 0
        %2842 = vmatprep.subr.bf16.mxu0 0
        %2843 = vmatpush1.bf16.msra.mxu0 0
        %2844 = vmatprep.subr.bf16.mxu0 0
        %2845 = vmatpush1.bf16.msra.mxu0 0
        %2846 = vmatprep.mubr.bf16.mxu0 0
        %2847 = vmatmul.mubr.bf16.gmra.mrb[0].mxu0 %v2803
        %v2848 = vpop.f32.mrb[0].mxu0
        %v2849 = vadd.f32 %v2788, %v2848
        %v2850 = vpop.f32.mrb[0].mxu0
        %v2851 = vpop.f32.mrb[0].mxu0
        %v2852 = vadd.f32 %v2788, %v2851
        %v2853 = vpop.f32.mrb[0].mxu0
        %2854 = vmatprep.mubr.bf16.mxu0 0
        %2855 = vmatmul.mubr.bf16.gmra.mrb[0].mxu0 %v2806
        %v2856 = vpop.f32.mrb[0].mxu0
        %v2857 = vadd.f32 %v2788, %v2856
        %v2858 = vpop.f32.mrb[0].mxu0
        %v2859 = vpop.f32.mrb[0].mxu0
        %v2860 = vadd.f32 %v2788, %v2859
        %v2861 = vpop.f32.mrb[0].mxu0
        %2862 = vmatprep.mubr.bf16.mxu0 0
        %2863 = vmatmul.mubr.bf16.gmra.mrb[0].mxu0 %v2809
        %v2864 = vpop.f32.mrb[0].mxu0
        %v2865 = vadd.f32 %v2788, %v2864
        %v2866 = vpop.f32.mrb[0].mxu0
        %v2867 = vpop.f32.mrb[0].mxu0
        %v2868 = vadd.f32 %v2788, %v2867
        %v2869 = vpop.f32.mrb[0].mxu0
        %2870 = vmatprep.mubr.bf16.mxu0 0
        %2871 = vmatmul.mubr.bf16.gmra.mrb[0].mxu0 %v2812
        %v2872 = vpop.f32.mrb[0].mxu0
        %v2873 = vadd.f32 %v2788, %v2872
        %v2874 = vpop.f32.mrb[0].mxu0
        %v2875 = vpop.f32.mrb[0].mxu0
        %v2876 = vadd.f32 %v2788, %v2875
        %v2877 = vpop.f32.mrb[0].mxu0
        %2878 = vdwg.mxu0
        %v2879 = vadd.f32 %v899, %v2849
        %v2880 = vadd.f32 %v900, %v2852
        %v2881 = vadd.f32 %v901, %v2857
        %v2882 = vadd.f32 %v902, %v2860
        %v2883 = vadd.f32 %v903, %v2865
        %v2884 = vadd.f32 %v904, %v2868
        %v2885 = vadd.f32 %v905, %v2873
        %v2886 = vadd.f32 %v906, %v2876
        %v2887 = vld [vmem:[%s740] sm:$0x1]
        %v2888 = vld [vmem:[%s743] sm:$0x1]
        %v2889 = vsel %vm941, %v2879, 0.0
        %2890 = vadd.xlane.f32.xlu0 %v2889
        %v2891 = vpop.xlane.xlu0 %2890
        %v2892 = vsel %vm941, %v2880, 0.0
        %2893 = vadd.xlane.f32.xlu0 %v2892
        %v2894 = vpop.xlane.xlu0 %2893
        %v2895 = vsel %vm941, %v2881, 0.0
        %2896 = vadd.xlane.f32.xlu0 %v2895
        %v2897 = vpop.xlane.xlu0 %2896
        %v2898 = vsel %vm941, %v2882, 0.0
        %2899 = vadd.xlane.f32.xlu0 %v2898
        %v2900 = vpop.xlane.xlu0 %2899
        %v2901 = vsel %vm941, %v2883, 0.0
        %2902 = vadd.xlane.f32.xlu0 %v2901
        %v2903 = vpop.xlane.xlu0 %2902
        %v2904 = vsel %vm941, %v2884, 0.0
        %2905 = vadd.xlane.f32.xlu0 %v2904
        %v2906 = vpop.xlane.xlu0 %2905
        %v2907 = vsel %vm941, %v2885, 0.0
        %2908 = vadd.xlane.f32.xlu0 %v2907
        %v2909 = vpop.xlane.xlu0 %2908
        %v2910 = vsel %vm941, %v2886, 0.0
        %2911 = vadd.xlane.f32.xlu0 %v2910
        %v2912 = vpop.xlane.xlu0 %2911
        %v2913 = vrcp.pop 32.0
        %v2914 = vmul.f32 %v2891, %v2913
        %v2915 = vmul.f32 %v2894, %v2913
        %v2916 = vmul.f32 %v2897, %v2913
        %v2917 = vmul.f32 %v2900, %v2913
        %v2918 = vmul.f32 %v2903, %v2913
        %v2919 = vmul.f32 %v2906, %v2913
        %v2920 = vmul.f32 %v2909, %v2913
        %v2921 = vmul.f32 %v2912, %v2913
        %v2922 = vsub.f32 %v2879, %v2914
        %v2923 = vsub.f32 %v2880, %v2915
        %v2924 = vsub.f32 %v2881, %v2916
        %v2925 = vsub.f32 %v2882, %v2917
        %v2926 = vsub.f32 %v2883, %v2918
        %v2927 = vsub.f32 %v2884, %v2919
        %v2928 = vsub.f32 %v2885, %v2920
        %v2929 = vsub.f32 %v2886, %v2921
        %v2930 = vmul.f32 %v2922, %v2922
        %v2931 = vmul.f32 %v2923, %v2923
        %v2932 = vmul.f32 %v2924, %v2924
        %v2933 = vmul.f32 %v2925, %v2925
        %v2934 = vmul.f32 %v2926, %v2926
        %v2935 = vmul.f32 %v2927, %v2927
        %v2936 = vmul.f32 %v2928, %v2928
        %v2937 = vmul.f32 %v2929, %v2929
        %v2938 = vsel %vm941, %v2930, 0.0
        %2939 = vadd.xlane.f32.xlu0 %v2938
        %v2940 = vpop.xlane.xlu0 %2939
        %v2941 = vsel %vm941, %v2931, 0.0
        %2942 = vadd.xlane.f32.xlu0 %v2941
        %v2943 = vpop.xlane.xlu0 %2942
        %v2944 = vsel %vm941, %v2932, 0.0
        %2945 = vadd.xlane.f32.xlu0 %v2944
        %v2946 = vpop.xlane.xlu0 %2945
        %v2947 = vsel %vm941, %v2933, 0.0
        %2948 = vadd.xlane.f32.xlu0 %v2947
        %v2949 = vpop.xlane.xlu0 %2948
        %v2950 = vsel %vm941, %v2934, 0.0
        %2951 = vadd.xlane.f32.xlu0 %v2950
        %v2952 = vpop.xlane.xlu0 %2951
        %v2953 = vsel %vm941, %v2935, 0.0
        %2954 = vadd.xlane.f32.xlu0 %v2953
        %v2955 = vpop.xlane.xlu0 %2954
        %v2956 = vsel %vm941, %v2936, 0.0
        %2957 = vadd.xlane.f32.xlu0 %v2956
        %v2958 = vpop.xlane.xlu0 %2957
        %v2959 = vsel %vm941, %v2937, 0.0
        %2960 = vadd.xlane.f32.xlu0 %v2959
        %v2961 = vpop.xlane.xlu0 %2960
        %v2962 = vmul.f32 %v2940, %v2913
        %v2963 = vmul.f32 %v2943, %v2913
        %v2964 = vmul.f32 %v2946, %v2913
        %v2965 = vmul.f32 %v2949, %v2913
        %v2966 = vmul.f32 %v2952, %v2913
        %v2967 = vmul.f32 %v2955, %v2913
        %v2968 = vmul.f32 %v2958, %v2913
        %v2969 = vmul.f32 %v2961, %v2913
        %v2970 = vadd.f32 %v2962, 1e-05
        %v2971 = vadd.f32 %v2963, 1e-05
        %v2972 = vadd.f32 %v2964, 1e-05
        %v2973 = vadd.f32 %v2965, 1e-05
        %v2974 = vadd.f32 %v2966, 1e-05
        %v2975 = vadd.f32 %v2967, 1e-05
        %v2976 = vadd.f32 %v2968, 1e-05
        %v2977 = vadd.f32 %v2969, 1e-05
        %v2978 = vrsqrt.pop %v2970
        %v2979 = vrsqrt.pop %v2971
        %v2980 = vrsqrt.pop %v2972
        %v2981 = vrsqrt.pop %v2973
        %v2982 = vrsqrt.pop %v2974
        %v2983 = vrsqrt.pop %v2975
        %v2984 = vrsqrt.pop %v2976
        %v2985 = vrsqrt.pop %v2977
        %v2986 = vmul.f32 %v2922, %v2978
        %v2987 = vmul.f32 %v2923, %v2979
        %v2988 = vmul.f32 %v2924, %v2980
        %v2989 = vmul.f32 %v2925, %v2981
        %v2990 = vmul.f32 %v2926, %v2982
        %v2991 = vmul.f32 %v2927, %v2983
        %v2992 = vmul.f32 %v2928, %v2984
        %v2993 = vmul.f32 %v2929, %v2985
        %v2995 = vlaneseq
        %v2996 = vshrl.u32 %v2995, 7
        %v2997 = vsub.s32 0, %v2996
        %v2998 = vrot.slane %v2887, %v2997
        %v3000 = vmul.f32 %v2986, %v2998
        %v3001 = vmul.f32 %v2987, %v2998
        %v3002 = vmul.f32 %v2988, %v2998
        %v3003 = vmul.f32 %v2989, %v2998
        %v3004 = vmul.f32 %v2990, %v2998
        %v3005 = vmul.f32 %v2991, %v2998
        %v3006 = vmul.f32 %v2992, %v2998
        %v3007 = vmul.f32 %v2993, %v2998
        %v3009 = vlaneseq
        %v3010 = vshrl.u32 %v3009, 7
        %v3011 = vsub.s32 0, %v3010
        %v3012 = vrot.slane %v2888, %v3011
        %v3014 = vadd.f32 %v3000, %v3012
        %v3015 = vadd.f32 %v3001, %v3012
        %v3016 = vadd.f32 %v3002, %v3012
        %v3017 = vadd.f32 %v3003, %v3012
        %v3018 = vadd.f32 %v3004, %v3012
        %v3019 = vadd.f32 %v3005, %v3012
        %v3020 = vadd.f32 %v3006, %v3012
        %v3021 = vadd.f32 %v3007, %v3012
        %v3022 = vpack.c.bf16 %v3015, %v3014
        %v3023 = vpack.c.bf16 %v3017, %v3016
        %v3024 = vpack.c.bf16 %v3019, %v3018
        %v3025 = vpack.c.bf16 %v3021, %v3020
        %v3026 = vld [vmem:[%s748] sm:$0xff]
        %v3027 = vld [vmem:[%s748 + $0x8] sm:$0xff]
        %v3028 = vld [vmem:[%s748 + $0x10] sm:$0xff]
        %v3029 = vld [vmem:[%s748 + $0x18] sm:$0xff]
        %v3030 = vld [vmem:[%s748 + $0x20] sm:$0xff]
        %v3031 = vld [vmem:[%s748 + $0x28] sm:$0xff]
        %v3032 = vld [vmem:[%s748 + $0x30] sm:$0xff]
        %v3033 = vld [vmem:[%s748 + $0x38] sm:$0xff]
        %v3034 = vld [vmem:[%s748 + $0x40] sm:$0xff]
        %v3035 = vld [vmem:[%s748 + $0x48] sm:$0xff]
        %v3036 = vld [vmem:[%s748 + $0x50] sm:$0xff]
        %v3037 = vld [vmem:[%s748 + $0x58] sm:$0xff]
        %v3038 = vld [vmem:[%s748 + $0x60] sm:$0xff]
        %v3039 = vld [vmem:[%s748 + $0x68] sm:$0xff]
        %v3040 = vld [vmem:[%s748 + $0x70] sm:$0xff]
        %v3041 = vld [vmem:[%s748 + $0x78] sm:$0xff]
        %v3042 = vld [vmem:[%s748 + $0x80] sm:$0xff]
        %v3043 = vld [vmem:[%s748 + $0x88] sm:$0xff]
        %v3044 = vld [vmem:[%s748 + $0x90] sm:$0xff]
        %v3045 = vld [vmem:[%s748 + $0x98] sm:$0xff]
        %v3046 = vld [vmem:[%s748 + $0xa0] sm:$0xff]
        %v3047 = vld [vmem:[%s748 + $0xa8] sm:$0xff]
        %v3048 = vld [vmem:[%s748 + $0xb0] sm:$0xff]
        %v3049 = vld [vmem:[%s748 + $0xb8] sm:$0xff]
        %v3050 = vld [vmem:[%s748 + $0xc0] sm:$0xff]
        %v3051 = vld [vmem:[%s748 + $0xc8] sm:$0xff]
        %v3052 = vld [vmem:[%s748 + $0xd0] sm:$0xff]
        %v3053 = vld [vmem:[%s748 + $0xd8] sm:$0xff]
        %v3054 = vld [vmem:[%s748 + $0xe0] sm:$0xff]
        %v3055 = vld [vmem:[%s748 + $0xe8] sm:$0xff]
        %v3056 = vld [vmem:[%s748 + $0xf0] sm:$0xff]
        %v3057 = vld [vmem:[%s748 + $0xf8] sm:$0xff]
        %v3058 = vld [vmem:[%s752] sm:$0xff]
        %v3059 = vld [vmem:[%s752 + $0x8] sm:$0xff]
        %v3062 = vlaneseq
        %v3063 = vshrl.u32 %v3062, 7
        %v3064 = vsub.s32 0, %v3063
        %v3065 = vrot.slane %v3058, %v3064
        %v3066 = vlaneseq
        %v3067 = vshrl.u32 %v3066, 7
        %v3068 = vsub.s32 1, %v3067
        %v3069 = vrot.slane %v3058, %v3068
        %v3070 = vlaneseq
        %v3071 = vshrl.u32 %v3070, 7
        %v3072 = vsub.s32 2, %v3071
        %v3073 = vrot.slane %v3058, %v3072
        %v3074 = vlaneseq
        %v3075 = vshrl.u32 %v3074, 7
        %v3076 = vsub.s32 3, %v3075
        %v3077 = vrot.slane %v3058, %v3076
        %v3078 = vlaneseq
        %v3079 = vshrl.u32 %v3078, 7
        %v3080 = vsub.s32 4, %v3079
        %v3081 = vrot.slane %v3058, %v3080
        %v3082 = vlaneseq
        %v3083 = vshrl.u32 %v3082, 7
        %v3084 = vsub.s32 5, %v3083
        %v3085 = vrot.slane %v3058, %v3084
        %v3086 = vlaneseq
        %v3087 = vshrl.u32 %v3086, 7
        %v3088 = vsub.s32 6, %v3087
        %v3089 = vrot.slane %v3058, %v3088
        %v3090 = vlaneseq
        %v3091 = vshrl.u32 %v3090, 7
        %v3092 = vsub.s32 7, %v3091
        %v3093 = vrot.slane %v3058, %v3092
        %v3094 = vlaneseq
        %v3095 = vshrl.u32 %v3094, 7
        %v3096 = vsub.s32 0, %v3095
        %v3097 = vrot.slane %v3059, %v3096
        %v3098 = vlaneseq
        %v3099 = vshrl.u32 %v3098, 7
        %v3100 = vsub.s32 1, %v3099
        %v3101 = vrot.slane %v3059, %v3100
        %v3102 = vlaneseq
        %v3103 = vshrl.u32 %v3102, 7
        %v3104 = vsub.s32 2, %v3103
        %v3105 = vrot.slane %v3059, %v3104
        %v3106 = vlaneseq
        %v3107 = vshrl.u32 %v3106, 7
        %v3108 = vsub.s32 3, %v3107
        %v3109 = vrot.slane %v3059, %v3108
        %v3110 = vlaneseq
        %v3111 = vshrl.u32 %v3110, 7
        %v3112 = vsub.s32 4, %v3111
        %v3113 = vrot.slane %v3059, %v3112
        %v3114 = vlaneseq
        %v3115 = vshrl.u32 %v3114, 7
        %v3116 = vsub.s32 5, %v3115
        %v3117 = vrot.slane %v3059, %v3116
        %v3118 = vlaneseq
        %v3119 = vshrl.u32 %v3118, 7
        %v3120 = vsub.s32 6, %v3119
        %v3121 = vrot.slane %v3059, %v3120
        %v3122 = vlaneseq
        %v3123 = vshrl.u32 %v3122, 7
        %v3124 = vsub.s32 7, %v3123
        %v3125 = vrot.slane %v3059, %v3124
        %v3174 = vunpack.c.l.b16 %v3026
        %v3175 = vunpack.c.h.b16 %v3026
        %v3176 = vunpack.c.l.b16 %v3027
        %v3177 = vunpack.c.h.b16 %v3027
        %v3178 = vunpack.c.l.b16 %v3028
        %v3179 = vunpack.c.h.b16 %v3028
        %v3180 = vunpack.c.l.b16 %v3029
        %v3181 = vunpack.c.h.b16 %v3029
        %v3182 = vunpack.c.l.b16 %v3030
        %v3183 = vunpack.c.h.b16 %v3030
        %v3184 = vunpack.c.l.b16 %v3031
        %v3185 = vunpack.c.h.b16 %v3031
        %v3186 = vunpack.c.l.b16 %v3032
        %v3187 = vunpack.c.h.b16 %v3032
        %v3188 = vunpack.c.l.b16 %v3033
        %v3189 = vunpack.c.h.b16 %v3033
        %v3190 = vunpack.c.l.b16 %v3034
        %v3191 = vunpack.c.h.b16 %v3034
        %v3192 = vunpack.c.l.b16 %v3035
        %v3193 = vunpack.c.h.b16 %v3035
        %v3194 = vunpack.c.l.b16 %v3036
        %v3195 = vunpack.c.h.b16 %v3036
        %v3196 = vunpack.c.l.b16 %v3037
        %v3197 = vunpack.c.h.b16 %v3037
        %v3198 = vunpack.c.l.b16 %v3038
        %v3199 = vunpack.c.h.b16 %v3038
        %v3200 = vunpack.c.l.b16 %v3039
        %v3201 = vunpack.c.h.b16 %v3039
        %v3202 = vunpack.c.l.b16 %v3040
        %v3203 = vunpack.c.h.b16 %v3040
        %v3204 = vunpack.c.l.b16 %v3041
        %v3205 = vunpack.c.h.b16 %v3041
        %v3206 = vunpack.c.l.b16 %v3042
        %v3207 = vunpack.c.h.b16 %v3042
        %v3208 = vunpack.c.l.b16 %v3043
        %v3209 = vunpack.c.h.b16 %v3043
        %v3210 = vunpack.c.l.b16 %v3044
        %v3211 = vunpack.c.h.b16 %v3044
        %v3212 = vunpack.c.l.b16 %v3045
        %v3213 = vunpack.c.h.b16 %v3045
        %v3214 = vunpack.c.l.b16 %v3046
        %v3215 = vunpack.c.h.b16 %v3046
        %v3216 = vunpack.c.l.b16 %v3047
        %v3217 = vunpack.c.h.b16 %v3047
        %v3218 = vunpack.c.l.b16 %v3048
        %v3219 = vunpack.c.h.b16 %v3048
        %v3220 = vunpack.c.l.b16 %v3049
        %v3221 = vunpack.c.h.b16 %v3049
        %v3222 = vunpack.c.l.b16 %v3050
        %v3223 = vunpack.c.h.b16 %v3050
        %v3224 = vunpack.c.l.b16 %v3051
        %v3225 = vunpack.c.h.b16 %v3051
        %v3226 = vunpack.c.l.b16 %v3052
        %v3227 = vunpack.c.h.b16 %v3052
        %v3228 = vunpack.c.l.b16 %v3053
        %v3229 = vunpack.c.h.b16 %v3053
        %v3230 = vunpack.c.l.b16 %v3054
        %v3231 = vunpack.c.h.b16 %v3054
        %v3232 = vunpack.c.l.b16 %v3055
        %v3233 = vunpack.c.h.b16 %v3055
        %v3234 = vunpack.c.l.b16 %v3056
        %v3235 = vunpack.c.h.b16 %v3056
        %v3236 = vunpack.c.l.b16 %v3057
        %v3237 = vunpack.c.h.b16 %v3057
        %v3238 = vpack.c.b16 %v3190, %v3174
        %v3239 = vpack.c.b16 %v3191, %v3175
        %v3240 = vpack.c.b16 %v3192, %v3176
        %v3241 = vpack.c.b16 %v3193, %v3177
        %v3242 = vpack.c.b16 %v3194, %v3178
        %v3243 = vpack.c.b16 %v3195, %v3179
        %v3244 = vpack.c.b16 %v3196, %v3180
        %v3245 = vpack.c.b16 %v3197, %v3181
        %v3246 = vpack.c.b16 %v3198, %v3182
        %v3247 = vpack.c.b16 %v3199, %v3183
        %v3248 = vpack.c.b16 %v3200, %v3184
        %v3249 = vpack.c.b16 %v3201, %v3185
        %v3250 = vpack.c.b16 %v3202, %v3186
        %v3251 = vpack.c.b16 %v3203, %v3187
        %v3252 = vpack.c.b16 %v3204, %v3188
        %v3253 = vpack.c.b16 %v3205, %v3189
        %v3254 = vpack.c.b16 %v3222, %v3206
        %v3255 = vpack.c.b16 %v3223, %v3207
        %v3256 = vpack.c.b16 %v3224, %v3208
        %v3257 = vpack.c.b16 %v3225, %v3209
        %v3258 = vpack.c.b16 %v3226, %v3210
        %v3259 = vpack.c.b16 %v3227, %v3211
        %v3260 = vpack.c.b16 %v3228, %v3212
        %v3261 = vpack.c.b16 %v3229, %v3213
        %v3262 = vpack.c.b16 %v3230, %v3214
        %v3263 = vpack.c.b16 %v3231, %v3215
        %v3264 = vpack.c.b16 %v3232, %v3216
        %v3265 = vpack.c.b16 %v3233, %v3217
        %v3266 = vpack.c.b16 %v3234, %v3218
        %v3267 = vpack.c.b16 %v3235, %v3219
        %v3268 = vpack.c.b16 %v3236, %v3220
        %v3269 = vpack.c.b16 %v3237, %v3221
        %v3303 = vsel %vm941, %v3022, 0
        %v3306 = vsel %vm941, %v3023, 0
        %v3309 = vsel %vm941, %v3024, 0
        %v3312 = vsel %vm941, %v3025, 0
        %3314 = vmatprep.subr.bf16.mxu0 %v3239
        %3315 = vmatpush1.bf16.msra.mxu0 %v3238
        %3316 = vmatprep.subr.bf16.mxu0 %v3255
        %3317 = vmatpush1.bf16.msra.mxu0 %v3254
        %3318 = vmatprep.subr.bf16.mxu0 0
        %3319 = vmatpush1.bf16.msra.mxu0 0
        %3320 = vmatprep.subr.bf16.mxu0 0
        %3321 = vmatpush1.bf16.msra.mxu0 0
        %3322 = vmatprep.subr.bf16.mxu0 0
        %3323 = vmatpush1.bf16.msra.mxu0 0
        %3324 = vmatprep.subr.bf16.mxu0 0
        %3325 = vmatpush1.bf16.msra.mxu0 0
        %3326 = vmatprep.subr.bf16.mxu0 0
        %3327 = vmatpush1.bf16.msra.mxu0 0
        %3328 = vmatprep.subr.bf16.mxu0 0
        %3329 = vmatpush1.bf16.msra.mxu0 0
        %3330 = vmatprep.subr.bf16.mxu0 0
        %3331 = vmatpush1.bf16.msra.mxu0 0
        %3332 = vmatprep.subr.bf16.mxu0 0
        %3333 = vmatpush1.bf16.msra.mxu0 0
        %3334 = vmatprep.subr.bf16.mxu0 0
        %3335 = vmatpush1.bf16.msra.mxu0 0
        %3336 = vmatprep.subr.bf16.mxu0 0
        %3337 = vmatpush1.bf16.msra.mxu0 0
        %3338 = vmatprep.subr.bf16.mxu0 0
        %3339 = vmatpush1.bf16.msra.mxu0 0
        %3340 = vmatprep.subr.bf16.mxu0 0
        %3341 = vmatpush1.bf16.msra.mxu0 0
        %3342 = vmatprep.subr.bf16.mxu0 0
        %3343 = vmatpush1.bf16.msra.mxu0 0
        %3344 = vmatprep.subr.bf16.mxu0 0
        %3345 = vmatpush1.bf16.msra.mxu0 0
        %3346 = vmatprep.mubr.bf16.mxu0 0
        %3347 = vmatmul.mubr.bf16.gmra.mrb[0].mxu0 %v3303
        %v3348 = vpop.f32.mrb[0].mxu0
        %v3349 = vadd.f32 %v3065, %v3348
        %v3350 = vpop.f32.mrb[0].mxu0
        %v3351 = vadd.f32 %v3069, %v3350
        %v3352 = vpop.f32.mrb[0].mxu0
        %v3353 = vadd.f32 %v3065, %v3352
        %v3354 = vpop.f32.mrb[0].mxu0
        %v3355 = vadd.f32 %v3069, %v3354
        %3356 = vmatprep.mubr.bf16.mxu0 0
        %3357 = vmatmul.mubr.bf16.gmra.mrb[0].mxu0 %v3306
        %v3358 = vpop.f32.mrb[0].mxu0
        %v3359 = vadd.f32 %v3065, %v3358
        %v3360 = vpop.f32.mrb[0].mxu0
        %v3361 = vadd.f32 %v3069, %v3360
        %v3362 = vpop.f32.mrb[0].mxu0
        %v3363 = vadd.f32 %v3065, %v3362
        %v3364 = vpop.f32.mrb[0].mxu0
        %v3365 = vadd.f32 %v3069, %v3364
        %3366 = vmatprep.mubr.bf16.mxu0 0
        %3367 = vmatmul.mubr.bf16.gmra.mrb[0].mxu0 %v3309
        %v3368 = vpop.f32.mrb[0].mxu0
        %v3369 = vadd.f32 %v3065, %v3368
        %v3370 = vpop.f32.mrb[0].mxu0
        %v3371 = vadd.f32 %v3069, %v3370
        %v3372 = vpop.f32.mrb[0].mxu0
        %v3373 = vadd.f32 %v3065, %v3372
        %v3374 = vpop.f32.mrb[0].mxu0
        %v3375 = vadd.f32 %v3069, %v3374
        %3376 = vmatprep.mubr.bf16.mxu0 0
        %3377 = vmatmul.mubr.bf16.gmra.mrb[0].mxu0 %v3312
        %v3378 = vpop.f32.mrb[0].mxu0
        %v3379 = vadd.f32 %v3065, %v3378
        %v3380 = vpop.f32.mrb[0].mxu0
        %v3381 = vadd.f32 %v3069, %v3380
        %v3382 = vpop.f32.mrb[0].mxu0
        %v3383 = vadd.f32 %v3065, %v3382
        %v3384 = vpop.f32.mrb[0].mxu0
        %v3385 = vadd.f32 %v3069, %v3384
        %3386 = vdwg.mxu0
        %3387 = vmatprep.subr.bf16.mxu0 %v3241
        %3388 = vmatpush1.bf16.msra.mxu0 %v3240
        %3389 = vmatprep.subr.bf16.mxu0 %v3257
        %3390 = vmatpush1.bf16.msra.mxu0 %v3256
        %3391 = vmatprep.subr.bf16.mxu0 0
        %3392 = vmatpush1.bf16.msra.mxu0 0
        %3393 = vmatprep.subr.bf16.mxu0 0
        %3394 = vmatpush1.bf16.msra.mxu0 0
        %3395 = vmatprep.subr.bf16.mxu0 0
        %3396 = vmatpush1.bf16.msra.mxu0 0
        %3397 = vmatprep.subr.bf16.mxu0 0
        %3398 = vmatpush1.bf16.msra.mxu0 0
        %3399 = vmatprep.subr.bf16.mxu0 0
        %3400 = vmatpush1.bf16.msra.mxu0 0
        %3401 = vmatprep.subr.bf16.mxu0 0
        %3402 = vmatpush1.bf16.msra.mxu0 0
        %3403 = vmatprep.subr.bf16.mxu0 0
        %3404 = vmatpush1.bf16.msra.mxu0 0
        %3405 = vmatprep.subr.bf16.mxu0 0
        %3406 = vmatpush1.bf16.msra.mxu0 0
        %3407 = vmatprep.subr.bf16.mxu0 0
        %3408 = vmatpush1.bf16.msra.mxu0 0
        %3409 = vmatprep.subr.bf16.mxu0 0
        %3410 = vmatpush1.bf16.msra.mxu0 0
        %3411 = vmatprep.subr.bf16.mxu0 0
        %3412 = vmatpush1.bf16.msra.mxu0 0
        %3413 = vmatprep.subr.bf16.mxu0 0
        %3414 = vmatpush1.bf16.msra.mxu0 0
        %3415 = vmatprep.subr.bf16.mxu0 0
        %3416 = vmatpush1.bf16.msra.mxu0 0
        %3417 = vmatprep.subr.bf16.mxu0 0
        %3418 = vmatpush1.bf16.msra.mxu0 0
        %3419 = vmatprep.mubr.bf16.mxu0 0
        %3420 = vmatmul.mubr.bf16.gmra.mrb[0].mxu0 %v3303
        %v3421 = vpop.f32.mrb[0].mxu0
        %v3422 = vadd.f32 %v3073, %v3421
        %v3423 = vpop.f32.mrb[0].mxu0
        %v3424 = vadd.f32 %v3077, %v3423
        %v3425 = vpop.f32.mrb[0].mxu0
        %v3426 = vadd.f32 %v3073, %v3425
        %v3427 = vpop.f32.mrb[0].mxu0
        %v3428 = vadd.f32 %v3077, %v3427
        %3429 = vmatprep.mubr.bf16.mxu0 0
        %3430 = vmatmul.mubr.bf16.gmra.mrb[0].mxu0 %v3306
        %v3431 = vpop.f32.mrb[0].mxu0
        %v3432 = vadd.f32 %v3073, %v3431
        %v3433 = vpop.f32.mrb[0].mxu0
        %v3434 = vadd.f32 %v3077, %v3433
        %v3435 = vpop.f32.mrb[0].mxu0
        %v3436 = vadd.f32 %v3073, %v3435
        %v3437 = vpop.f32.mrb[0].mxu0
        %v3438 = vadd.f32 %v3077, %v3437
        %3439 = vmatprep.mubr.bf16.mxu0 0
        %3440 = vmatmul.mubr.bf16.gmra.mrb[0].mxu0 %v3309
        %v3441 = vpop.f32.mrb[0].mxu0
        %v3442 = vadd.f32 %v3073, %v3441
        %v3443 = vpop.f32.mrb[0].mxu0
        %v3444 = vadd.f32 %v3077, %v3443
        %v3445 = vpop.f32.mrb[0].mxu0
        %v3446 = vadd.f32 %v3073, %v3445
        %v3447 = vpop.f32.mrb[0].mxu0
        %v3448 = vadd.f32 %v3077, %v3447
        %3449 = vmatprep.mubr.bf16.mxu0 0
        %3450 = vmatmul.mubr.bf16.gmra.mrb[0].mxu0 %v3312
        %v3451 = vpop.f32.mrb[0].mxu0
        %v3452 = vadd.f32 %v3073, %v3451
        %v3453 = vpop.f32.mrb[0].mxu0
        %v3454 = vadd.f32 %v3077, %v3453
        %v3455 = vpop.f32.mrb[0].mxu0
        %v3456 = vadd.f32 %v3073, %v3455
        %v3457 = vpop.f32.mrb[0].mxu0
        %v3458 = vadd.f32 %v3077, %v3457
        %3459 = vdwg.mxu0
        %3460 = vmatprep.subr.bf16.mxu0 %v3243
        %3461 = vmatpush1.bf16.msra.mxu0 %v3242
        %3462 = vmatprep.subr.bf16.mxu0 %v3259
        %3463 = vmatpush1.bf16.msra.mxu0 %v3258
        %3464 = vmatprep.subr.bf16.mxu0 0
        %3465 = vmatpush1.bf16.msra.mxu0 0
        %3466 = vmatprep.subr.bf16.mxu0 0
        %3467 = vmatpush1.bf16.msra.mxu0 0
        %3468 = vmatprep.subr.bf16.mxu0 0
        %3469 = vmatpush1.bf16.msra.mxu0 0
        %3470 = vmatprep.subr.bf16.mxu0 0
        %3471 = vmatpush1.bf16.msra.mxu0 0
        %3472 = vmatprep.subr.bf16.mxu0 0
        %3473 = vmatpush1.bf16.msra.mxu0 0
        %3474 = vmatprep.subr.bf16.mxu0 0
        %3475 = vmatpush1.bf16.msra.mxu0 0
        %3476 = vmatprep.subr.bf16.mxu0 0
        %3477 = vmatpush1.bf16.msra.mxu0 0
        %3478 = vmatprep.subr.bf16.mxu0 0
        %3479 = vmatpush1.bf16.msra.mxu0 0
        %3480 = vmatprep.subr.bf16.mxu0 0
        %3481 = vmatpush1.bf16.msra.mxu0 0
        %3482 = vmatprep.subr.bf16.mxu0 0
        %3483 = vmatpush1.bf16.msra.mxu0 0
        %3484 = vmatprep.subr.bf16.mxu0 0
        %3485 = vmatpush1.bf16.msra.mxu0 0
        %3486 = vmatprep.subr.bf16.mxu0 0
        %3487 = vmatpush1.bf16.msra.mxu0 0
        %3488 = vmatprep.subr.bf16.mxu0 0
        %3489 = vmatpush1.bf16.msra.mxu0 0
        %3490 = vmatprep.subr.bf16.mxu0 0
        %3491 = vmatpush1.bf16.msra.mxu0 0
        %3492 = vmatprep.mubr.bf16.mxu0 0
        %3493 = vmatmul.mubr.bf16.gmra.mrb[0].mxu0 %v3303
        %v3494 = vpop.f32.mrb[0].mxu0
        %v3495 = vadd.f32 %v3081, %v3494
        %v3496 = vpop.f32.mrb[0].mxu0
        %v3497 = vadd.f32 %v3085, %v3496
        %v3498 = vpop.f32.mrb[0].mxu0
        %v3499 = vadd.f32 %v3081, %v3498
        %v3500 = vpop.f32.mrb[0].mxu0
        %v3501 = vadd.f32 %v3085, %v3500
        %3502 = vmatprep.mubr.bf16.mxu0 0
        %3503 = vmatmul.mubr.bf16.gmra.mrb[0].mxu0 %v3306
        %v3504 = vpop.f32.mrb[0].mxu0
        %v3505 = vadd.f32 %v3081, %v3504
        %v3506 = vpop.f32.mrb[0].mxu0
        %v3507 = vadd.f32 %v3085, %v3506
        %v3508 = vpop.f32.mrb[0].mxu0
        %v3509 = vadd.f32 %v3081, %v3508
        %v3510 = vpop.f32.mrb[0].mxu0
        %v3511 = vadd.f32 %v3085, %v3510
        %3512 = vmatprep.mubr.bf16.mxu0 0
        %3513 = vmatmul.mubr.bf16.gmra.mrb[0].mxu0 %v3309
        %v3514 = vpop.f32.mrb[0].mxu0
        %v3515 = vadd.f32 %v3081, %v3514
        %v3516 = vpop.f32.mrb[0].mxu0
        %v3517 = vadd.f32 %v3085, %v3516
        %v3518 = vpop.f32.mrb[0].mxu0
        %v3519 = vadd.f32 %v3081, %v3518
        %v3520 = vpop.f32.mrb[0].mxu0
        %v3521 = vadd.f32 %v3085, %v3520
        %3522 = vmatprep.mubr.bf16.mxu0 0
        %3523 = vmatmul.mubr.bf16.gmra.mrb[0].mxu0 %v3312
        %v3524 = vpop.f32.mrb[0].mxu0
        %v3525 = vadd.f32 %v3081, %v3524
        %v3526 = vpop.f32.mrb[0].mxu0
        %v3527 = vadd.f32 %v3085, %v3526
        %v3528 = vpop.f32.mrb[0].mxu0
        %v3529 = vadd.f32 %v3081, %v3528
        %v3530 = vpop.f32.mrb[0].mxu0
        %v3531 = vadd.f32 %v3085, %v3530
        %3532 = vdwg.mxu0
        %3533 = vmatprep.subr.bf16.mxu0 %v3245
        %3534 = vmatpush1.bf16.msra.mxu0 %v3244
        %3535 = vmatprep.subr.bf16.mxu0 %v3261
        %3536 = vmatpush1.bf16.msra.mxu0 %v3260
        %3537 = vmatprep.subr.bf16.mxu0 0
        %3538 = vmatpush1.bf16.msra.mxu0 0
        %3539 = vmatprep.subr.bf16.mxu0 0
        %3540 = vmatpush1.bf16.msra.mxu0 0
        %3541 = vmatprep.subr.bf16.mxu0 0
        %3542 = vmatpush1.bf16.msra.mxu0 0
        %3543 = vmatprep.subr.bf16.mxu0 0
        %3544 = vmatpush1.bf16.msra.mxu0 0
        %3545 = vmatprep.subr.bf16.mxu0 0
        %3546 = vmatpush1.bf16.msra.mxu0 0
        %3547 = vmatprep.subr.bf16.mxu0 0
        %3548 = vmatpush1.bf16.msra.mxu0 0
        %3549 = vmatprep.subr.bf16.mxu0 0
        %3550 = vmatpush1.bf16.msra.mxu0 0
        %3551 = vmatprep.subr.bf16.mxu0 0
        %3552 = vmatpush1.bf16.msra.mxu0 0
        %3553 = vmatprep.subr.bf16.mxu0 0
        %3554 = vmatpush1.bf16.msra.mxu0 0
        %3555 = vmatprep.subr.bf16.mxu0 0
        %3556 = vmatpush1.bf16.msra.mxu0 0
        %3557 = vmatprep.subr.bf16.mxu0 0
        %3558 = vmatpush1.bf16.msra.mxu0 0
        %3559 = vmatprep.subr.bf16.mxu0 0
        %3560 = vmatpush1.bf16.msra.mxu0 0
        %3561 = vmatprep.subr.bf16.mxu0 0
        %3562 = vmatpush1.bf16.msra.mxu0 0
        %3563 = vmatprep.subr.bf16.mxu0 0
        %3564 = vmatpush1.bf16.msra.mxu0 0
        %3565 = vmatprep.mubr.bf16.mxu0 0
        %3566 = vmatmul.mubr.bf16.gmra.mrb[0].mxu0 %v3303
        %v3567 = vpop.f32.mrb[0].mxu0
        %v3568 = vadd.f32 %v3089, %v3567
        %v3569 = vpop.f32.mrb[0].mxu0
        %v3570 = vadd.f32 %v3093, %v3569
        %v3571 = vpop.f32.mrb[0].mxu0
        %v3572 = vadd.f32 %v3089, %v3571
        %v3573 = vpop.f32.mrb[0].mxu0
        %v3574 = vadd.f32 %v3093, %v3573
        %3575 = vmatprep.mubr.bf16.mxu0 0
        %3576 = vmatmul.mubr.bf16.gmra.mrb[0].mxu0 %v3306
        %v3577 = vpop.f32.mrb[0].mxu0
        %v3578 = vadd.f32 %v3089, %v3577
        %v3579 = vpop.f32.mrb[0].mxu0
        %v3580 = vadd.f32 %v3093, %v3579
        %v3581 = vpop.f32.mrb[0].mxu0
        %v3582 = vadd.f32 %v3089, %v3581
        %v3583 = vpop.f32.mrb[0].mxu0
        %v3584 = vadd.f32 %v3093, %v3583
        %3585 = vmatprep.mubr.bf16.mxu0 0
        %3586 = vmatmul.mubr.bf16.gmra.mrb[0].mxu0 %v3309
        %v3587 = vpop.f32.mrb[0].mxu0
        %v3588 = vadd.f32 %v3089, %v3587
        %v3589 = vpop.f32.mrb[0].mxu0
        %v3590 = vadd.f32 %v3093, %v3589
        %v3591 = vpop.f32.mrb[0].mxu0
        %v3592 = vadd.f32 %v3089, %v3591
        %v3593 = vpop.f32.mrb[0].mxu0
        %v3594 = vadd.f32 %v3093, %v3593
        %3595 = vmatprep.mubr.bf16.mxu0 0
        %3596 = vmatmul.mubr.bf16.gmra.mrb[0].mxu0 %v3312
        %v3597 = vpop.f32.mrb[0].mxu0
        %v3598 = vadd.f32 %v3089, %v3597
        %v3599 = vpop.f32.mrb[0].mxu0
        %v3600 = vadd.f32 %v3093, %v3599
        %v3601 = vpop.f32.mrb[0].mxu0
        %v3602 = vadd.f32 %v3089, %v3601
        %v3603 = vpop.f32.mrb[0].mxu0
        %v3604 = vadd.f32 %v3093, %v3603
        %3605 = vdwg.mxu0
        %3606 = vmatprep.subr.bf16.mxu0 %v3247
        %3607 = vmatpush1.bf16.msra.mxu0 %v3246
        %3608 = vmatprep.subr.bf16.mxu0 %v3263
        %3609 = vmatpush1.bf16.msra.mxu0 %v3262
        %3610 = vmatprep.subr.bf16.mxu0 0
        %3611 = vmatpush1.bf16.msra.mxu0 0
        %3612 = vmatprep.subr.bf16.mxu0 0
        %3613 = vmatpush1.bf16.msra.mxu0 0
        %3614 = vmatprep.subr.bf16.mxu0 0
        %3615 = vmatpush1.bf16.msra.mxu0 0
        %3616 = vmatprep.subr.bf16.mxu0 0
        %3617 = vmatpush1.bf16.msra.mxu0 0
        %3618 = vmatprep.subr.bf16.mxu0 0
        %3619 = vmatpush1.bf16.msra.mxu0 0
        %3620 = vmatprep.subr.bf16.mxu0 0
        %3621 = vmatpush1.bf16.msra.mxu0 0
        %3622 = vmatprep.subr.bf16.mxu0 0
        %3623 = vmatpush1.bf16.msra.mxu0 0
        %3624 = vmatprep.subr.bf16.mxu0 0
        %3625 = vmatpush1.bf16.msra.mxu0 0
        %3626 = vmatprep.subr.bf16.mxu0 0
        %3627 = vmatpush1.bf16.msra.mxu0 0
        %3628 = vmatprep.subr.bf16.mxu0 0
        %3629 = vmatpush1.bf16.msra.mxu0 0
        %3630 = vmatprep.subr.bf16.mxu0 0
        %3631 = vmatpush1.bf16.msra.mxu0 0
        %3632 = vmatprep.subr.bf16.mxu0 0
        %3633 = vmatpush1.bf16.msra.mxu0 0
        %3634 = vmatprep.subr.bf16.mxu0 0
        %3635 = vmatpush1.bf16.msra.mxu0 0
        %3636 = vmatprep.subr.bf16.mxu0 0
        %3637 = vmatpush1.bf16.msra.mxu0 0
        %3638 = vmatprep.mubr.bf16.mxu0 0
        %3639 = vmatmul.mubr.bf16.gmra.mrb[0].mxu0 %v3303
        %v3640 = vpop.f32.mrb[0].mxu0
        %v3641 = vadd.f32 %v3097, %v3640
        %v3642 = vpop.f32.mrb[0].mxu0
        %v3643 = vadd.f32 %v3101, %v3642
        %v3644 = vpop.f32.mrb[0].mxu0
        %v3645 = vadd.f32 %v3097, %v3644
        %v3646 = vpop.f32.mrb[0].mxu0
        %v3647 = vadd.f32 %v3101, %v3646
        %3648 = vmatprep.mubr.bf16.mxu0 0
        %3649 = vmatmul.mubr.bf16.gmra.mrb[0].mxu0 %v3306
        %v3650 = vpop.f32.mrb[0].mxu0
        %v3651 = vadd.f32 %v3097, %v3650
        %v3652 = vpop.f32.mrb[0].mxu0
        %v3653 = vadd.f32 %v3101, %v3652
        %v3654 = vpop.f32.mrb[0].mxu0
        %v3655 = vadd.f32 %v3097, %v3654
        %v3656 = vpop.f32.mrb[0].mxu0
        %v3657 = vadd.f32 %v3101, %v3656
        %3658 = vmatprep.mubr.bf16.mxu0 0
        %3659 = vmatmul.mubr.bf16.gmra.mrb[0].mxu0 %v3309
        %v3660 = vpop.f32.mrb[0].mxu0
        %v3661 = vadd.f32 %v3097, %v3660
        %v3662 = vpop.f32.mrb[0].mxu0
        %v3663 = vadd.f32 %v3101, %v3662
        %v3664 = vpop.f32.mrb[0].mxu0
        %v3665 = vadd.f32 %v3097, %v3664
        %v3666 = vpop.f32.mrb[0].mxu0
        %v3667 = vadd.f32 %v3101, %v3666
        %3668 = vmatprep.mubr.bf16.mxu0 0
        %3669 = vmatmul.mubr.bf16.gmra.mrb[0].mxu0 %v3312
        %v3670 = vpop.f32.mrb[0].mxu0
        %v3671 = vadd.f32 %v3097, %v3670
        %v3672 = vpop.f32.mrb[0].mxu0
        %v3673 = vadd.f32 %v3101, %v3672
        %v3674 = vpop.f32.mrb[0].mxu0
        %v3675 = vadd.f32 %v3097, %v3674
        %v3676 = vpop.f32.mrb[0].mxu0
        %v3677 = vadd.f32 %v3101, %v3676
        %3678 = vdwg.mxu0
        %3679 = vmatprep.subr.bf16.mxu0 %v3249
        %3680 = vmatpush1.bf16.msra.mxu0 %v3248
        %3681 = vmatprep.subr.bf16.mxu0 %v3265
        %3682 = vmatpush1.bf16.msra.mxu0 %v3264
        %3683 = vmatprep.subr.bf16.mxu0 0
        %3684 = vmatpush1.bf16.msra.mxu0 0
        %3685 = vmatprep.subr.bf16.mxu0 0
        %3686 = vmatpush1.bf16.msra.mxu0 0
        %3687 = vmatprep.subr.bf16.mxu0 0
        %3688 = vmatpush1.bf16.msra.mxu0 0
        %3689 = vmatprep.subr.bf16.mxu0 0
        %3690 = vmatpush1.bf16.msra.mxu0 0
        %3691 = vmatprep.subr.bf16.mxu0 0
        %3692 = vmatpush1.bf16.msra.mxu0 0
        %3693 = vmatprep.subr.bf16.mxu0 0
        %3694 = vmatpush1.bf16.msra.mxu0 0
        %3695 = vmatprep.subr.bf16.mxu0 0
        %3696 = vmatpush1.bf16.msra.mxu0 0
        %3697 = vmatprep.subr.bf16.mxu0 0
        %3698 = vmatpush1.bf16.msra.mxu0 0
        %3699 = vmatprep.subr.bf16.mxu0 0
        %3700 = vmatpush1.bf16.msra.mxu0 0
        %3701 = vmatprep.subr.bf16.mxu0 0
        %3702 = vmatpush1.bf16.msra.mxu0 0
        %3703 = vmatprep.subr.bf16.mxu0 0
        %3704 = vmatpush1.bf16.msra.mxu0 0
        %3705 = vmatprep.subr.bf16.mxu0 0
        %3706 = vmatpush1.bf16.msra.mxu0 0
        %3707 = vmatprep.subr.bf16.mxu0 0
        %3708 = vmatpush1.bf16.msra.mxu0 0
        %3709 = vmatprep.subr.bf16.mxu0 0
        %3710 = vmatpush1.bf16.msra.mxu0 0
        %3711 = vmatprep.mubr.bf16.mxu0 0
        %3712 = vmatmul.mubr.bf16.gmra.mrb[0].mxu0 %v3303
        %v3713 = vpop.f32.mrb[0].mxu0
        %v3714 = vadd.f32 %v3105, %v3713
        %v3715 = vpop.f32.mrb[0].mxu0
        %v3716 = vadd.f32 %v3109, %v3715
        %v3717 = vpop.f32.mrb[0].mxu0
        %v3718 = vadd.f32 %v3105, %v3717
        %v3719 = vpop.f32.mrb[0].mxu0
        %v3720 = vadd.f32 %v3109, %v3719
        %3721 = vmatprep.mubr.bf16.mxu0 0
        %3722 = vmatmul.mubr.bf16.gmra.mrb[0].mxu0 %v3306
        %v3723 = vpop.f32.mrb[0].mxu0
        %v3724 = vadd.f32 %v3105, %v3723
        %v3725 = vpop.f32.mrb[0].mxu0
        %v3726 = vadd.f32 %v3109, %v3725
        %v3727 = vpop.f32.mrb[0].mxu0
        %v3728 = vadd.f32 %v3105, %v3727
        %v3729 = vpop.f32.mrb[0].mxu0
        %v3730 = vadd.f32 %v3109, %v3729
        %3731 = vmatprep.mubr.bf16.mxu0 0
        %3732 = vmatmul.mubr.bf16.gmra.mrb[0].mxu0 %v3309
        %v3733 = vpop.f32.mrb[0].mxu0
        %v3734 = vadd.f32 %v3105, %v3733
        %v3735 = vpop.f32.mrb[0].mxu0
        %v3736 = vadd.f32 %v3109, %v3735
        %v3737 = vpop.f32.mrb[0].mxu0
        %v3738 = vadd.f32 %v3105, %v3737
        %v3739 = vpop.f32.mrb[0].mxu0
        %v3740 = vadd.f32 %v3109, %v3739
        %3741 = vmatprep.mubr.bf16.mxu0 0
        %3742 = vmatmul.mubr.bf16.gmra.mrb[0].mxu0 %v3312
        %v3743 = vpop.f32.mrb[0].mxu0
        %v3744 = vadd.f32 %v3105, %v3743
        %v3745 = vpop.f32.mrb[0].mxu0
        %v3746 = vadd.f32 %v3109, %v3745
        %v3747 = vpop.f32.mrb[0].mxu0
        %v3748 = vadd.f32 %v3105, %v3747
        %v3749 = vpop.f32.mrb[0].mxu0
        %v3750 = vadd.f32 %v3109, %v3749
        %3751 = vdwg.mxu0
        %3752 = vmatprep.subr.bf16.mxu0 %v3251
        %3753 = vmatpush1.bf16.msra.mxu0 %v3250
        %3754 = vmatprep.subr.bf16.mxu0 %v3267
        %3755 = vmatpush1.bf16.msra.mxu0 %v3266
        %3756 = vmatprep.subr.bf16.mxu0 0
        %3757 = vmatpush1.bf16.msra.mxu0 0
        %3758 = vmatprep.subr.bf16.mxu0 0
        %3759 = vmatpush1.bf16.msra.mxu0 0
        %3760 = vmatprep.subr.bf16.mxu0 0
        %3761 = vmatpush1.bf16.msra.mxu0 0
        %3762 = vmatprep.subr.bf16.mxu0 0
        %3763 = vmatpush1.bf16.msra.mxu0 0
        %3764 = vmatprep.subr.bf16.mxu0 0
        %3765 = vmatpush1.bf16.msra.mxu0 0
        %3766 = vmatprep.subr.bf16.mxu0 0
        %3767 = vmatpush1.bf16.msra.mxu0 0
        %3768 = vmatprep.subr.bf16.mxu0 0
        %3769 = vmatpush1.bf16.msra.mxu0 0
        %3770 = vmatprep.subr.bf16.mxu0 0
        %3771 = vmatpush1.bf16.msra.mxu0 0
        %3772 = vmatprep.subr.bf16.mxu0 0
        %3773 = vmatpush1.bf16.msra.mxu0 0
        %3774 = vmatprep.subr.bf16.mxu0 0
        %3775 = vmatpush1.bf16.msra.mxu0 0
        %3776 = vmatprep.subr.bf16.mxu0 0
        %3777 = vmatpush1.bf16.msra.mxu0 0
        %3778 = vmatprep.subr.bf16.mxu0 0
        %3779 = vmatpush1.bf16.msra.mxu0 0
        %3780 = vmatprep.subr.bf16.mxu0 0
        %3781 = vmatpush1.bf16.msra.mxu0 0
        %3782 = vmatprep.subr.bf16.mxu0 0
        %3783 = vmatpush1.bf16.msra.mxu0 0
        %3784 = vmatprep.mubr.bf16.mxu0 0
        %3785 = vmatmul.mubr.bf16.gmra.mrb[0].mxu0 %v3303
        %v3786 = vpop.f32.mrb[0].mxu0
        %v3787 = vadd.f32 %v3113, %v3786
        %v3788 = vpop.f32.mrb[0].mxu0
        %v3789 = vadd.f32 %v3117, %v3788
        %v3790 = vpop.f32.mrb[0].mxu0
        %v3791 = vadd.f32 %v3113, %v3790
        %v3792 = vpop.f32.mrb[0].mxu0
        %v3793 = vadd.f32 %v3117, %v3792
        %3794 = vmatprep.mubr.bf16.mxu0 0
        %3795 = vmatmul.mubr.bf16.gmra.mrb[0].mxu0 %v3306
        %v3796 = vpop.f32.mrb[0].mxu0
        %v3797 = vadd.f32 %v3113, %v3796
        %v3798 = vpop.f32.mrb[0].mxu0
        %v3799 = vadd.f32 %v3117, %v3798
        %v3800 = vpop.f32.mrb[0].mxu0
        %v3801 = vadd.f32 %v3113, %v3800
        %v3802 = vpop.f32.mrb[0].mxu0
        %v3803 = vadd.f32 %v3117, %v3802
        %3804 = vmatprep.mubr.bf16.mxu0 0
        %3805 = vmatmul.mubr.bf16.gmra.mrb[0].mxu0 %v3309
        %v3806 = vpop.f32.mrb[0].mxu0
        %v3807 = vadd.f32 %v3113, %v3806
        %v3808 = vpop.f32.mrb[0].mxu0
        %v3809 = vadd.f32 %v3117, %v3808
        %v3810 = vpop.f32.mrb[0].mxu0
        %v3811 = vadd.f32 %v3113, %v3810
        %v3812 = vpop.f32.mrb[0].mxu0
        %v3813 = vadd.f32 %v3117, %v3812
        %3814 = vmatprep.mubr.bf16.mxu0 0
        %3815 = vmatmul.mubr.bf16.gmra.mrb[0].mxu0 %v3312
        %v3816 = vpop.f32.mrb[0].mxu0
        %v3817 = vadd.f32 %v3113, %v3816
        %v3818 = vpop.f32.mrb[0].mxu0
        %v3819 = vadd.f32 %v3117, %v3818
        %v3820 = vpop.f32.mrb[0].mxu0
        %v3821 = vadd.f32 %v3113, %v3820
        %v3822 = vpop.f32.mrb[0].mxu0
        %v3823 = vadd.f32 %v3117, %v3822
        %3824 = vdwg.mxu0
        %3825 = vmatprep.subr.bf16.mxu0 %v3253
        %3826 = vmatpush1.bf16.msra.mxu0 %v3252
        %3827 = vmatprep.subr.bf16.mxu0 %v3269
        %3828 = vmatpush1.bf16.msra.mxu0 %v3268
        %3829 = vmatprep.subr.bf16.mxu0 0
        %3830 = vmatpush1.bf16.msra.mxu0 0
        %3831 = vmatprep.subr.bf16.mxu0 0
        %3832 = vmatpush1.bf16.msra.mxu0 0
        %3833 = vmatprep.subr.bf16.mxu0 0
        %3834 = vmatpush1.bf16.msra.mxu0 0
        %3835 = vmatprep.subr.bf16.mxu0 0
        %3836 = vmatpush1.bf16.msra.mxu0 0
        %3837 = vmatprep.subr.bf16.mxu0 0
        %3838 = vmatpush1.bf16.msra.mxu0 0
        %3839 = vmatprep.subr.bf16.mxu0 0
        %3840 = vmatpush1.bf16.msra.mxu0 0
        %3841 = vmatprep.subr.bf16.mxu0 0
        %3842 = vmatpush1.bf16.msra.mxu0 0
        %3843 = vmatprep.subr.bf16.mxu0 0
        %3844 = vmatpush1.bf16.msra.mxu0 0
        %3845 = vmatprep.subr.bf16.mxu0 0
        %3846 = vmatpush1.bf16.msra.mxu0 0
        %3847 = vmatprep.subr.bf16.mxu0 0
        %3848 = vmatpush1.bf16.msra.mxu0 0
        %3849 = vmatprep.subr.bf16.mxu0 0
        %3850 = vmatpush1.bf16.msra.mxu0 0
        %3851 = vmatprep.subr.bf16.mxu0 0
        %3852 = vmatpush1.bf16.msra.mxu0 0
        %3853 = vmatprep.subr.bf16.mxu0 0
        %3854 = vmatpush1.bf16.msra.mxu0 0
        %3855 = vmatprep.subr.bf16.mxu0 0
        %3856 = vmatpush1.bf16.msra.mxu0 0
        %3857 = vmatprep.mubr.bf16.mxu0 0
        %3858 = vmatmul.mubr.bf16.gmra.mrb[0].mxu0 %v3303
        %v3859 = vpop.f32.mrb[0].mxu0
        %v3860 = vadd.f32 %v3121, %v3859
        %v3861 = vpop.f32.mrb[0].mxu0
        %v3862 = vadd.f32 %v3125, %v3861
        %v3863 = vpop.f32.mrb[0].mxu0
        %v3864 = vadd.f32 %v3121, %v3863
        %v3865 = vpop.f32.mrb[0].mxu0
        %v3866 = vadd.f32 %v3125, %v3865
        %3867 = vmatprep.mubr.bf16.mxu0 0
        %3868 = vmatmul.mubr.bf16.gmra.mrb[0].mxu0 %v3306
        %v3869 = vpop.f32.mrb[0].mxu0
        %v3870 = vadd.f32 %v3121, %v3869
        %v3871 = vpop.f32.mrb[0].mxu0
        %v3872 = vadd.f32 %v3125, %v3871
        %v3873 = vpop.f32.mrb[0].mxu0
        %v3874 = vadd.f32 %v3121, %v3873
        %v3875 = vpop.f32.mrb[0].mxu0
        %v3876 = vadd.f32 %v3125, %v3875
        %3877 = vmatprep.mubr.bf16.mxu0 0
        %3878 = vmatmul.mubr.bf16.gmra.mrb[0].mxu0 %v3309
        %v3879 = vpop.f32.mrb[0].mxu0
        %v3880 = vadd.f32 %v3121, %v3879
        %v3881 = vpop.f32.mrb[0].mxu0
        %v3882 = vadd.f32 %v3125, %v3881
        %v3883 = vpop.f32.mrb[0].mxu0
        %v3884 = vadd.f32 %v3121, %v3883
        %v3885 = vpop.f32.mrb[0].mxu0
        %v3886 = vadd.f32 %v3125, %v3885
        %3887 = vmatprep.mubr.bf16.mxu0 0
        %3888 = vmatmul.mubr.bf16.gmra.mrb[0].mxu0 %v3312
        %v3889 = vpop.f32.mrb[0].mxu0
        %v3890 = vadd.f32 %v3121, %v3889
        %v3891 = vpop.f32.mrb[0].mxu0
        %v3892 = vadd.f32 %v3125, %v3891
        %v3893 = vpop.f32.mrb[0].mxu0
        %v3894 = vadd.f32 %v3121, %v3893
        %v3895 = vpop.f32.mrb[0].mxu0
        %v3896 = vadd.f32 %v3125, %v3895
        %3897 = vdwg.mxu0
        %v3898 = vmax.f32 %v3349, 0.0
        %v3899 = vmax.f32 %v3351, 0.0
        %v3900 = vmax.f32 %v3422, 0.0
        %v3901 = vmax.f32 %v3424, 0.0
        %v3902 = vmax.f32 %v3495, 0.0
        %v3903 = vmax.f32 %v3497, 0.0
        %v3904 = vmax.f32 %v3568, 0.0
        %v3905 = vmax.f32 %v3570, 0.0
        %v3906 = vmax.f32 %v3641, 0.0
        %v3907 = vmax.f32 %v3643, 0.0
        %v3908 = vmax.f32 %v3714, 0.0
        %v3909 = vmax.f32 %v3716, 0.0
        %v3910 = vmax.f32 %v3787, 0.0
        %v3911 = vmax.f32 %v3789, 0.0
        %v3912 = vmax.f32 %v3860, 0.0
        %v3913 = vmax.f32 %v3862, 0.0
        %v3914 = vmax.f32 %v3353, 0.0
        %v3915 = vmax.f32 %v3355, 0.0
        %v3916 = vmax.f32 %v3426, 0.0
        %v3917 = vmax.f32 %v3428, 0.0
        %v3918 = vmax.f32 %v3499, 0.0
        %v3919 = vmax.f32 %v3501, 0.0
        %v3920 = vmax.f32 %v3572, 0.0
        %v3921 = vmax.f32 %v3574, 0.0
        %v3922 = vmax.f32 %v3645, 0.0
        %v3923 = vmax.f32 %v3647, 0.0
        %v3924 = vmax.f32 %v3718, 0.0
        %v3925 = vmax.f32 %v3720, 0.0
        %v3926 = vmax.f32 %v3791, 0.0
        %v3927 = vmax.f32 %v3793, 0.0
        %v3928 = vmax.f32 %v3864, 0.0
        %v3929 = vmax.f32 %v3866, 0.0
        %v3930 = vmax.f32 %v3359, 0.0
        %v3931 = vmax.f32 %v3361, 0.0
        %v3932 = vmax.f32 %v3432, 0.0
        %v3933 = vmax.f32 %v3434, 0.0
        %v3934 = vmax.f32 %v3505, 0.0
        %v3935 = vmax.f32 %v3507, 0.0
        %v3936 = vmax.f32 %v3578, 0.0
        %v3937 = vmax.f32 %v3580, 0.0
        %v3938 = vmax.f32 %v3651, 0.0
        %v3939 = vmax.f32 %v3653, 0.0
        %v3940 = vmax.f32 %v3724, 0.0
        %v3941 = vmax.f32 %v3726, 0.0
        %v3942 = vmax.f32 %v3797, 0.0
        %v3943 = vmax.f32 %v3799, 0.0
        %v3944 = vmax.f32 %v3870, 0.0
        %v3945 = vmax.f32 %v3872, 0.0
        %v3946 = vmax.f32 %v3363, 0.0
        %v3947 = vmax.f32 %v3365, 0.0
        %v3948 = vmax.f32 %v3436, 0.0
        %v3949 = vmax.f32 %v3438, 0.0
        %v3950 = vmax.f32 %v3509, 0.0
        %v3951 = vmax.f32 %v3511, 0.0
        %v3952 = vmax.f32 %v3582, 0.0
        %v3953 = vmax.f32 %v3584, 0.0
        %v3954 = vmax.f32 %v3655, 0.0
        %v3955 = vmax.f32 %v3657, 0.0
        %v3956 = vmax.f32 %v3728, 0.0
        %v3957 = vmax.f32 %v3730, 0.0
        %v3958 = vmax.f32 %v3801, 0.0
        %v3959 = vmax.f32 %v3803, 0.0
        %v3960 = vmax.f32 %v3874, 0.0
        %v3961 = vmax.f32 %v3876, 0.0
        %v3962 = vmax.f32 %v3369, 0.0
        %v3963 = vmax.f32 %v3371, 0.0
        %v3964 = vmax.f32 %v3442, 0.0
        %v3965 = vmax.f32 %v3444, 0.0
        %v3966 = vmax.f32 %v3515, 0.0
        %v3967 = vmax.f32 %v3517, 0.0
        %v3968 = vmax.f32 %v3588, 0.0
        %v3969 = vmax.f32 %v3590, 0.0
        %v3970 = vmax.f32 %v3661, 0.0
        %v3971 = vmax.f32 %v3663, 0.0
        %v3972 = vmax.f32 %v3734, 0.0
        %v3973 = vmax.f32 %v3736, 0.0
        %v3974 = vmax.f32 %v3807, 0.0
        %v3975 = vmax.f32 %v3809, 0.0
        %v3976 = vmax.f32 %v3880, 0.0
        %v3977 = vmax.f32 %v3882, 0.0
        %v3978 = vmax.f32 %v3373, 0.0
        %v3979 = vmax.f32 %v3375, 0.0
        %v3980 = vmax.f32 %v3446, 0.0
        %v3981 = vmax.f32 %v3448, 0.0
        %v3982 = vmax.f32 %v3519, 0.0
        %v3983 = vmax.f32 %v3521, 0.0
        %v3984 = vmax.f32 %v3592, 0.0
        %v3985 = vmax.f32 %v3594, 0.0
        %v3986 = vmax.f32 %v3665, 0.0
        %v3987 = vmax.f32 %v3667, 0.0
        %v3988 = vmax.f32 %v3738, 0.0
        %v3989 = vmax.f32 %v3740, 0.0
        %v3990 = vmax.f32 %v3811, 0.0
        %v3991 = vmax.f32 %v3813, 0.0
        %v3992 = vmax.f32 %v3884, 0.0
        %v3993 = vmax.f32 %v3886, 0.0
        %v3994 = vmax.f32 %v3379, 0.0
        %v3995 = vmax.f32 %v3381, 0.0
        %v3996 = vmax.f32 %v3452, 0.0
        %v3997 = vmax.f32 %v3454, 0.0
        %v3998 = vmax.f32 %v3525, 0.0
        %v3999 = vmax.f32 %v3527, 0.0
        %v4000 = vmax.f32 %v3598, 0.0
        %v4001 = vmax.f32 %v3600, 0.0
        %v4002 = vmax.f32 %v3671, 0.0
        %v4003 = vmax.f32 %v3673, 0.0
        %v4004 = vmax.f32 %v3744, 0.0
        %v4005 = vmax.f32 %v3746, 0.0
        %v4006 = vmax.f32 %v3817, 0.0
        %v4007 = vmax.f32 %v3819, 0.0
        %v4008 = vmax.f32 %v3890, 0.0
        %v4009 = vmax.f32 %v3892, 0.0
        %v4010 = vmax.f32 %v3383, 0.0
        %v4011 = vmax.f32 %v3385, 0.0
        %v4012 = vmax.f32 %v3456, 0.0
        %v4013 = vmax.f32 %v3458, 0.0
        %v4014 = vmax.f32 %v3529, 0.0
        %v4015 = vmax.f32 %v3531, 0.0
        %v4016 = vmax.f32 %v3602, 0.0
        %v4017 = vmax.f32 %v3604, 0.0
        %v4018 = vmax.f32 %v3675, 0.0
        %v4019 = vmax.f32 %v3677, 0.0
        %v4020 = vmax.f32 %v3748, 0.0
        %v4021 = vmax.f32 %v3750, 0.0
        %v4022 = vmax.f32 %v3821, 0.0
        %v4023 = vmax.f32 %v3823, 0.0
        %v4024 = vmax.f32 %v3894, 0.0
        %v4025 = vmax.f32 %v3896, 0.0
        %v4026 = vpack.c.bf16 %v3914, %v3898
        %v4027 = vpack.c.bf16 %v3915, %v3899
        %v4028 = vpack.c.bf16 %v3916, %v3900
        %v4029 = vpack.c.bf16 %v3917, %v3901
        %v4030 = vpack.c.bf16 %v3918, %v3902
        %v4031 = vpack.c.bf16 %v3919, %v3903
        %v4032 = vpack.c.bf16 %v3920, %v3904
        %v4033 = vpack.c.bf16 %v3921, %v3905
        %v4034 = vpack.c.bf16 %v3922, %v3906
        %v4035 = vpack.c.bf16 %v3923, %v3907
        %v4036 = vpack.c.bf16 %v3924, %v3908
        %v4037 = vpack.c.bf16 %v3925, %v3909
        %v4038 = vpack.c.bf16 %v3926, %v3910
        %v4039 = vpack.c.bf16 %v3927, %v3911
        %v4040 = vpack.c.bf16 %v3928, %v3912
        %v4041 = vpack.c.bf16 %v3929, %v3913
        %v4042 = vpack.c.bf16 %v3946, %v3930
        %v4043 = vpack.c.bf16 %v3947, %v3931
        %v4044 = vpack.c.bf16 %v3948, %v3932
        %v4045 = vpack.c.bf16 %v3949, %v3933
        %v4046 = vpack.c.bf16 %v3950, %v3934
        %v4047 = vpack.c.bf16 %v3951, %v3935
        %v4048 = vpack.c.bf16 %v3952, %v3936
        %v4049 = vpack.c.bf16 %v3953, %v3937
        %v4050 = vpack.c.bf16 %v3954, %v3938
        %v4051 = vpack.c.bf16 %v3955, %v3939
        %v4052 = vpack.c.bf16 %v3956, %v3940
        %v4053 = vpack.c.bf16 %v3957, %v3941
        %v4054 = vpack.c.bf16 %v3958, %v3942
        %v4055 = vpack.c.bf16 %v3959, %v3943
        %v4056 = vpack.c.bf16 %v3960, %v3944
        %v4057 = vpack.c.bf16 %v3961, %v3945
        %v4058 = vpack.c.bf16 %v3978, %v3962
        %v4059 = vpack.c.bf16 %v3979, %v3963
        %v4060 = vpack.c.bf16 %v3980, %v3964
        %v4061 = vpack.c.bf16 %v3981, %v3965
        %v4062 = vpack.c.bf16 %v3982, %v3966
        %v4063 = vpack.c.bf16 %v3983, %v3967
        %v4064 = vpack.c.bf16 %v3984, %v3968
        %v4065 = vpack.c.bf16 %v3985, %v3969
        %v4066 = vpack.c.bf16 %v3986, %v3970
        %v4067 = vpack.c.bf16 %v3987, %v3971
        %v4068 = vpack.c.bf16 %v3988, %v3972
        %v4069 = vpack.c.bf16 %v3989, %v3973
        %v4070 = vpack.c.bf16 %v3990, %v3974
        %v4071 = vpack.c.bf16 %v3991, %v3975
        %v4072 = vpack.c.bf16 %v3992, %v3976
        %v4073 = vpack.c.bf16 %v3993, %v3977
        %v4074 = vpack.c.bf16 %v4010, %v3994
        %v4075 = vpack.c.bf16 %v4011, %v3995
        %v4076 = vpack.c.bf16 %v4012, %v3996
        %v4077 = vpack.c.bf16 %v4013, %v3997
        %v4078 = vpack.c.bf16 %v4014, %v3998
        %v4079 = vpack.c.bf16 %v4015, %v3999
        %v4080 = vpack.c.bf16 %v4016, %v4000
        %v4081 = vpack.c.bf16 %v4017, %v4001
        %v4082 = vpack.c.bf16 %v4018, %v4002
        %v4083 = vpack.c.bf16 %v4019, %v4003
        %v4084 = vpack.c.bf16 %v4020, %v4004
        %v4085 = vpack.c.bf16 %v4021, %v4005
        %v4086 = vpack.c.bf16 %v4022, %v4006
        %v4087 = vpack.c.bf16 %v4023, %v4007
        %v4088 = vpack.c.bf16 %v4024, %v4008
        %v4089 = vpack.c.bf16 %v4025, %v4009
        %v4090 = vld [vmem:[%s757] sm:$0xf]
        %v4091 = vld [vmem:[%s757 + $0x4] sm:$0xf]
        %v4092 = vld [vmem:[%s757 + $0x8] sm:$0xf]
        %v4093 = vld [vmem:[%s757 + $0xc] sm:$0xf]
        %v4094 = vld [vmem:[%s757 + $0x10] sm:$0xf]
        %v4095 = vld [vmem:[%s757 + $0x14] sm:$0xf]
        %v4096 = vld [vmem:[%s757 + $0x18] sm:$0xf]
        %v4097 = vld [vmem:[%s757 + $0x1c] sm:$0xf]
        %v4098 = vld [vmem:[%s757 + $0x20] sm:$0xf]
        %v4099 = vld [vmem:[%s757 + $0x24] sm:$0xf]
        %v4100 = vld [vmem:[%s757 + $0x28] sm:$0xf]
        %v4101 = vld [vmem:[%s757 + $0x2c] sm:$0xf]
        %v4102 = vld [vmem:[%s757 + $0x30] sm:$0xf]
        %v4103 = vld [vmem:[%s757 + $0x34] sm:$0xf]
        %v4104 = vld [vmem:[%s757 + $0x38] sm:$0xf]
        %v4105 = vld [vmem:[%s757 + $0x3c] sm:$0xf]
        %v4106 = vld [vmem:[%s757 + $0x40] sm:$0xf]
        %v4107 = vld [vmem:[%s757 + $0x44] sm:$0xf]
        %v4108 = vld [vmem:[%s757 + $0x48] sm:$0xf]
        %v4109 = vld [vmem:[%s757 + $0x4c] sm:$0xf]
        %v4110 = vld [vmem:[%s757 + $0x50] sm:$0xf]
        %v4111 = vld [vmem:[%s757 + $0x54] sm:$0xf]
        %v4112 = vld [vmem:[%s757 + $0x58] sm:$0xf]
        %v4113 = vld [vmem:[%s757 + $0x5c] sm:$0xf]
        %v4114 = vld [vmem:[%s757 + $0x60] sm:$0xf]
        %v4115 = vld [vmem:[%s757 + $0x64] sm:$0xf]
        %v4116 = vld [vmem:[%s757 + $0x68] sm:$0xf]
        %v4117 = vld [vmem:[%s757 + $0x6c] sm:$0xf]
        %v4118 = vld [vmem:[%s757 + $0x70] sm:$0xf]
        %v4119 = vld [vmem:[%s757 + $0x74] sm:$0xf]
        %v4120 = vld [vmem:[%s757 + $0x78] sm:$0xf]
        %v4121 = vld [vmem:[%s757 + $0x7c] sm:$0xf]
        %v4122 = vld [vmem:[%s757 + $0x80] sm:$0xf]
        %v4123 = vld [vmem:[%s757 + $0x84] sm:$0xf]
        %v4124 = vld [vmem:[%s757 + $0x88] sm:$0xf]
        %v4125 = vld [vmem:[%s757 + $0x8c] sm:$0xf]
        %v4126 = vld [vmem:[%s757 + $0x90] sm:$0xf]
        %v4127 = vld [vmem:[%s757 + $0x94] sm:$0xf]
        %v4128 = vld [vmem:[%s757 + $0x98] sm:$0xf]
        %v4129 = vld [vmem:[%s757 + $0x9c] sm:$0xf]
        %v4130 = vld [vmem:[%s757 + $0xa0] sm:$0xf]
        %v4131 = vld [vmem:[%s757 + $0xa4] sm:$0xf]
        %v4132 = vld [vmem:[%s757 + $0xa8] sm:$0xf]
        %v4133 = vld [vmem:[%s757 + $0xac] sm:$0xf]
        %v4134 = vld [vmem:[%s757 + $0xb0] sm:$0xf]
        %v4135 = vld [vmem:[%s757 + $0xb4] sm:$0xf]
        %v4136 = vld [vmem:[%s757 + $0xb8] sm:$0xf]
        %v4137 = vld [vmem:[%s757 + $0xbc] sm:$0xf]
        %v4138 = vld [vmem:[%s757 + $0xc0] sm:$0xf]
        %v4139 = vld [vmem:[%s757 + $0xc4] sm:$0xf]
        %v4140 = vld [vmem:[%s757 + $0xc8] sm:$0xf]
        %v4141 = vld [vmem:[%s757 + $0xcc] sm:$0xf]
        %v4142 = vld [vmem:[%s757 + $0xd0] sm:$0xf]
        %v4143 = vld [vmem:[%s757 + $0xd4] sm:$0xf]
        %v4144 = vld [vmem:[%s757 + $0xd8] sm:$0xf]
        %v4145 = vld [vmem:[%s757 + $0xdc] sm:$0xf]
        %v4146 = vld [vmem:[%s757 + $0xe0] sm:$0xf]
        %v4147 = vld [vmem:[%s757 + $0xe4] sm:$0xf]
        %v4148 = vld [vmem:[%s757 + $0xe8] sm:$0xf]
        %v4149 = vld [vmem:[%s757 + $0xec] sm:$0xf]
        %v4150 = vld [vmem:[%s757 + $0xf0] sm:$0xf]
        %v4151 = vld [vmem:[%s757 + $0xf4] sm:$0xf]
        %v4152 = vld [vmem:[%s757 + $0xf8] sm:$0xf]
        %v4153 = vld [vmem:[%s757 + $0xfc] sm:$0xf]
        %v4154 = vld [vmem:[%s757 + $0x100] sm:$0xf]
        %v4155 = vld [vmem:[%s757 + $0x104] sm:$0xf]
        %v4156 = vld [vmem:[%s757 + $0x108] sm:$0xf]
        %v4157 = vld [vmem:[%s757 + $0x10c] sm:$0xf]
        %v4158 = vld [vmem:[%s757 + $0x110] sm:$0xf]
        %v4159 = vld [vmem:[%s757 + $0x114] sm:$0xf]
        %v4160 = vld [vmem:[%s757 + $0x118] sm:$0xf]
        %v4161 = vld [vmem:[%s757 + $0x11c] sm:$0xf]
        %v4162 = vld [vmem:[%s757 + $0x120] sm:$0xf]
        %v4163 = vld [vmem:[%s757 + $0x124] sm:$0xf]
        %v4164 = vld [vmem:[%s757 + $0x128] sm:$0xf]
        %v4165 = vld [vmem:[%s757 + $0x12c] sm:$0xf]
        %v4166 = vld [vmem:[%s757 + $0x130] sm:$0xf]
        %v4167 = vld [vmem:[%s757 + $0x134] sm:$0xf]
        %v4168 = vld [vmem:[%s757 + $0x138] sm:$0xf]
        %v4169 = vld [vmem:[%s757 + $0x13c] sm:$0xf]
        %v4170 = vld [vmem:[%s757 + $0x140] sm:$0xf]
        %v4171 = vld [vmem:[%s757 + $0x144] sm:$0xf]
        %v4172 = vld [vmem:[%s757 + $0x148] sm:$0xf]
        %v4173 = vld [vmem:[%s757 + $0x14c] sm:$0xf]
        %v4174 = vld [vmem:[%s757 + $0x150] sm:$0xf]
        %v4175 = vld [vmem:[%s757 + $0x154] sm:$0xf]
        %v4176 = vld [vmem:[%s757 + $0x158] sm:$0xf]
        %v4177 = vld [vmem:[%s757 + $0x15c] sm:$0xf]
        %v4178 = vld [vmem:[%s757 + $0x160] sm:$0xf]
        %v4179 = vld [vmem:[%s757 + $0x164] sm:$0xf]
        %v4180 = vld [vmem:[%s757 + $0x168] sm:$0xf]
        %v4181 = vld [vmem:[%s757 + $0x16c] sm:$0xf]
        %v4182 = vld [vmem:[%s757 + $0x170] sm:$0xf]
        %v4183 = vld [vmem:[%s757 + $0x174] sm:$0xf]
        %v4184 = vld [vmem:[%s757 + $0x178] sm:$0xf]
        %v4185 = vld [vmem:[%s757 + $0x17c] sm:$0xf]
        %v4186 = vld [vmem:[%s757 + $0x180] sm:$0xf]
        %v4187 = vld [vmem:[%s757 + $0x184] sm:$0xf]
        %v4188 = vld [vmem:[%s757 + $0x188] sm:$0xf]
        %v4189 = vld [vmem:[%s757 + $0x18c] sm:$0xf]
        %v4190 = vld [vmem:[%s757 + $0x190] sm:$0xf]
        %v4191 = vld [vmem:[%s757 + $0x194] sm:$0xf]
        %v4192 = vld [vmem:[%s757 + $0x198] sm:$0xf]
        %v4193 = vld [vmem:[%s757 + $0x19c] sm:$0xf]
        %v4194 = vld [vmem:[%s757 + $0x1a0] sm:$0xf]
        %v4195 = vld [vmem:[%s757 + $0x1a4] sm:$0xf]
        %v4196 = vld [vmem:[%s757 + $0x1a8] sm:$0xf]
        %v4197 = vld [vmem:[%s757 + $0x1ac] sm:$0xf]
        %v4198 = vld [vmem:[%s757 + $0x1b0] sm:$0xf]
        %v4199 = vld [vmem:[%s757 + $0x1b4] sm:$0xf]
        %v4200 = vld [vmem:[%s757 + $0x1b8] sm:$0xf]
        %v4201 = vld [vmem:[%s757 + $0x1bc] sm:$0xf]
        %v4202 = vld [vmem:[%s757 + $0x1c0] sm:$0xf]
        %v4203 = vld [vmem:[%s757 + $0x1c4] sm:$0xf]
        %v4204 = vld [vmem:[%s757 + $0x1c8] sm:$0xf]
        %v4205 = vld [vmem:[%s757 + $0x1cc] sm:$0xf]
        %v4206 = vld [vmem:[%s757 + $0x1d0] sm:$0xf]
        %v4207 = vld [vmem:[%s757 + $0x1d4] sm:$0xf]
        %v4208 = vld [vmem:[%s757 + $0x1d8] sm:$0xf]
        %v4209 = vld [vmem:[%s757 + $0x1dc] sm:$0xf]
        %v4210 = vld [vmem:[%s757 + $0x1e0] sm:$0xf]
        %v4211 = vld [vmem:[%s757 + $0x1e4] sm:$0xf]
        %v4212 = vld [vmem:[%s757 + $0x1e8] sm:$0xf]
        %v4213 = vld [vmem:[%s757 + $0x1ec] sm:$0xf]
        %v4214 = vld [vmem:[%s757 + $0x1f0] sm:$0xf]
        %v4215 = vld [vmem:[%s757 + $0x1f4] sm:$0xf]
        %v4216 = vld [vmem:[%s757 + $0x1f8] sm:$0xf]
        %v4217 = vld [vmem:[%s757 + $0x1fc] sm:$0xf]
        %v4218 = vld [vmem:[%s757 + $0x200] sm:$0xf]
        %v4219 = vld [vmem:[%s757 + $0x204] sm:$0xf]
        %v4220 = vld [vmem:[%s757 + $0x208] sm:$0xf]
        %v4221 = vld [vmem:[%s757 + $0x20c] sm:$0xf]
        %v4222 = vld [vmem:[%s757 + $0x210] sm:$0xf]
        %v4223 = vld [vmem:[%s757 + $0x214] sm:$0xf]
        %v4224 = vld [vmem:[%s757 + $0x218] sm:$0xf]
        %v4225 = vld [vmem:[%s757 + $0x21c] sm:$0xf]
        %v4226 = vld [vmem:[%s757 + $0x220] sm:$0xf]
        %v4227 = vld [vmem:[%s757 + $0x224] sm:$0xf]
        %v4228 = vld [vmem:[%s757 + $0x228] sm:$0xf]
        %v4229 = vld [vmem:[%s757 + $0x22c] sm:$0xf]
        %v4230 = vld [vmem:[%s757 + $0x230] sm:$0xf]
        %v4231 = vld [vmem:[%s757 + $0x234] sm:$0xf]
        %v4232 = vld [vmem:[%s757 + $0x238] sm:$0xf]
        %v4233 = vld [vmem:[%s757 + $0x23c] sm:$0xf]
        %v4234 = vld [vmem:[%s757 + $0x240] sm:$0xf]
        %v4235 = vld [vmem:[%s757 + $0x244] sm:$0xf]
        %v4236 = vld [vmem:[%s757 + $0x248] sm:$0xf]
        %v4237 = vld [vmem:[%s757 + $0x24c] sm:$0xf]
        %v4238 = vld [vmem:[%s757 + $0x250] sm:$0xf]
        %v4239 = vld [vmem:[%s757 + $0x254] sm:$0xf]
        %v4240 = vld [vmem:[%s757 + $0x258] sm:$0xf]
        %v4241 = vld [vmem:[%s757 + $0x25c] sm:$0xf]
        %v4242 = vld [vmem:[%s757 + $0x260] sm:$0xf]
        %v4243 = vld [vmem:[%s757 + $0x264] sm:$0xf]
        %v4244 = vld [vmem:[%s757 + $0x268] sm:$0xf]
        %v4245 = vld [vmem:[%s757 + $0x26c] sm:$0xf]
        %v4246 = vld [vmem:[%s757 + $0x270] sm:$0xf]
        %v4247 = vld [vmem:[%s757 + $0x274] sm:$0xf]
        %v4248 = vld [vmem:[%s757 + $0x278] sm:$0xf]
        %v4249 = vld [vmem:[%s757 + $0x27c] sm:$0xf]
        %v4250 = vld [vmem:[%s757 + $0x280] sm:$0xf]
        %v4251 = vld [vmem:[%s757 + $0x284] sm:$0xf]
        %v4252 = vld [vmem:[%s757 + $0x288] sm:$0xf]
        %v4253 = vld [vmem:[%s757 + $0x28c] sm:$0xf]
        %v4254 = vld [vmem:[%s757 + $0x290] sm:$0xf]
        %v4255 = vld [vmem:[%s757 + $0x294] sm:$0xf]
        %v4256 = vld [vmem:[%s757 + $0x298] sm:$0xf]
        %v4257 = vld [vmem:[%s757 + $0x29c] sm:$0xf]
        %v4258 = vld [vmem:[%s757 + $0x2a0] sm:$0xf]
        %v4259 = vld [vmem:[%s757 + $0x2a4] sm:$0xf]
        %v4260 = vld [vmem:[%s757 + $0x2a8] sm:$0xf]
        %v4261 = vld [vmem:[%s757 + $0x2ac] sm:$0xf]
        %v4262 = vld [vmem:[%s757 + $0x2b0] sm:$0xf]
        %v4263 = vld [vmem:[%s757 + $0x2b4] sm:$0xf]
        %v4264 = vld [vmem:[%s757 + $0x2b8] sm:$0xf]
        %v4265 = vld [vmem:[%s757 + $0x2bc] sm:$0xf]
        %v4266 = vld [vmem:[%s757 + $0x2c0] sm:$0xf]
        %v4267 = vld [vmem:[%s757 + $0x2c4] sm:$0xf]
        %v4268 = vld [vmem:[%s757 + $0x2c8] sm:$0xf]
        %v4269 = vld [vmem:[%s757 + $0x2cc] sm:$0xf]
        %v4270 = vld [vmem:[%s757 + $0x2d0] sm:$0xf]
        %v4271 = vld [vmem:[%s757 + $0x2d4] sm:$0xf]
        %v4272 = vld [vmem:[%s757 + $0x2d8] sm:$0xf]
        %v4273 = vld [vmem:[%s757 + $0x2dc] sm:$0xf]
        %v4274 = vld [vmem:[%s757 + $0x2e0] sm:$0xf]
        %v4275 = vld [vmem:[%s757 + $0x2e4] sm:$0xf]
        %v4276 = vld [vmem:[%s757 + $0x2e8] sm:$0xf]
        %v4277 = vld [vmem:[%s757 + $0x2ec] sm:$0xf]
        %v4278 = vld [vmem:[%s757 + $0x2f0] sm:$0xf]
        %v4279 = vld [vmem:[%s757 + $0x2f4] sm:$0xf]
        %v4280 = vld [vmem:[%s757 + $0x2f8] sm:$0xf]
        %v4281 = vld [vmem:[%s757 + $0x2fc] sm:$0xf]
        %v4282 = vld [vmem:[%s757 + $0x300] sm:$0xf]
        %v4283 = vld [vmem:[%s757 + $0x304] sm:$0xf]
        %v4284 = vld [vmem:[%s757 + $0x308] sm:$0xf]
        %v4285 = vld [vmem:[%s757 + $0x30c] sm:$0xf]
        %v4286 = vld [vmem:[%s757 + $0x310] sm:$0xf]
        %v4287 = vld [vmem:[%s757 + $0x314] sm:$0xf]
        %v4288 = vld [vmem:[%s757 + $0x318] sm:$0xf]
        %v4289 = vld [vmem:[%s757 + $0x31c] sm:$0xf]
        %v4290 = vld [vmem:[%s757 + $0x320] sm:$0xf]
        %v4291 = vld [vmem:[%s757 + $0x324] sm:$0xf]
        %v4292 = vld [vmem:[%s757 + $0x328] sm:$0xf]
        %v4293 = vld [vmem:[%s757 + $0x32c] sm:$0xf]
        %v4294 = vld [vmem:[%s757 + $0x330] sm:$0xf]
        %v4295 = vld [vmem:[%s757 + $0x334] sm:$0xf]
        %v4296 = vld [vmem:[%s757 + $0x338] sm:$0xf]
        %v4297 = vld [vmem:[%s757 + $0x33c] sm:$0xf]
        %v4298 = vld [vmem:[%s757 + $0x340] sm:$0xf]
        %v4299 = vld [vmem:[%s757 + $0x344] sm:$0xf]
        %v4300 = vld [vmem:[%s757 + $0x348] sm:$0xf]
        %v4301 = vld [vmem:[%s757 + $0x34c] sm:$0xf]
        %v4302 = vld [vmem:[%s757 + $0x350] sm:$0xf]
        %v4303 = vld [vmem:[%s757 + $0x354] sm:$0xf]
        %v4304 = vld [vmem:[%s757 + $0x358] sm:$0xf]
        %v4305 = vld [vmem:[%s757 + $0x35c] sm:$0xf]
        %v4306 = vld [vmem:[%s757 + $0x360] sm:$0xf]
        %v4307 = vld [vmem:[%s757 + $0x364] sm:$0xf]
        %v4308 = vld [vmem:[%s757 + $0x368] sm:$0xf]
        %v4309 = vld [vmem:[%s757 + $0x36c] sm:$0xf]
        %v4310 = vld [vmem:[%s757 + $0x370] sm:$0xf]
        %v4311 = vld [vmem:[%s757 + $0x374] sm:$0xf]
        %v4312 = vld [vmem:[%s757 + $0x378] sm:$0xf]
        %v4313 = vld [vmem:[%s757 + $0x37c] sm:$0xf]
        %v4314 = vld [vmem:[%s757 + $0x380] sm:$0xf]
        %v4315 = vld [vmem:[%s757 + $0x384] sm:$0xf]
        %v4316 = vld [vmem:[%s757 + $0x388] sm:$0xf]
        %v4317 = vld [vmem:[%s757 + $0x38c] sm:$0xf]
        %v4318 = vld [vmem:[%s757 + $0x390] sm:$0xf]
        %v4319 = vld [vmem:[%s757 + $0x394] sm:$0xf]
        %v4320 = vld [vmem:[%s757 + $0x398] sm:$0xf]
        %v4321 = vld [vmem:[%s757 + $0x39c] sm:$0xf]
        %v4322 = vld [vmem:[%s757 + $0x3a0] sm:$0xf]
        %v4323 = vld [vmem:[%s757 + $0x3a4] sm:$0xf]
        %v4324 = vld [vmem:[%s757 + $0x3a8] sm:$0xf]
        %v4325 = vld [vmem:[%s757 + $0x3ac] sm:$0xf]
        %v4326 = vld [vmem:[%s757 + $0x3b0] sm:$0xf]
        %v4327 = vld [vmem:[%s757 + $0x3b4] sm:$0xf]
        %v4328 = vld [vmem:[%s757 + $0x3b8] sm:$0xf]
        %v4329 = vld [vmem:[%s757 + $0x3bc] sm:$0xf]
        %v4330 = vld [vmem:[%s757 + $0x3c0] sm:$0xf]
        %v4331 = vld [vmem:[%s757 + $0x3c4] sm:$0xf]
        %v4332 = vld [vmem:[%s757 + $0x3c8] sm:$0xf]
        %v4333 = vld [vmem:[%s757 + $0x3cc] sm:$0xf]
        %v4334 = vld [vmem:[%s757 + $0x3d0] sm:$0xf]
        %v4335 = vld [vmem:[%s757 + $0x3d4] sm:$0xf]
        %v4336 = vld [vmem:[%s757 + $0x3d8] sm:$0xf]
        %v4337 = vld [vmem:[%s757 + $0x3dc] sm:$0xf]
        %v4338 = vld [vmem:[%s757 + $0x3e0] sm:$0xf]
        %v4339 = vld [vmem:[%s757 + $0x3e4] sm:$0xf]
        %v4340 = vld [vmem:[%s757 + $0x3e8] sm:$0xf]
        %v4341 = vld [vmem:[%s757 + $0x3ec] sm:$0xf]
        %v4342 = vld [vmem:[%s757 + $0x3f0] sm:$0xf]
        %v4343 = vld [vmem:[%s757 + $0x3f4] sm:$0xf]
        %v4344 = vld [vmem:[%s757 + $0x3f8] sm:$0xf]
        %v4345 = vld [vmem:[%s757 + $0x3fc] sm:$0xf]
        %v4346 = vld [vmem:[%s760] sm:$0x1]
        %v4348 = vlaneseq
        %v4349 = vshrl.u32 %v4348, 7
        %v4350 = vsub.s32 0, %v4349
        %v4351 = vrot.slane %v4346, %v4350
        %v4609 = vunpack.c.l.b16 %v4090
        %v4610 = vunpack.c.l.b16 %v4091
        %v4611 = vunpack.c.l.b16 %v4092
        %v4612 = vunpack.c.l.b16 %v4093
        %v4613 = vunpack.c.l.b16 %v4094
        %v4614 = vunpack.c.l.b16 %v4095
        %v4615 = vunpack.c.l.b16 %v4096
        %v4616 = vunpack.c.l.b16 %v4097
        %v4617 = vunpack.c.l.b16 %v4098
        %v4618 = vunpack.c.l.b16 %v4099
        %v4619 = vunpack.c.l.b16 %v4100
        %v4620 = vunpack.c.l.b16 %v4101
        %v4621 = vunpack.c.l.b16 %v4102
        %v4622 = vunpack.c.l.b16 %v4103
        %v4623 = vunpack.c.l.b16 %v4104
        %v4624 = vunpack.c.l.b16 %v4105
        %v4625 = vunpack.c.l.b16 %v4106
        %v4626 = vunpack.c.l.b16 %v4107
        %v4627 = vunpack.c.l.b16 %v4108
        %v4628 = vunpack.c.l.b16 %v4109
        %v4629 = vunpack.c.l.b16 %v4110
        %v4630 = vunpack.c.l.b16 %v4111
        %v4631 = vunpack.c.l.b16 %v4112
        %v4632 = vunpack.c.l.b16 %v4113
        %v4633 = vunpack.c.l.b16 %v4114
        %v4634 = vunpack.c.l.b16 %v4115
        %v4635 = vunpack.c.l.b16 %v4116
        %v4636 = vunpack.c.l.b16 %v4117
        %v4637 = vunpack.c.l.b16 %v4118
        %v4638 = vunpack.c.l.b16 %v4119
        %v4639 = vunpack.c.l.b16 %v4120
        %v4640 = vunpack.c.l.b16 %v4121
        %v4641 = vunpack.c.l.b16 %v4122
        %v4642 = vunpack.c.l.b16 %v4123
        %v4643 = vunpack.c.l.b16 %v4124
        %v4644 = vunpack.c.l.b16 %v4125
        %v4645 = vunpack.c.l.b16 %v4126
        %v4646 = vunpack.c.l.b16 %v4127
        %v4647 = vunpack.c.l.b16 %v4128
        %v4648 = vunpack.c.l.b16 %v4129
        %v4649 = vunpack.c.l.b16 %v4130
        %v4650 = vunpack.c.l.b16 %v4131
        %v4651 = vunpack.c.l.b16 %v4132
        %v4652 = vunpack.c.l.b16 %v4133
        %v4653 = vunpack.c.l.b16 %v4134
        %v4654 = vunpack.c.l.b16 %v4135
        %v4655 = vunpack.c.l.b16 %v4136
        %v4656 = vunpack.c.l.b16 %v4137
        %v4657 = vunpack.c.l.b16 %v4138
        %v4658 = vunpack.c.l.b16 %v4139
        %v4659 = vunpack.c.l.b16 %v4140
        %v4660 = vunpack.c.l.b16 %v4141
        %v4661 = vunpack.c.l.b16 %v4142
        %v4662 = vunpack.c.l.b16 %v4143
        %v4663 = vunpack.c.l.b16 %v4144
        %v4664 = vunpack.c.l.b16 %v4145
        %v4665 = vunpack.c.l.b16 %v4146
        %v4666 = vunpack.c.l.b16 %v4147
        %v4667 = vunpack.c.l.b16 %v4148
        %v4668 = vunpack.c.l.b16 %v4149
        %v4669 = vunpack.c.l.b16 %v4150
        %v4670 = vunpack.c.l.b16 %v4151
        %v4671 = vunpack.c.l.b16 %v4152
        %v4672 = vunpack.c.l.b16 %v4153
        %v4673 = vunpack.c.l.b16 %v4154
        %v4674 = vunpack.c.l.b16 %v4155
        %v4675 = vunpack.c.l.b16 %v4156
        %v4676 = vunpack.c.l.b16 %v4157
        %v4677 = vunpack.c.l.b16 %v4158
        %v4678 = vunpack.c.l.b16 %v4159
        %v4679 = vunpack.c.l.b16 %v4160
        %v4680 = vunpack.c.l.b16 %v4161
        %v4681 = vunpack.c.l.b16 %v4162
        %v4682 = vunpack.c.l.b16 %v4163
        %v4683 = vunpack.c.l.b16 %v4164
        %v4684 = vunpack.c.l.b16 %v4165
        %v4685 = vunpack.c.l.b16 %v4166
        %v4686 = vunpack.c.l.b16 %v4167
        %v4687 = vunpack.c.l.b16 %v4168
        %v4688 = vunpack.c.l.b16 %v4169
        %v4689 = vunpack.c.l.b16 %v4170
        %v4690 = vunpack.c.l.b16 %v4171
        %v4691 = vunpack.c.l.b16 %v4172
        %v4692 = vunpack.c.l.b16 %v4173
        %v4693 = vunpack.c.l.b16 %v4174
        %v4694 = vunpack.c.l.b16 %v4175
        %v4695 = vunpack.c.l.b16 %v4176
        %v4696 = vunpack.c.l.b16 %v4177
        %v4697 = vunpack.c.l.b16 %v4178
        %v4698 = vunpack.c.l.b16 %v4179
        %v4699 = vunpack.c.l.b16 %v4180
        %v4700 = vunpack.c.l.b16 %v4181
        %v4701 = vunpack.c.l.b16 %v4182
        %v4702 = vunpack.c.l.b16 %v4183
        %v4703 = vunpack.c.l.b16 %v4184
        %v4704 = vunpack.c.l.b16 %v4185
        %v4705 = vunpack.c.l.b16 %v4186
        %v4706 = vunpack.c.l.b16 %v4187
        %v4707 = vunpack.c.l.b16 %v4188
        %v4708 = vunpack.c.l.b16 %v4189
        %v4709 = vunpack.c.l.b16 %v4190
        %v4710 = vunpack.c.l.b16 %v4191
        %v4711 = vunpack.c.l.b16 %v4192
        %v4712 = vunpack.c.l.b16 %v4193
        %v4713 = vunpack.c.l.b16 %v4194
        %v4714 = vunpack.c.l.b16 %v4195
        %v4715 = vunpack.c.l.b16 %v4196
        %v4716 = vunpack.c.l.b16 %v4197
        %v4717 = vunpack.c.l.b16 %v4198
        %v4718 = vunpack.c.l.b16 %v4199
        %v4719 = vunpack.c.l.b16 %v4200
        %v4720 = vunpack.c.l.b16 %v4201
        %v4721 = vunpack.c.l.b16 %v4202
        %v4722 = vunpack.c.l.b16 %v4203
        %v4723 = vunpack.c.l.b16 %v4204
        %v4724 = vunpack.c.l.b16 %v4205
        %v4725 = vunpack.c.l.b16 %v4206
        %v4726 = vunpack.c.l.b16 %v4207
        %v4727 = vunpack.c.l.b16 %v4208
        %v4728 = vunpack.c.l.b16 %v4209
        %v4729 = vunpack.c.l.b16 %v4210
        %v4730 = vunpack.c.l.b16 %v4211
        %v4731 = vunpack.c.l.b16 %v4212
        %v4732 = vunpack.c.l.b16 %v4213
        %v4733 = vunpack.c.l.b16 %v4214
        %v4734 = vunpack.c.l.b16 %v4215
        %v4735 = vunpack.c.l.b16 %v4216
        %v4736 = vunpack.c.l.b16 %v4217
        %v4737 = vunpack.c.l.b16 %v4218
        %v4738 = vunpack.c.l.b16 %v4219
        %v4739 = vunpack.c.l.b16 %v4220
        %v4740 = vunpack.c.l.b16 %v4221
        %v4741 = vunpack.c.l.b16 %v4222
        %v4742 = vunpack.c.l.b16 %v4223
        %v4743 = vunpack.c.l.b16 %v4224
        %v4744 = vunpack.c.l.b16 %v4225
        %v4745 = vunpack.c.l.b16 %v4226
        %v4746 = vunpack.c.l.b16 %v4227
        %v4747 = vunpack.c.l.b16 %v4228
        %v4748 = vunpack.c.l.b16 %v4229
        %v4749 = vunpack.c.l.b16 %v4230
        %v4750 = vunpack.c.l.b16 %v4231
        %v4751 = vunpack.c.l.b16 %v4232
        %v4752 = vunpack.c.l.b16 %v4233
        %v4753 = vunpack.c.l.b16 %v4234
        %v4754 = vunpack.c.l.b16 %v4235
        %v4755 = vunpack.c.l.b16 %v4236
        %v4756 = vunpack.c.l.b16 %v4237
        %v4757 = vunpack.c.l.b16 %v4238
        %v4758 = vunpack.c.l.b16 %v4239
        %v4759 = vunpack.c.l.b16 %v4240
        %v4760 = vunpack.c.l.b16 %v4241
        %v4761 = vunpack.c.l.b16 %v4242
        %v4762 = vunpack.c.l.b16 %v4243
        %v4763 = vunpack.c.l.b16 %v4244
        %v4764 = vunpack.c.l.b16 %v4245
        %v4765 = vunpack.c.l.b16 %v4246
        %v4766 = vunpack.c.l.b16 %v4247
        %v4767 = vunpack.c.l.b16 %v4248
        %v4768 = vunpack.c.l.b16 %v4249
        %v4769 = vunpack.c.l.b16 %v4250
        %v4770 = vunpack.c.l.b16 %v4251
        %v4771 = vunpack.c.l.b16 %v4252
        %v4772 = vunpack.c.l.b16 %v4253
        %v4773 = vunpack.c.l.b16 %v4254
        %v4774 = vunpack.c.l.b16 %v4255
        %v4775 = vunpack.c.l.b16 %v4256
        %v4776 = vunpack.c.l.b16 %v4257
        %v4777 = vunpack.c.l.b16 %v4258
        %v4778 = vunpack.c.l.b16 %v4259
        %v4779 = vunpack.c.l.b16 %v4260
        %v4780 = vunpack.c.l.b16 %v4261
        %v4781 = vunpack.c.l.b16 %v4262
        %v4782 = vunpack.c.l.b16 %v4263
        %v4783 = vunpack.c.l.b16 %v4264
        %v4784 = vunpack.c.l.b16 %v4265
        %v4785 = vunpack.c.l.b16 %v4266
        %v4786 = vunpack.c.l.b16 %v4267
        %v4787 = vunpack.c.l.b16 %v4268
        %v4788 = vunpack.c.l.b16 %v4269
        %v4789 = vunpack.c.l.b16 %v4270
        %v4790 = vunpack.c.l.b16 %v4271
        %v4791 = vunpack.c.l.b16 %v4272
        %v4792 = vunpack.c.l.b16 %v4273
        %v4793 = vunpack.c.l.b16 %v4274
        %v4794 = vunpack.c.l.b16 %v4275
        %v4795 = vunpack.c.l.b16 %v4276
        %v4796 = vunpack.c.l.b16 %v4277
        %v4797 = vunpack.c.l.b16 %v4278
        %v4798 = vunpack.c.l.b16 %v4279
        %v4799 = vunpack.c.l.b16 %v4280
        %v4800 = vunpack.c.l.b16 %v4281
        %v4801 = vunpack.c.l.b16 %v4282
        %v4802 = vunpack.c.l.b16 %v4283
        %v4803 = vunpack.c.l.b16 %v4284
        %v4804 = vunpack.c.l.b16 %v4285
        %v4805 = vunpack.c.l.b16 %v4286
        %v4806 = vunpack.c.l.b16 %v4287
        %v4807 = vunpack.c.l.b16 %v4288
        %v4808 = vunpack.c.l.b16 %v4289
        %v4809 = vunpack.c.l.b16 %v4290
        %v4810 = vunpack.c.l.b16 %v4291
        %v4811 = vunpack.c.l.b16 %v4292
        %v4812 = vunpack.c.l.b16 %v4293
        %v4813 = vunpack.c.l.b16 %v4294
        %v4814 = vunpack.c.l.b16 %v4295
        %v4815 = vunpack.c.l.b16 %v4296
        %v4816 = vunpack.c.l.b16 %v4297
        %v4817 = vunpack.c.l.b16 %v4298
        %v4818 = vunpack.c.l.b16 %v4299
        %v4819 = vunpack.c.l.b16 %v4300
        %v4820 = vunpack.c.l.b16 %v4301
        %v4821 = vunpack.c.l.b16 %v4302
        %v4822 = vunpack.c.l.b16 %v4303
        %v4823 = vunpack.c.l.b16 %v4304
        %v4824 = vunpack.c.l.b16 %v4305
        %v4825 = vunpack.c.l.b16 %v4306
        %v4826 = vunpack.c.l.b16 %v4307
        %v4827 = vunpack.c.l.b16 %v4308
        %v4828 = vunpack.c.l.b16 %v4309
        %v4829 = vunpack.c.l.b16 %v4310
        %v4830 = vunpack.c.l.b16 %v4311
        %v4831 = vunpack.c.l.b16 %v4312
        %v4832 = vunpack.c.l.b16 %v4313
        %v4833 = vunpack.c.l.b16 %v4314
        %v4834 = vunpack.c.l.b16 %v4315
        %v4835 = vunpack.c.l.b16 %v4316
        %v4836 = vunpack.c.l.b16 %v4317
        %v4837 = vunpack.c.l.b16 %v4318
        %v4838 = vunpack.c.l.b16 %v4319
        %v4839 = vunpack.c.l.b16 %v4320
        %v4840 = vunpack.c.l.b16 %v4321
        %v4841 = vunpack.c.l.b16 %v4322
        %v4842 = vunpack.c.l.b16 %v4323
        %v4843 = vunpack.c.l.b16 %v4324
        %v4844 = vunpack.c.l.b16 %v4325
        %v4845 = vunpack.c.l.b16 %v4326
        %v4846 = vunpack.c.l.b16 %v4327
        %v4847 = vunpack.c.l.b16 %v4328
        %v4848 = vunpack.c.l.b16 %v4329
        %v4849 = vunpack.c.l.b16 %v4330
        %v4850 = vunpack.c.l.b16 %v4331
        %v4851 = vunpack.c.l.b16 %v4332
        %v4852 = vunpack.c.l.b16 %v4333
        %v4853 = vunpack.c.l.b16 %v4334
        %v4854 = vunpack.c.l.b16 %v4335
        %v4855 = vunpack.c.l.b16 %v4336
        %v4856 = vunpack.c.l.b16 %v4337
        %v4857 = vunpack.c.l.b16 %v4338
        %v4858 = vunpack.c.l.b16 %v4339
        %v4859 = vunpack.c.l.b16 %v4340
        %v4860 = vunpack.c.l.b16 %v4341
        %v4861 = vunpack.c.l.b16 %v4342
        %v4862 = vunpack.c.l.b16 %v4343
        %v4863 = vunpack.c.l.b16 %v4344
        %v4864 = vunpack.c.l.b16 %v4345
        %v4865 = vpack.c.b16 %v4610, %v4609
        %v4866 = vpack.c.b16 %v4612, %v4611
        %v4867 = vpack.c.b16 %v4614, %v4613
        %v4868 = vpack.c.b16 %v4616, %v4615
        %v4869 = vpack.c.b16 %v4618, %v4617
        %v4870 = vpack.c.b16 %v4620, %v4619
        %v4871 = vpack.c.b16 %v4622, %v4621
        %v4872 = vpack.c.b16 %v4624, %v4623
        %v4873 = vpack.c.b16 %v4626, %v4625
        %v4874 = vpack.c.b16 %v4628, %v4627
        %v4875 = vpack.c.b16 %v4630, %v4629
        %v4876 = vpack.c.b16 %v4632, %v4631
        %v4877 = vpack.c.b16 %v4634, %v4633
        %v4878 = vpack.c.b16 %v4636, %v4635
        %v4879 = vpack.c.b16 %v4638, %v4637
        %v4880 = vpack.c.b16 %v4640, %v4639
        %v4881 = vpack.c.b16 %v4642, %v4641
        %v4882 = vpack.c.b16 %v4644, %v4643
        %v4883 = vpack.c.b16 %v4646, %v4645
        %v4884 = vpack.c.b16 %v4648, %v4647
        %v4885 = vpack.c.b16 %v4650, %v4649
        %v4886 = vpack.c.b16 %v4652, %v4651
        %v4887 = vpack.c.b16 %v4654, %v4653
        %v4888 = vpack.c.b16 %v4656, %v4655
        %v4889 = vpack.c.b16 %v4658, %v4657
        %v4890 = vpack.c.b16 %v4660, %v4659
        %v4891 = vpack.c.b16 %v4662, %v4661
        %v4892 = vpack.c.b16 %v4664, %v4663
        %v4893 = vpack.c.b16 %v4666, %v4665
        %v4894 = vpack.c.b16 %v4668, %v4667
        %v4895 = vpack.c.b16 %v4670, %v4669
        %v4896 = vpack.c.b16 %v4672, %v4671
        %v4897 = vpack.c.b16 %v4674, %v4673
        %v4898 = vpack.c.b16 %v4676, %v4675
        %v4899 = vpack.c.b16 %v4678, %v4677
        %v4900 = vpack.c.b16 %v4680, %v4679
        %v4901 = vpack.c.b16 %v4682, %v4681
        %v4902 = vpack.c.b16 %v4684, %v4683
        %v4903 = vpack.c.b16 %v4686, %v4685
        %v4904 = vpack.c.b16 %v4688, %v4687
        %v4905 = vpack.c.b16 %v4690, %v4689
        %v4906 = vpack.c.b16 %v4692, %v4691
        %v4907 = vpack.c.b16 %v4694, %v4693
        %v4908 = vpack.c.b16 %v4696, %v4695
        %v4909 = vpack.c.b16 %v4698, %v4697
        %v4910 = vpack.c.b16 %v4700, %v4699
        %v4911 = vpack.c.b16 %v4702, %v4701
        %v4912 = vpack.c.b16 %v4704, %v4703
        %v4913 = vpack.c.b16 %v4706, %v4705
        %v4914 = vpack.c.b16 %v4708, %v4707
        %v4915 = vpack.c.b16 %v4710, %v4709
        %v4916 = vpack.c.b16 %v4712, %v4711
        %v4917 = vpack.c.b16 %v4714, %v4713
        %v4918 = vpack.c.b16 %v4716, %v4715
        %v4919 = vpack.c.b16 %v4718, %v4717
        %v4920 = vpack.c.b16 %v4720, %v4719
        %v4921 = vpack.c.b16 %v4722, %v4721
        %v4922 = vpack.c.b16 %v4724, %v4723
        %v4923 = vpack.c.b16 %v4726, %v4725
        %v4924 = vpack.c.b16 %v4728, %v4727
        %v4925 = vpack.c.b16 %v4730, %v4729
        %v4926 = vpack.c.b16 %v4732, %v4731
        %v4927 = vpack.c.b16 %v4734, %v4733
        %v4928 = vpack.c.b16 %v4736, %v4735
        %v4929 = vpack.c.b16 %v4738, %v4737
        %v4930 = vpack.c.b16 %v4740, %v4739
        %v4931 = vpack.c.b16 %v4742, %v4741
        %v4932 = vpack.c.b16 %v4744, %v4743
        %v4933 = vpack.c.b16 %v4746, %v4745
        %v4934 = vpack.c.b16 %v4748, %v4747
        %v4935 = vpack.c.b16 %v4750, %v4749
        %v4936 = vpack.c.b16 %v4752, %v4751
        %v4937 = vpack.c.b16 %v4754, %v4753
        %v4938 = vpack.c.b16 %v4756, %v4755
        %v4939 = vpack.c.b16 %v4758, %v4757
        %v4940 = vpack.c.b16 %v4760, %v4759
        %v4941 = vpack.c.b16 %v4762, %v4761
        %v4942 = vpack.c.b16 %v4764, %v4763
        %v4943 = vpack.c.b16 %v4766, %v4765
        %v4944 = vpack.c.b16 %v4768, %v4767
        %v4945 = vpack.c.b16 %v4770, %v4769
        %v4946 = vpack.c.b16 %v4772, %v4771
        %v4947 = vpack.c.b16 %v4774, %v4773
        %v4948 = vpack.c.b16 %v4776, %v4775
        %v4949 = vpack.c.b16 %v4778, %v4777
        %v4950 = vpack.c.b16 %v4780, %v4779
        %v4951 = vpack.c.b16 %v4782, %v4781
        %v4952 = vpack.c.b16 %v4784, %v4783
        %v4953 = vpack.c.b16 %v4786, %v4785
        %v4954 = vpack.c.b16 %v4788, %v4787
        %v4955 = vpack.c.b16 %v4790, %v4789
        %v4956 = vpack.c.b16 %v4792, %v4791
        %v4957 = vpack.c.b16 %v4794, %v4793
        %v4958 = vpack.c.b16 %v4796, %v4795
        %v4959 = vpack.c.b16 %v4798, %v4797
        %v4960 = vpack.c.b16 %v4800, %v4799
        %v4961 = vpack.c.b16 %v4802, %v4801
        %v4962 = vpack.c.b16 %v4804, %v4803
        %v4963 = vpack.c.b16 %v4806, %v4805
        %v4964 = vpack.c.b16 %v4808, %v4807
        %v4965 = vpack.c.b16 %v4810, %v4809
        %v4966 = vpack.c.b16 %v4812, %v4811
        %v4967 = vpack.c.b16 %v4814, %v4813
        %v4968 = vpack.c.b16 %v4816, %v4815
        %v4969 = vpack.c.b16 %v4818, %v4817
        %v4970 = vpack.c.b16 %v4820, %v4819
        %v4971 = vpack.c.b16 %v4822, %v4821
        %v4972 = vpack.c.b16 %v4824, %v4823
        %v4973 = vpack.c.b16 %v4826, %v4825
        %v4974 = vpack.c.b16 %v4828, %v4827
        %v4975 = vpack.c.b16 %v4830, %v4829
        %v4976 = vpack.c.b16 %v4832, %v4831
        %v4977 = vpack.c.b16 %v4834, %v4833
        %v4978 = vpack.c.b16 %v4836, %v4835
        %v4979 = vpack.c.b16 %v4838, %v4837
        %v4980 = vpack.c.b16 %v4840, %v4839
        %v4981 = vpack.c.b16 %v4842, %v4841
        %v4982 = vpack.c.b16 %v4844, %v4843
        %v4983 = vpack.c.b16 %v4846, %v4845
        %v4984 = vpack.c.b16 %v4848, %v4847
        %v4985 = vpack.c.b16 %v4850, %v4849
        %v4986 = vpack.c.b16 %v4852, %v4851
        %v4987 = vpack.c.b16 %v4854, %v4853
        %v4988 = vpack.c.b16 %v4856, %v4855
        %v4989 = vpack.c.b16 %v4858, %v4857
        %v4990 = vpack.c.b16 %v4860, %v4859
        %v4991 = vpack.c.b16 %v4862, %v4861
        %v4992 = vpack.c.b16 %v4864, %v4863
        %5121 = vmatprep.subr.bf16.mxu0 0
        %5122 = vmatpush1.bf16.msra.mxu0 %v4865
        %5123 = vmatprep.subr.bf16.mxu0 0
        %5124 = vmatpush1.bf16.msra.mxu0 %v4866
        %5125 = vmatprep.subr.bf16.mxu0 0
        %5126 = vmatpush1.bf16.msra.mxu0 %v4867
        %5127 = vmatprep.subr.bf16.mxu0 0
        %5128 = vmatpush1.bf16.msra.mxu0 %v4868
        %5129 = vmatprep.subr.bf16.mxu0 0
        %5130 = vmatpush1.bf16.msra.mxu0 %v4869
        %5131 = vmatprep.subr.bf16.mxu0 0
        %5132 = vmatpush1.bf16.msra.mxu0 %v4870
        %5133 = vmatprep.subr.bf16.mxu0 0
        %5134 = vmatpush1.bf16.msra.mxu0 %v4871
        %5135 = vmatprep.subr.bf16.mxu0 0
        %5136 = vmatpush1.bf16.msra.mxu0 %v4872
        %5137 = vmatprep.subr.bf16.mxu0 0
        %5138 = vmatpush1.bf16.msra.mxu0 %v4873
        %5139 = vmatprep.subr.bf16.mxu0 0
        %5140 = vmatpush1.bf16.msra.mxu0 %v4874
        %5141 = vmatprep.subr.bf16.mxu0 0
        %5142 = vmatpush1.bf16.msra.mxu0 %v4875
        %5143 = vmatprep.subr.bf16.mxu0 0
        %5144 = vmatpush1.bf16.msra.mxu0 %v4876
        %5145 = vmatprep.subr.bf16.mxu0 0
        %5146 = vmatpush1.bf16.msra.mxu0 %v4877
        %5147 = vmatprep.subr.bf16.mxu0 0
        %5148 = vmatpush1.bf16.msra.mxu0 %v4878
        %5149 = vmatprep.subr.bf16.mxu0 0
        %5150 = vmatpush1.bf16.msra.mxu0 %v4879
        %5151 = vmatprep.subr.bf16.mxu0 0
        %5152 = vmatpush1.bf16.msra.mxu0 %v4880
        %5153 = vmatprep.mubr.bf16.mxu0 %v4027
        %5154 = vmatmul.mubr.bf16.gmra.mrb[0].mxu0 %v4026
        %v5155 = vpop.f32.mrb[0].mxu0
        %v5156 = vadd.f32 %v4351, %v5155
        %v5157 = vpop.f32.mrb[0].mxu0
        %v5158 = vpop.f32.mrb[0].mxu0
        %v5159 = vadd.f32 %v4351, %v5158
        %v5160 = vpop.f32.mrb[0].mxu0
        %5161 = vmatprep.mubr.bf16.mxu0 %v4043
        %5162 = vmatmul.mubr.bf16.gmra.mrb[0].mxu0 %v4042
        %v5163 = vpop.f32.mrb[0].mxu0
        %v5164 = vadd.f32 %v4351, %v5163
        %v5165 = vpop.f32.mrb[0].mxu0
        %v5166 = vpop.f32.mrb[0].mxu0
        %v5167 = vadd.f32 %v4351, %v5166
        %v5168 = vpop.f32.mrb[0].mxu0
        %5169 = vmatprep.mubr.bf16.mxu0 %v4059
        %5170 = vmatmul.mubr.bf16.gmra.mrb[0].mxu0 %v4058
        %v5171 = vpop.f32.mrb[0].mxu0
        %v5172 = vadd.f32 %v4351, %v5171
        %v5173 = vpop.f32.mrb[0].mxu0
        %v5174 = vpop.f32.mrb[0].mxu0
        %v5175 = vadd.f32 %v4351, %v5174
        %v5176 = vpop.f32.mrb[0].mxu0
        %5177 = vmatprep.mubr.bf16.mxu0 %v4075
        %5178 = vmatmul.mubr.bf16.gmra.mrb[0].mxu0 %v4074
        %v5179 = vpop.f32.mrb[0].mxu0
        %v5180 = vadd.f32 %v4351, %v5179
        %v5181 = vpop.f32.mrb[0].mxu0
        %v5182 = vpop.f32.mrb[0].mxu0
        %v5183 = vadd.f32 %v4351, %v5182
        %v5184 = vpop.f32.mrb[0].mxu0
        %5185 = vdwg.mxu0
        %5186 = vmatprep.subr.bf16.mxu0 0
        %5187 = vmatpush1.bf16.msra.mxu0 %v4881
        %5188 = vmatprep.subr.bf16.mxu0 0
        %5189 = vmatpush1.bf16.msra.mxu0 %v4882
        %5190 = vmatprep.subr.bf16.mxu0 0
        %5191 = vmatpush1.bf16.msra.mxu0 %v4883
        %5192 = vmatprep.subr.bf16.mxu0 0
        %5193 = vmatpush1.bf16.msra.mxu0 %v4884
        %5194 = vmatprep.subr.bf16.mxu0 0
        %5195 = vmatpush1.bf16.msra.mxu0 %v4885
        %5196 = vmatprep.subr.bf16.mxu0 0
        %5197 = vmatpush1.bf16.msra.mxu0 %v4886
        %5198 = vmatprep.subr.bf16.mxu0 0
        %5199 = vmatpush1.bf16.msra.mxu0 %v4887
        %5200 = vmatprep.subr.bf16.mxu0 0
        %5201 = vmatpush1.bf16.msra.mxu0 %v4888
        %5202 = vmatprep.subr.bf16.mxu0 0
        %5203 = vmatpush1.bf16.msra.mxu0 %v4889
        %5204 = vmatprep.subr.bf16.mxu0 0
        %5205 = vmatpush1.bf16.msra.mxu0 %v4890
        %5206 = vmatprep.subr.bf16.mxu0 0
        %5207 = vmatpush1.bf16.msra.mxu0 %v4891
        %5208 = vmatprep.subr.bf16.mxu0 0
        %5209 = vmatpush1.bf16.msra.mxu0 %v4892
        %5210 = vmatprep.subr.bf16.mxu0 0
        %5211 = vmatpush1.bf16.msra.mxu0 %v4893
        %5212 = vmatprep.subr.bf16.mxu0 0
        %5213 = vmatpush1.bf16.msra.mxu0 %v4894
        %5214 = vmatprep.subr.bf16.mxu0 0
        %5215 = vmatpush1.bf16.msra.mxu0 %v4895
        %5216 = vmatprep.subr.bf16.mxu0 0
        %5217 = vmatpush1.bf16.msra.mxu0 %v4896
        %5218 = vmatprep.mubr.bf16.mxu0 %v4029
        %5219 = vmatmul.mubr.bf16.gmra.mrb[0].mxu0 %v4028
        %v5220 = vpop.f32.mrb[0].mxu0
        %v5221 = vadd.f32 %v5156, %v5220
        %v5222 = vpop.f32.mrb[0].mxu0
        %v5223 = vpop.f32.mrb[0].mxu0
        %v5224 = vadd.f32 %v5159, %v5223
        %v5225 = vpop.f32.mrb[0].mxu0
        %5226 = vmatprep.mubr.bf16.mxu0 %v4045
        %5227 = vmatmul.mubr.bf16.gmra.mrb[0].mxu0 %v4044
        %v5228 = vpop.f32.mrb[0].mxu0
        %v5229 = vadd.f32 %v5164, %v5228
        %v5230 = vpop.f32.mrb[0].mxu0
        %v5231 = vpop.f32.mrb[0].mxu0
        %v5232 = vadd.f32 %v5167, %v5231
        %v5233 = vpop.f32.mrb[0].mxu0
        %5234 = vmatprep.mubr.bf16.mxu0 %v4061
        %5235 = vmatmul.mubr.bf16.gmra.mrb[0].mxu0 %v4060
        %v5236 = vpop.f32.mrb[0].mxu0
        %v5237 = vadd.f32 %v5172, %v5236
        %v5238 = vpop.f32.mrb[0].mxu0
        %v5239 = vpop.f32.mrb[0].mxu0
        %v5240 = vadd.f32 %v5175, %v5239
        %v5241 = vpop.f32.mrb[0].mxu0
        %5242 = vmatprep.mubr.bf16.mxu0 %v4077
        %5243 = vmatmul.mubr.bf16.gmra.mrb[0].mxu0 %v4076
        %v5244 = vpop.f32.mrb[0].mxu0
        %v5245 = vadd.f32 %v5180, %v5244
        %v5246 = vpop.f32.mrb[0].mxu0
        %v5247 = vpop.f32.mrb[0].mxu0
        %v5248 = vadd.f32 %v5183, %v5247
        %v5249 = vpop.f32.mrb[0].mxu0
        %5250 = vdwg.mxu0
        %5251 = vmatprep.subr.bf16.mxu0 0
        %5252 = vmatpush1.bf16.msra.mxu0 %v4897
        %5253 = vmatprep.subr.bf16.mxu0 0
        %5254 = vmatpush1.bf16.msra.mxu0 %v4898
        %5255 = vmatprep.subr.bf16.mxu0 0
        %5256 = vmatpush1.bf16.msra.mxu0 %v4899
        %5257 = vmatprep.subr.bf16.mxu0 0
        %5258 = vmatpush1.bf16.msra.mxu0 %v4900
        %5259 = vmatprep.subr.bf16.mxu0 0
        %5260 = vmatpush1.bf16.msra.mxu0 %v4901
        %5261 = vmatprep.subr.bf16.mxu0 0
        %5262 = vmatpush1.bf16.msra.mxu0 %v4902
        %5263 = vmatprep.subr.bf16.mxu0 0
        %5264 = vmatpush1.bf16.msra.mxu0 %v4903
        %5265 = vmatprep.subr.bf16.mxu0 0
        %5266 = vmatpush1.bf16.msra.mxu0 %v4904
        %5267 = vmatprep.subr.bf16.mxu0 0
        %5268 = vmatpush1.bf16.msra.mxu0 %v4905
        %5269 = vmatprep.subr.bf16.mxu0 0
        %5270 = vmatpush1.bf16.msra.mxu0 %v4906
        %5271 = vmatprep.subr.bf16.mxu0 0
        %5272 = vmatpush1.bf16.msra.mxu0 %v4907
        %5273 = vmatprep.subr.bf16.mxu0 0
        %5274 = vmatpush1.bf16.msra.mxu0 %v4908
        %5275 = vmatprep.subr.bf16.mxu0 0
        %5276 = vmatpush1.bf16.msra.mxu0 %v4909
        %5277 = vmatprep.subr.bf16.mxu0 0
        %5278 = vmatpush1.bf16.msra.mxu0 %v4910
        %5279 = vmatprep.subr.bf16.mxu0 0
        %5280 = vmatpush1.bf16.msra.mxu0 %v4911
        %5281 = vmatprep.subr.bf16.mxu0 0
        %5282 = vmatpush1.bf16.msra.mxu0 %v4912
        %5283 = vmatprep.mubr.bf16.mxu0 %v4031
        %5284 = vmatmul.mubr.bf16.gmra.mrb[0].mxu0 %v4030
        %v5285 = vpop.f32.mrb[0].mxu0
        %v5286 = vadd.f32 %v5221, %v5285
        %v5287 = vpop.f32.mrb[0].mxu0
        %v5288 = vpop.f32.mrb[0].mxu0
        %v5289 = vadd.f32 %v5224, %v5288
        %v5290 = vpop.f32.mrb[0].mxu0
        %5291 = vmatprep.mubr.bf16.mxu0 %v4047
        %5292 = vmatmul.mubr.bf16.gmra.mrb[0].mxu0 %v4046
        %v5293 = vpop.f32.mrb[0].mxu0
        %v5294 = vadd.f32 %v5229, %v5293
        %v5295 = vpop.f32.mrb[0].mxu0
        %v5296 = vpop.f32.mrb[0].mxu0
        %v5297 = vadd.f32 %v5232, %v5296
        %v5298 = vpop.f32.mrb[0].mxu0
        %5299 = vmatprep.mubr.bf16.mxu0 %v4063
        %5300 = vmatmul.mubr.bf16.gmra.mrb[0].mxu0 %v4062
        %v5301 = vpop.f32.mrb[0].mxu0
        %v5302 = vadd.f32 %v5237, %v5301
        %v5303 = vpop.f32.mrb[0].mxu0
        %v5304 = vpop.f32.mrb[0].mxu0
        %v5305 = vadd.f32 %v5240, %v5304
        %v5306 = vpop.f32.mrb[0].mxu0
        %5307 = vmatprep.mubr.bf16.mxu0 %v4079
        %5308 = vmatmul.mubr.bf16.gmra.mrb[0].mxu0 %v4078
        %v5309 = vpop.f32.mrb[0].mxu0
        %v5310 = vadd.f32 %v5245, %v5309
        %v5311 = vpop.f32.mrb[0].mxu0
        %v5312 = vpop.f32.mrb[0].mxu0
        %v5313 = vadd.f32 %v5248, %v5312
        %v5314 = vpop.f32.mrb[0].mxu0
        %5315 = vdwg.mxu0
        %5316 = vmatprep.subr.bf16.mxu0 0
        %5317 = vmatpush1.bf16.msra.mxu0 %v4913
        %5318 = vmatprep.subr.bf16.mxu0 0
        %5319 = vmatpush1.bf16.msra.mxu0 %v4914
        %5320 = vmatprep.subr.bf16.mxu0 0
        %5321 = vmatpush1.bf16.msra.mxu0 %v4915
        %5322 = vmatprep.subr.bf16.mxu0 0
        %5323 = vmatpush1.bf16.msra.mxu0 %v4916
        %5324 = vmatprep.subr.bf16.mxu0 0
        %5325 = vmatpush1.bf16.msra.mxu0 %v4917
        %5326 = vmatprep.subr.bf16.mxu0 0
        %5327 = vmatpush1.bf16.msra.mxu0 %v4918
        %5328 = vmatprep.subr.bf16.mxu0 0
        %5329 = vmatpush1.bf16.msra.mxu0 %v4919
        %5330 = vmatprep.subr.bf16.mxu0 0
        %5331 = vmatpush1.bf16.msra.mxu0 %v4920
        %5332 = vmatprep.subr.bf16.mxu0 0
        %5333 = vmatpush1.bf16.msra.mxu0 %v4921
        %5334 = vmatprep.subr.bf16.mxu0 0
        %5335 = vmatpush1.bf16.msra.mxu0 %v4922
        %5336 = vmatprep.subr.bf16.mxu0 0
        %5337 = vmatpush1.bf16.msra.mxu0 %v4923
        %5338 = vmatprep.subr.bf16.mxu0 0
        %5339 = vmatpush1.bf16.msra.mxu0 %v4924
        %5340 = vmatprep.subr.bf16.mxu0 0
        %5341 = vmatpush1.bf16.msra.mxu0 %v4925
        %5342 = vmatprep.subr.bf16.mxu0 0
        %5343 = vmatpush1.bf16.msra.mxu0 %v4926
        %5344 = vmatprep.subr.bf16.mxu0 0
        %5345 = vmatpush1.bf16.msra.mxu0 %v4927
        %5346 = vmatprep.subr.bf16.mxu0 0
        %5347 = vmatpush1.bf16.msra.mxu0 %v4928
        %5348 = vmatprep.mubr.bf16.mxu0 %v4033
        %5349 = vmatmul.mubr.bf16.gmra.mrb[0].mxu0 %v4032
        %v5350 = vpop.f32.mrb[0].mxu0
        %v5351 = vadd.f32 %v5286, %v5350
        %v5352 = vpop.f32.mrb[0].mxu0
        %v5353 = vpop.f32.mrb[0].mxu0
        %v5354 = vadd.f32 %v5289, %v5353
        %v5355 = vpop.f32.mrb[0].mxu0
        %5356 = vmatprep.mubr.bf16.mxu0 %v4049
        %5357 = vmatmul.mubr.bf16.gmra.mrb[0].mxu0 %v4048
        %v5358 = vpop.f32.mrb[0].mxu0
        %v5359 = vadd.f32 %v5294, %v5358
        %v5360 = vpop.f32.mrb[0].mxu0
        %v5361 = vpop.f32.mrb[0].mxu0
        %v5362 = vadd.f32 %v5297, %v5361
        %v5363 = vpop.f32.mrb[0].mxu0
        %5364 = vmatprep.mubr.bf16.mxu0 %v4065
        %5365 = vmatmul.mubr.bf16.gmra.mrb[0].mxu0 %v4064
        %v5366 = vpop.f32.mrb[0].mxu0
        %v5367 = vadd.f32 %v5302, %v5366
        %v5368 = vpop.f32.mrb[0].mxu0
        %v5369 = vpop.f32.mrb[0].mxu0
        %v5370 = vadd.f32 %v5305, %v5369
        %v5371 = vpop.f32.mrb[0].mxu0
        %5372 = vmatprep.mubr.bf16.mxu0 %v4081
        %5373 = vmatmul.mubr.bf16.gmra.mrb[0].mxu0 %v4080
        %v5374 = vpop.f32.mrb[0].mxu0
        %v5375 = vadd.f32 %v5310, %v5374
        %v5376 = vpop.f32.mrb[0].mxu0
        %v5377 = vpop.f32.mrb[0].mxu0
        %v5378 = vadd.f32 %v5313, %v5377
        %v5379 = vpop.f32.mrb[0].mxu0
        %5380 = vdwg.mxu0
        %5381 = vmatprep.subr.bf16.mxu0 0
        %5382 = vmatpush1.bf16.msra.mxu0 %v4929
        %5383 = vmatprep.subr.bf16.mxu0 0
        %5384 = vmatpush1.bf16.msra.mxu0 %v4930
        %5385 = vmatprep.subr.bf16.mxu0 0
        %5386 = vmatpush1.bf16.msra.mxu0 %v4931
        %5387 = vmatprep.subr.bf16.mxu0 0
        %5388 = vmatpush1.bf16.msra.mxu0 %v4932
        %5389 = vmatprep.subr.bf16.mxu0 0
        %5390 = vmatpush1.bf16.msra.mxu0 %v4933
        %5391 = vmatprep.subr.bf16.mxu0 0
        %5392 = vmatpush1.bf16.msra.mxu0 %v4934
        %5393 = vmatprep.subr.bf16.mxu0 0
        %5394 = vmatpush1.bf16.msra.mxu0 %v4935
        %5395 = vmatprep.subr.bf16.mxu0 0
        %5396 = vmatpush1.bf16.msra.mxu0 %v4936
        %5397 = vmatprep.subr.bf16.mxu0 0
        %5398 = vmatpush1.bf16.msra.mxu0 %v4937
        %5399 = vmatprep.subr.bf16.mxu0 0
        %5400 = vmatpush1.bf16.msra.mxu0 %v4938
        %5401 = vmatprep.subr.bf16.mxu0 0
        %5402 = vmatpush1.bf16.msra.mxu0 %v4939
        %5403 = vmatprep.subr.bf16.mxu0 0
        %5404 = vmatpush1.bf16.msra.mxu0 %v4940
        %5405 = vmatprep.subr.bf16.mxu0 0
        %5406 = vmatpush1.bf16.msra.mxu0 %v4941
        %5407 = vmatprep.subr.bf16.mxu0 0
        %5408 = vmatpush1.bf16.msra.mxu0 %v4942
        %5409 = vmatprep.subr.bf16.mxu0 0
        %5410 = vmatpush1.bf16.msra.mxu0 %v4943
        %5411 = vmatprep.subr.bf16.mxu0 0
        %5412 = vmatpush1.bf16.msra.mxu0 %v4944
        %5413 = vmatprep.mubr.bf16.mxu0 %v4035
        %5414 = vmatmul.mubr.bf16.gmra.mrb[0].mxu0 %v4034
        %v5415 = vpop.f32.mrb[0].mxu0
        %v5416 = vadd.f32 %v5351, %v5415
        %v5417 = vpop.f32.mrb[0].mxu0
        %v5418 = vpop.f32.mrb[0].mxu0
        %v5419 = vadd.f32 %v5354, %v5418
        %v5420 = vpop.f32.mrb[0].mxu0
        %5421 = vmatprep.mubr.bf16.mxu0 %v4051
        %5422 = vmatmul.mubr.bf16.gmra.mrb[0].mxu0 %v4050
        %v5423 = vpop.f32.mrb[0].mxu0
        %v5424 = vadd.f32 %v5359, %v5423
        %v5425 = vpop.f32.mrb[0].mxu0
        %v5426 = vpop.f32.mrb[0].mxu0
        %v5427 = vadd.f32 %v5362, %v5426
        %v5428 = vpop.f32.mrb[0].mxu0
        %5429 = vmatprep.mubr.bf16.mxu0 %v4067
        %5430 = vmatmul.mubr.bf16.gmra.mrb[0].mxu0 %v4066
        %v5431 = vpop.f32.mrb[0].mxu0
        %v5432 = vadd.f32 %v5367, %v5431
        %v5433 = vpop.f32.mrb[0].mxu0
        %v5434 = vpop.f32.mrb[0].mxu0
        %v5435 = vadd.f32 %v5370, %v5434
        %v5436 = vpop.f32.mrb[0].mxu0
        %5437 = vmatprep.mubr.bf16.mxu0 %v4083
        %5438 = vmatmul.mubr.bf16.gmra.mrb[0].mxu0 %v4082
        %v5439 = vpop.f32.mrb[0].mxu0
        %v5440 = vadd.f32 %v5375, %v5439
        %v5441 = vpop.f32.mrb[0].mxu0
        %v5442 = vpop.f32.mrb[0].mxu0
        %v5443 = vadd.f32 %v5378, %v5442
        %v5444 = vpop.f32.mrb[0].mxu0
        %5445 = vdwg.mxu0
        %5446 = vmatprep.subr.bf16.mxu0 0
        %5447 = vmatpush1.bf16.msra.mxu0 %v4945
        %5448 = vmatprep.subr.bf16.mxu0 0
        %5449 = vmatpush1.bf16.msra.mxu0 %v4946
        %5450 = vmatprep.subr.bf16.mxu0 0
        %5451 = vmatpush1.bf16.msra.mxu0 %v4947
        %5452 = vmatprep.subr.bf16.mxu0 0
        %5453 = vmatpush1.bf16.msra.mxu0 %v4948
        %5454 = vmatprep.subr.bf16.mxu0 0
        %5455 = vmatpush1.bf16.msra.mxu0 %v4949
        %5456 = vmatprep.subr.bf16.mxu0 0
        %5457 = vmatpush1.bf16.msra.mxu0 %v4950
        %5458 = vmatprep.subr.bf16.mxu0 0
        %5459 = vmatpush1.bf16.msra.mxu0 %v4951
        %5460 = vmatprep.subr.bf16.mxu0 0
        %5461 = vmatpush1.bf16.msra.mxu0 %v4952
        %5462 = vmatprep.subr.bf16.mxu0 0
        %5463 = vmatpush1.bf16.msra.mxu0 %v4953
        %5464 = vmatprep.subr.bf16.mxu0 0
        %5465 = vmatpush1.bf16.msra.mxu0 %v4954
        %5466 = vmatprep.subr.bf16.mxu0 0
        %5467 = vmatpush1.bf16.msra.mxu0 %v4955
        %5468 = vmatprep.subr.bf16.mxu0 0
        %5469 = vmatpush1.bf16.msra.mxu0 %v4956
        %5470 = vmatprep.subr.bf16.mxu0 0
        %5471 = vmatpush1.bf16.msra.mxu0 %v4957
        %5472 = vmatprep.subr.bf16.mxu0 0
        %5473 = vmatpush1.bf16.msra.mxu0 %v4958
        %5474 = vmatprep.subr.bf16.mxu0 0
        %5475 = vmatpush1.bf16.msra.mxu0 %v4959
        %5476 = vmatprep.subr.bf16.mxu0 0
        %5477 = vmatpush1.bf16.msra.mxu0 %v4960
        %5478 = vmatprep.mubr.bf16.mxu0 %v4037
        %5479 = vmatmul.mubr.bf16.gmra.mrb[0].mxu0 %v4036
        %v5480 = vpop.f32.mrb[0].mxu0
        %v5481 = vadd.f32 %v5416, %v5480
        %v5482 = vpop.f32.mrb[0].mxu0
        %v5483 = vpop.f32.mrb[0].mxu0
        %v5484 = vadd.f32 %v5419, %v5483
        %v5485 = vpop.f32.mrb[0].mxu0
        %5486 = vmatprep.mubr.bf16.mxu0 %v4053
        %5487 = vmatmul.mubr.bf16.gmra.mrb[0].mxu0 %v4052
        %v5488 = vpop.f32.mrb[0].mxu0
        %v5489 = vadd.f32 %v5424, %v5488
        %v5490 = vpop.f32.mrb[0].mxu0
        %v5491 = vpop.f32.mrb[0].mxu0
        %v5492 = vadd.f32 %v5427, %v5491
        %v5493 = vpop.f32.mrb[0].mxu0
        %5494 = vmatprep.mubr.bf16.mxu0 %v4069
        %5495 = vmatmul.mubr.bf16.gmra.mrb[0].mxu0 %v4068
        %v5496 = vpop.f32.mrb[0].mxu0
        %v5497 = vadd.f32 %v5432, %v5496
        %v5498 = vpop.f32.mrb[0].mxu0
        %v5499 = vpop.f32.mrb[0].mxu0
        %v5500 = vadd.f32 %v5435, %v5499
        %v5501 = vpop.f32.mrb[0].mxu0
        %5502 = vmatprep.mubr.bf16.mxu0 %v4085
        %5503 = vmatmul.mubr.bf16.gmra.mrb[0].mxu0 %v4084
        %v5504 = vpop.f32.mrb[0].mxu0
        %v5505 = vadd.f32 %v5440, %v5504
        %v5506 = vpop.f32.mrb[0].mxu0
        %v5507 = vpop.f32.mrb[0].mxu0
        %v5508 = vadd.f32 %v5443, %v5507
        %v5509 = vpop.f32.mrb[0].mxu0
        %5510 = vdwg.mxu0
        %5511 = vmatprep.subr.bf16.mxu0 0
        %5512 = vmatpush1.bf16.msra.mxu0 %v4961
        %5513 = vmatprep.subr.bf16.mxu0 0
        %5514 = vmatpush1.bf16.msra.mxu0 %v4962
        %5515 = vmatprep.subr.bf16.mxu0 0
        %5516 = vmatpush1.bf16.msra.mxu0 %v4963
        %5517 = vmatprep.subr.bf16.mxu0 0
        %5518 = vmatpush1.bf16.msra.mxu0 %v4964
        %5519 = vmatprep.subr.bf16.mxu0 0
        %5520 = vmatpush1.bf16.msra.mxu0 %v4965
        %5521 = vmatprep.subr.bf16.mxu0 0
        %5522 = vmatpush1.bf16.msra.mxu0 %v4966
        %5523 = vmatprep.subr.bf16.mxu0 0
        %5524 = vmatpush1.bf16.msra.mxu0 %v4967
        %5525 = vmatprep.subr.bf16.mxu0 0
        %5526 = vmatpush1.bf16.msra.mxu0 %v4968
        %5527 = vmatprep.subr.bf16.mxu0 0
        %5528 = vmatpush1.bf16.msra.mxu0 %v4969
        %5529 = vmatprep.subr.bf16.mxu0 0
        %5530 = vmatpush1.bf16.msra.mxu0 %v4970
        %5531 = vmatprep.subr.bf16.mxu0 0
        %5532 = vmatpush1.bf16.msra.mxu0 %v4971
        %5533 = vmatprep.subr.bf16.mxu0 0
        %5534 = vmatpush1.bf16.msra.mxu0 %v4972
        %5535 = vmatprep.subr.bf16.mxu0 0
        %5536 = vmatpush1.bf16.msra.mxu0 %v4973
        %5537 = vmatprep.subr.bf16.mxu0 0
        %5538 = vmatpush1.bf16.msra.mxu0 %v4974
        %5539 = vmatprep.subr.bf16.mxu0 0
        %5540 = vmatpush1.bf16.msra.mxu0 %v4975
        %5541 = vmatprep.subr.bf16.mxu0 0
        %5542 = vmatpush1.bf16.msra.mxu0 %v4976
        %5543 = vmatprep.mubr.bf16.mxu0 %v4039
        %5544 = vmatmul.mubr.bf16.gmra.mrb[0].mxu0 %v4038
        %v5545 = vpop.f32.mrb[0].mxu0
        %v5546 = vadd.f32 %v5481, %v5545
        %v5547 = vpop.f32.mrb[0].mxu0
        %v5548 = vpop.f32.mrb[0].mxu0
        %v5549 = vadd.f32 %v5484, %v5548
        %v5550 = vpop.f32.mrb[0].mxu0
        %5551 = vmatprep.mubr.bf16.mxu0 %v4055
        %5552 = vmatmul.mubr.bf16.gmra.mrb[0].mxu0 %v4054
        %v5553 = vpop.f32.mrb[0].mxu0
        %v5554 = vadd.f32 %v5489, %v5553
        %v5555 = vpop.f32.mrb[0].mxu0
        %v5556 = vpop.f32.mrb[0].mxu0
        %v5557 = vadd.f32 %v5492, %v5556
        %v5558 = vpop.f32.mrb[0].mxu0
        %5559 = vmatprep.mubr.bf16.mxu0 %v4071
        %5560 = vmatmul.mubr.bf16.gmra.mrb[0].mxu0 %v4070
        %v5561 = vpop.f32.mrb[0].mxu0
        %v5562 = vadd.f32 %v5497, %v5561
        %v5563 = vpop.f32.mrb[0].mxu0
        %v5564 = vpop.f32.mrb[0].mxu0
        %v5565 = vadd.f32 %v5500, %v5564
        %v5566 = vpop.f32.mrb[0].mxu0
        %5567 = vmatprep.mubr.bf16.mxu0 %v4087
        %5568 = vmatmul.mubr.bf16.gmra.mrb[0].mxu0 %v4086
        %v5569 = vpop.f32.mrb[0].mxu0
        %v5570 = vadd.f32 %v5505, %v5569
        %v5571 = vpop.f32.mrb[0].mxu0
        %v5572 = vpop.f32.mrb[0].mxu0
        %v5573 = vadd.f32 %v5508, %v5572
        %v5574 = vpop.f32.mrb[0].mxu0
        %5575 = vdwg.mxu0
        %5576 = vmatprep.subr.bf16.mxu0 0
        %5577 = vmatpush1.bf16.msra.mxu0 %v4977
        %5578 = vmatprep.subr.bf16.mxu0 0
        %5579 = vmatpush1.bf16.msra.mxu0 %v4978
        %5580 = vmatprep.subr.bf16.mxu0 0
        %5581 = vmatpush1.bf16.msra.mxu0 %v4979
        %5582 = vmatprep.subr.bf16.mxu0 0
        %5583 = vmatpush1.bf16.msra.mxu0 %v4980
        %5584 = vmatprep.subr.bf16.mxu0 0
        %5585 = vmatpush1.bf16.msra.mxu0 %v4981
        %5586 = vmatprep.subr.bf16.mxu0 0
        %5587 = vmatpush1.bf16.msra.mxu0 %v4982
        %5588 = vmatprep.subr.bf16.mxu0 0
        %5589 = vmatpush1.bf16.msra.mxu0 %v4983
        %5590 = vmatprep.subr.bf16.mxu0 0
        %5591 = vmatpush1.bf16.msra.mxu0 %v4984
        %5592 = vmatprep.subr.bf16.mxu0 0
        %5593 = vmatpush1.bf16.msra.mxu0 %v4985
        %5594 = vmatprep.subr.bf16.mxu0 0
        %5595 = vmatpush1.bf16.msra.mxu0 %v4986
        %5596 = vmatprep.subr.bf16.mxu0 0
        %5597 = vmatpush1.bf16.msra.mxu0 %v4987
        %5598 = vmatprep.subr.bf16.mxu0 0
        %5599 = vmatpush1.bf16.msra.mxu0 %v4988
        %5600 = vmatprep.subr.bf16.mxu0 0
        %5601 = vmatpush1.bf16.msra.mxu0 %v4989
        %5602 = vmatprep.subr.bf16.mxu0 0
        %5603 = vmatpush1.bf16.msra.mxu0 %v4990
        %5604 = vmatprep.subr.bf16.mxu0 0
        %5605 = vmatpush1.bf16.msra.mxu0 %v4991
        %5606 = vmatprep.subr.bf16.mxu0 0
        %5607 = vmatpush1.bf16.msra.mxu0 %v4992
        %5608 = vmatprep.mubr.bf16.mxu0 %v4041
        %5609 = vmatmul.mubr.bf16.gmra.mrb[0].mxu0 %v4040
        %v5610 = vpop.f32.mrb[0].mxu0
        %v5611 = vadd.f32 %v5546, %v5610
        %v5612 = vpop.f32.mrb[0].mxu0
        %v5613 = vpop.f32.mrb[0].mxu0
        %v5614 = vadd.f32 %v5549, %v5613
        %v5615 = vpop.f32.mrb[0].mxu0
        %5616 = vmatprep.mubr.bf16.mxu0 %v4057
        %5617 = vmatmul.mubr.bf16.gmra.mrb[0].mxu0 %v4056
        %v5618 = vpop.f32.mrb[0].mxu0
        %v5619 = vadd.f32 %v5554, %v5618
        %v5620 = vpop.f32.mrb[0].mxu0
        %v5621 = vpop.f32.mrb[0].mxu0
        %v5622 = vadd.f32 %v5557, %v5621
        %v5623 = vpop.f32.mrb[0].mxu0
        %5624 = vmatprep.mubr.bf16.mxu0 %v4073
        %5625 = vmatmul.mubr.bf16.gmra.mrb[0].mxu0 %v4072
        %v5626 = vpop.f32.mrb[0].mxu0
        %v5627 = vadd.f32 %v5562, %v5626
        %v5628 = vpop.f32.mrb[0].mxu0
        %v5629 = vpop.f32.mrb[0].mxu0
        %v5630 = vadd.f32 %v5565, %v5629
        %v5631 = vpop.f32.mrb[0].mxu0
        %5632 = vmatprep.mubr.bf16.mxu0 %v4089
        %5633 = vmatmul.mubr.bf16.gmra.mrb[0].mxu0 %v4088
        %v5634 = vpop.f32.mrb[0].mxu0
        %v5635 = vadd.f32 %v5570, %v5634
        %v5636 = vpop.f32.mrb[0].mxu0
        %v5637 = vpop.f32.mrb[0].mxu0
        %v5638 = vadd.f32 %v5573, %v5637
        %v5639 = vpop.f32.mrb[0].mxu0
        %5640 = vdwg.mxu0
        %v5641 = vadd.f32 %v3014, %v5611
        %v5642 = vadd.f32 %v3015, %v5614
        %v5643 = vadd.f32 %v3016, %v5619
        %v5644 = vadd.f32 %v3017, %v5622
        %v5645 = vadd.f32 %v3018, %v5627
        %v5646 = vadd.f32 %v3019, %v5630
        %v5647 = vadd.f32 %v3020, %v5635
        %v5648 = vadd.f32 %v3021, %v5638
        %v5649 = vld [vmem:[%s763] sm:$0x1]
        %v5650 = vld [vmem:[%s766] sm:$0x1]
        %v5651 = vsel %vm941, %v5641, 0.0
        %5652 = vadd.xlane.f32.xlu0 %v5651
        %v5653 = vpop.xlane.xlu0 %5652
        %v5654 = vsel %vm941, %v5642, 0.0
        %5655 = vadd.xlane.f32.xlu0 %v5654
        %v5656 = vpop.xlane.xlu0 %5655
        %v5657 = vsel %vm941, %v5643, 0.0
        %5658 = vadd.xlane.f32.xlu0 %v5657
        %v5659 = vpop.xlane.xlu0 %5658
        %v5660 = vsel %vm941, %v5644, 0.0
        %5661 = vadd.xlane.f32.xlu0 %v5660
        %v5662 = vpop.xlane.xlu0 %5661
        %v5663 = vsel %vm941, %v5645, 0.0
        %5664 = vadd.xlane.f32.xlu0 %v5663
        %v5665 = vpop.xlane.xlu0 %5664
        %v5666 = vsel %vm941, %v5646, 0.0
        %5667 = vadd.xlane.f32.xlu0 %v5666
        %v5668 = vpop.xlane.xlu0 %5667
        %v5669 = vsel %vm941, %v5647, 0.0
        %5670 = vadd.xlane.f32.xlu0 %v5669
        %v5671 = vpop.xlane.xlu0 %5670
        %v5672 = vsel %vm941, %v5648, 0.0
        %5673 = vadd.xlane.f32.xlu0 %v5672
        %v5674 = vpop.xlane.xlu0 %5673
        %v5675 = vmul.f32 %v5653, %v2913
        %v5676 = vmul.f32 %v5656, %v2913
        %v5677 = vmul.f32 %v5659, %v2913
        %v5678 = vmul.f32 %v5662, %v2913
        %v5679 = vmul.f32 %v5665, %v2913
        %v5680 = vmul.f32 %v5668, %v2913
        %v5681 = vmul.f32 %v5671, %v2913
        %v5682 = vmul.f32 %v5674, %v2913
        %v5683 = vsub.f32 %v5641, %v5675
        %v5684 = vsub.f32 %v5642, %v5676
        %v5685 = vsub.f32 %v5643, %v5677
        %v5686 = vsub.f32 %v5644, %v5678
        %v5687 = vsub.f32 %v5645, %v5679
        %v5688 = vsub.f32 %v5646, %v5680
        %v5689 = vsub.f32 %v5647, %v5681
        %v5690 = vsub.f32 %v5648, %v5682
        %v5691 = vmul.f32 %v5683, %v5683
        %v5692 = vmul.f32 %v5684, %v5684
        %v5693 = vmul.f32 %v5685, %v5685
        %v5694 = vmul.f32 %v5686, %v5686
        %v5695 = vmul.f32 %v5687, %v5687
        %v5696 = vmul.f32 %v5688, %v5688
        %v5697 = vmul.f32 %v5689, %v5689
        %v5698 = vmul.f32 %v5690, %v5690
        %v5699 = vsel %vm941, %v5691, 0.0
        %5700 = vadd.xlane.f32.xlu0 %v5699
        %v5701 = vpop.xlane.xlu0 %5700
        %v5702 = vsel %vm941, %v5692, 0.0
        %5703 = vadd.xlane.f32.xlu0 %v5702
        %v5704 = vpop.xlane.xlu0 %5703
        %v5705 = vsel %vm941, %v5693, 0.0
        %5706 = vadd.xlane.f32.xlu0 %v5705
        %v5707 = vpop.xlane.xlu0 %5706
        %v5708 = vsel %vm941, %v5694, 0.0
        %5709 = vadd.xlane.f32.xlu0 %v5708
        %v5710 = vpop.xlane.xlu0 %5709
        %v5711 = vsel %vm941, %v5695, 0.0
        %5712 = vadd.xlane.f32.xlu0 %v5711
        %v5713 = vpop.xlane.xlu0 %5712
        %v5714 = vsel %vm941, %v5696, 0.0
        %5715 = vadd.xlane.f32.xlu0 %v5714
        %v5716 = vpop.xlane.xlu0 %5715
        %v5717 = vsel %vm941, %v5697, 0.0
        %5718 = vadd.xlane.f32.xlu0 %v5717
        %v5719 = vpop.xlane.xlu0 %5718
        %v5720 = vsel %vm941, %v5698, 0.0
        %5721 = vadd.xlane.f32.xlu0 %v5720
        %v5722 = vpop.xlane.xlu0 %5721
        %v5723 = vmul.f32 %v5701, %v2913
        %v5724 = vmul.f32 %v5704, %v2913
        %v5725 = vmul.f32 %v5707, %v2913
        %v5726 = vmul.f32 %v5710, %v2913
        %v5727 = vmul.f32 %v5713, %v2913
        %v5728 = vmul.f32 %v5716, %v2913
        %v5729 = vmul.f32 %v5719, %v2913
        %v5730 = vmul.f32 %v5722, %v2913
        %v5731 = vadd.f32 %v5723, 1e-05
        %v5732 = vadd.f32 %v5724, 1e-05
        %v5733 = vadd.f32 %v5725, 1e-05
        %v5734 = vadd.f32 %v5726, 1e-05
        %v5735 = vadd.f32 %v5727, 1e-05
        %v5736 = vadd.f32 %v5728, 1e-05
        %v5737 = vadd.f32 %v5729, 1e-05
        %v5738 = vadd.f32 %v5730, 1e-05
        %v5739 = vrsqrt.pop %v5731
        %v5740 = vrsqrt.pop %v5732
        %v5741 = vrsqrt.pop %v5733
        %v5742 = vrsqrt.pop %v5734
        %v5743 = vrsqrt.pop %v5735
        %v5744 = vrsqrt.pop %v5736
        %v5745 = vrsqrt.pop %v5737
        %v5746 = vrsqrt.pop %v5738
        %v5747 = vmul.f32 %v5683, %v5739
        %v5748 = vmul.f32 %v5684, %v5740
        %v5749 = vmul.f32 %v5685, %v5741
        %v5750 = vmul.f32 %v5686, %v5742
        %v5751 = vmul.f32 %v5687, %v5743
        %v5752 = vmul.f32 %v5688, %v5744
        %v5753 = vmul.f32 %v5689, %v5745
        %v5754 = vmul.f32 %v5690, %v5746
        %v5756 = vlaneseq
        %v5757 = vshrl.u32 %v5756, 7
        %v5758 = vsub.s32 0, %v5757
        %v5759 = vrot.slane %v5649, %v5758
        %v5761 = vmul.f32 %v5747, %v5759
        %v5762 = vmul.f32 %v5748, %v5759
        %v5763 = vmul.f32 %v5749, %v5759
        %v5764 = vmul.f32 %v5750, %v5759
        %v5765 = vmul.f32 %v5751, %v5759
        %v5766 = vmul.f32 %v5752, %v5759
        %v5767 = vmul.f32 %v5753, %v5759
        %v5768 = vmul.f32 %v5754, %v5759
        %v5770 = vlaneseq
        %v5771 = vshrl.u32 %v5770, 7
        %v5772 = vsub.s32 0, %v5771
        %v5773 = vrot.slane %v5650, %v5772
        %v5775 = vadd.f32 %v5761, %v5773
        %v5776 = vadd.f32 %v5762, %v5773
        %v5777 = vadd.f32 %v5763, %v5773
        %v5778 = vadd.f32 %v5764, %v5773
        %v5779 = vadd.f32 %v5765, %v5773
        %v5780 = vadd.f32 %v5766, %v5773
        %v5781 = vadd.f32 %v5767, %v5773
        %v5782 = vadd.f32 %v5768, %v5773
        %5783 = vst.msk [vmem:[#allocation2] sm:$0xff] %vm941, %v5775
        %5784 = vst.msk [vmem:[#allocation2 + $0x8] sm:$0xff] %vm941, %v5776
        %5785 = vst.msk [vmem:[#allocation2 + $0x10] sm:$0xff] %vm941, %v5777
        %5786 = vst.msk [vmem:[#allocation2 + $0x18] sm:$0xff] %vm941, %v5778
        %5787 = vst.msk [vmem:[#allocation2 + $0x20] sm:$0xff] %vm941, %v5779
        %5788 = vst.msk [vmem:[#allocation2 + $0x28] sm:$0xff] %vm941, %v5780
        %5789 = vst.msk [vmem:[#allocation2 + $0x30] sm:$0xff] %vm941, %v5781
        %5790 = vst.msk [vmem:[#allocation2 + $0x38] sm:$0xff] %vm941, %v5782
        %p5791 = scmp.eq.s32.totalorder %s36, 1
        // Predicated region
        $region93: #{transformer_forward.1} parent=87 // pred_check
          %p5792 = pneg %p5791
        $region94: #{transformer_forward.1} parent=87 // pred_check_branch
          %5794 = sbr.rel (%p5792) target = $region96
        $region95: #{transformer_forward.1} parent=87 // pred_region
          %vm5795 = vcmask 253952
          %5796 = vst.msk [vmem:[%s713] sm:$0x1] %vm5795, %v5775
        $region96: #{transformer_forward.1} parent=87 // pred_fallthru
          _
        %s5797 = sand.u32 %s478, 1
        %s5798 = scalar_lea.sflag [#allocation4], %s5797
        %s5799 = sand.u32 %s478, 1
        %s5800 = scalar_lea.vmem [#allocation3], %s5799
        // Predicated region
        $region97: #{transformer_forward.1} parent=87 // pred_check
          %p5801 = pneg %p488
        $region98: #{transformer_forward.1} parent=87 // pred_check_branch
          %5803 = sbr.rel (%p5801) target = $region100
        $region99: #{transformer_forward.1} parent=87 // pred_region
          %s5805 = ssub.s32 16, 16
          %5806 = vsyncadd %s5798, %s5805
          %s5807 = smul.addr %s35, 16
          %s5808 = scalar_lea.hbm %s17, %s5807
          %s5810 = sshll.u32 %s5800, 4
          %s5811 = int_to_ptr.vmem [resolvable:$true] %s5810
          %5813 = dma.vmem_to_hbm [thread:$0]  %s5811, 16, %s5808, %s5798
        $region100: #{transformer_forward.1} parent=87 // pred_fallthru
          _
      $region88: #{transformer_forward.1} parent=5 // pred_fallthru
        _
      %p5814 = scmp.le.s32.totalorder 2, %s26
      // Predicated region
      $region101: #{transformer_forward.1} parent=5 // pred_check
        %p5815 = pneg %p5814
      $region102: #{transformer_forward.1} parent=5 // pred_check_branch
        %5817 = sbr.rel (%p5815) target = $region104
      $region103: #{transformer_forward.1} parent=5 // pred_region
        %s5818 = ssub.s32 %s26, 2
        // Predicated region
        $region105: #{transformer_forward.1} parent=103 // pred_check
          %p5819 = pneg %p494
        $region106: #{transformer_forward.1} parent=103 // pred_check_branch
          %5821 = sbr.rel (%p5819) target = $region108
        $region107: #{transformer_forward.1} parent=103 // pred_region
          %s5822 = sand.u32 %s479, 1
          %s5823 = scalar_lea.sflag [#allocation4], %s5822
          %s5824 = sand.u32 %s479, 1
          %s5825 = scalar_lea.vmem [#allocation3], %s5824
          %5826 = dma.done %s5823, 16
        $region108: #{transformer_forward.1} parent=103 // pred_fallthru
          _
      $region104: #{transformer_forward.1} parent=5 // pred_fallthru
        _
    $region6: #{transformer_forward.1} parent=1 // loop_footer
      %s30 = sadd.s32 1, %s26
    $region7: #{transformer_forward.1} parent=1 // loop_footer_branch
      %25 = sbr.rel target = $region3
    $region8: #{transformer_forward.1} parent=1 // loop_exit
      _
    %5827 = vsyncpa [#allocation4], 1
    %s5828 = scalar_lea.sflag [#allocation4], 1
    %5829 = vsyncpa %s5828, 1

</llo_original>
